<compile_context>
chip_gen: v7x
topology: tpu7x:2x2x1
jax: 0.10.0
libtpu: 0.0.40
codegen_flags: <defaults>
</compile_context>

<pallas_src>
import numpy as np

import jax
import jax.numpy as jnp
from jax.experimental import pallas as pl
from jax.experimental.pallas import tpu as pltpu

NUM_KEYPOINTS = 9
SIZE_OUT = 3
YAW_OUT = 2
KPTS_OUT = 2 * NUM_KEYPOINTS
HEAD_OUT = SIZE_OUT + YAW_OUT + KPTS_OUT
BN_EPS = 1e-5


def _round_up(x, m):
    return (x + m - 1) // m * m


# ----------------------------------------------------------------------------
# Offline weight packing
# ----------------------------------------------------------------------------
def _banded_row_weight(w_hwio, width):
    """(3,3,cin,cout) folded conv kernel -> (3, width*cin, width*cout).

    Output column w of an image row reads input columns w-1..w+1 (zero outside),
    so the conv's horizontal SAME padding is baked into the weight and each kernel
    row kh becomes one dense (rows, width*cin) @ (width*cin, width*cout) matmul.
    The ~2.7x extra MXU FLOPs are irrelevant (the MXU is idle at these sizes); what
    matters is that no masked/partial VMEM stores are needed to build operands.
    """
    k = np.asarray(w_hwio, dtype=np.float32)
    _, _, cin, cout = k.shape
    wr = np.zeros((3, width * cin, width * cout), np.float32)
    for kh in range(3):
        for w in range(width):
            for kw in range(3):
                win = w + kw - 1
                if 0 <= win < width:
                    wr[kh, win * cin:(win + 1) * cin, w * cout:(w + 1) * cout] = k[kh, kw]
    return jnp.asarray(wr)


# ----------------------------------------------------------------------------
# Fused kernel: conv stack -> (flatten + FC1) -> FC rest -> fused heads
# ----------------------------------------------------------------------------
def _make_kernel(*, TM, H, W, cin0, C, F, n_conv, n_fc):
    WC = W * C

    def kernel(*refs):
        it = iter(refs)
        x_ref = next(it)                               # (TM, H, W*cin0) bf16
        conv_w = [next(it) for _ in range(n_conv)]     # (3, W*cin_i, WC) bf16, banded+BN-folded
        conv_sh = [next(it) for _ in range(n_conv)]    # (1, WC) f32
        w1b_ref = next(it)                             # (H, WC, F) bf16 (flatten-fused FC1)
        fcw = [next(it) for _ in range(n_fc - 1)]      # (F, F) bf16
        fcb = [next(it) for _ in range(n_fc)]          # (1, F) f32
        head_w_ref = next(it)                          # (F, HEAD_OUT) bf16
        head_b_ref = next(it)                          # (1, HEAD_OUT) f32
        o_ref = next(it)                               # (TM, HEAD_OUT) f32
        xp0 = next(it)                                 # (TM, H+2, W*cin0) bf16 scratch
        xpr = next(it) if n_conv > 1 else None         # (TM, H+2, WC) bf16 scratch

        def conv_layer(xp_ref, w_ref, sh_ref):
            # 3x3 SAME conv as 3 dense matmuls (one per kernel row kh); horizontal
            # padding + BN scale are inside the banded weight.
            k_dim = xp_ref.shape[-1]
            acc = None
            for kh in range(3):
                lhs = xp_ref[:, kh:kh + H, :].reshape(TM * H, k_dim)
                p = jnp.dot(lhs, w_ref[kh], preferred_element_type=jnp.float32)
                acc = p if acc is None else acc + p
            y = jnp.maximum(acc + sh_ref[...], 0.0)    # (TM*H, W*C) f32
            return y.reshape(TM, H, WC)

        # ---- conv stack: vertical halo rows only; re-zeroed each step (scratch is
        #      per-TensorCore under megacore sharding, so no program_id==0 guard).
        zero0 = jnp.zeros((TM, W * cin0), jnp.bfloat16)
        xp0[:, 0, :] = zero0
        xp0[:, H + 1, :] = zero0
        xp0[:, 1:H + 1, :] = x_ref[...]                # one dense, lane-aligned store
        y3 = conv_layer(xp0, conv_w[0], conv_sh[0])    # (TM, H, W*C) f32

        if n_conv > 1:
            zr = jnp.zeros((TM, WC), jnp.bfloat16)
            xpr[:, 0, :] = zr                          # halo zeroed once per step,
            xpr[:, H + 1, :] = zr                      # reused across layers >= 1
        for i in range(1, n_conv):
            xpr[:, 1:H + 1, :] = y3.astype(jnp.bfloat16)
            y3 = conv_layer(xpr, conv_w[i], conv_sh[i])

        # ---- torch.flatten(NCHW) + FC1 fused: split-K over the H image rows.
        acc = None
        for h in range(H):
            p = jnp.dot(y3[:, h, :].astype(jnp.bfloat16), w1b_ref[h],
                        preferred_element_type=jnp.float32)
            acc = p if acc is None else acc + p
        hid = jnp.maximum(acc + fcb[0][...], 0.0)      # (TM, F) f32

        for j in range(1, n_fc):
            z = jnp.dot(hid.astype(jnp.bfloat16), fcw[j - 1][...],
                        preferred_element_type=jnp.float32)
            hid = jnp.maximum(z + fcb[j][...], 0.0)

        out = jnp.dot(hid.astype(jnp.bfloat16), head_w_ref[...],
                      preferred_element_type=jnp.float32)
        o_ref[...] = out + head_b_ref[...]             # one contiguous 23-wide slab

    return kernel


def attribute_head_forward(params, pooled_proposals_nchw, *, block_m=None):
    """Mirrors AttributeHead.forward (eval-mode BN). Input is NCHW, like PyTorch."""
    N, cin0, H, W = pooled_proposals_nchw.shape
    conv_w = list(params["conv_w"])
    conv_shift = list(params["conv_shift"])
    fc_b = list(params["fc_b"])
    fc_w_rest = list(params["fc_w_rest"])
    n_conv, n_fc = len(conv_w), len(fc_b)
    WC = conv_shift[0].shape[1]
    C = WC // W
    F = fc_b[0].shape[1]

    # NCHW -> NHWC -> lane-dense (N, H, W*cin0) rows; bf16 once (MXU operand dtype).
    x = jnp.transpose(pooled_proposals_nchw, (0, 2, 3, 1))
    x = x.reshape(N, H, W * cin0).astype(jnp.bfloat16)

    # Proposal block: 128 everywhere by default (v5e natural M tile); v6e/v7x can use
    # 256 -- per-step VMEM stays far below the 32 MiB budget either way.
    if block_m is None:
        block_m = 128 if N >= 128 else _round_up(max(N, 1), 8)
    block_m = _round_up(block_m, 8)
    n_pad = _round_up(N, block_m)
    if n_pad != N:
        x = jnp.pad(x, ((0, n_pad - N), (0, 0), (0, 0)))

    inputs = ([x] + conv_w + conv_shift + [params["fc1_w"]] + fc_w_rest + fc_b
              + [params["head_w"], params["head_b"]])

    def _replicated(shape):
        zeros = (0,) * len(shape)
        return pl.BlockSpec(shape, lambda i, _z=zeros: _z)

    in_specs = [pl.BlockSpec((block_m, H, W * cin0), lambda i: (i, 0, 0))]
    in_specs += [_replicated(a.shape) for a in inputs[1:]]

    scratch = [pltpu.VMEM((block_m, H + 2, W * cin0), jnp.bfloat16)]
    if n_conv > 1:
        scratch.append(pltpu.VMEM((block_m, H + 2, WC), jnp.bfloat16))

    kernel = _make_kernel(TM=block_m, H=H, W=W, cin0=cin0, C=C, F=F,
                          n_conv=n_conv, n_fc=n_fc)

    out = pl.pallas_call(
        kernel,
        out_shape=jax.ShapeDtypeStruct((n_pad, HEAD_OUT), jnp.float32),
        grid=(n_pad // block_m,),
        in_specs=in_specs,
        out_specs=pl.BlockSpec((block_m, HEAD_OUT), lambda i: (i, 0)),
        scratch_shapes=scratch,
        compiler_params=pltpu.CompilerParams(
            dimension_semantics=("parallel",),
            vmem_limit_bytes=32 * 1024 * 1024),
    )(*inputs)

    out = out[:N]
    size = out[:, :SIZE_OUT]
    yaw = out[:, SIZE_OUT:SIZE_OUT + YAW_OUT]
    keypoints = out[:, SIZE_OUT + YAW_OUT:].reshape(-1, 2, NUM_KEYPOINTS)
    return size, yaw, keypoints


# ----------------------------------------------------------------------------
# Deterministic parameter initialization (synthetic; no checkpoint loading)
# ----------------------------------------------------------------------------
def init_params(key, *, num_conv_layers, num_channels, num_fc_layers,
                rpn_output_channels, pool_output_size, fc_features, num_classes=1):
    """Returns (kernel-ready packed params, raw f32 torch-style params for the ref)."""
    del num_classes  # stored-but-unused in the PyTorch module's forward as well
    H, W = pool_output_size
    C = num_channels

    conv_w, conv_shift, raw_convs = [], [], []
    for i in range(num_conv_layers):
        cin = rpn_output_channels if i == 0 else C
        key, k_w, k_b, k_g, k_be, k_m, k_v = jax.random.split(key, 7)
        w = jax.random.normal(k_w, (3, 3, cin, C), jnp.float32) * 0.05   # HWIO
        conv_b = jax.random.normal(k_b, (C,), jnp.float32) * 0.05
        gamma = 1.0 + 0.1 * jax.random.normal(k_g, (C,), jnp.float32)
        beta = 0.1 * jax.random.normal(k_be, (C,), jnp.float32)
        r_mean = 0.1 * jax.random.normal(k_m, (C,), jnp.float32)
        r_var = 0.5 + jnp.abs(jax.random.normal(k_v, (C,), jnp.float32))
        raw_convs.append((w, conv_b, gamma, beta, r_mean, r_var))
        # Fold eval-mode BN: scale into the weight, everything else into the shift.
        scale = gamma / jnp.sqrt(r_var + BN_EPS)
        shift = beta + (conv_b - r_mean) * scale
        w_folded = w * scale[None, None, None, :]
        conv_w.append(_banded_row_weight(w_folded, W).astype(jnp.bfloat16))
        conv_shift.append(jnp.tile(shift, W).reshape(1, W * C))          # f32

    fc_b, fc_w_rest, raw_fcs = [], [], []
    fc1_w = None
    in_feat = C * H * W
    for i in range(num_fc_layers):
        fin = in_feat if i == 0 else fc_features
        key, k_w, k_b = jax.random.split(key, 3)
        w = jax.random.normal(k_w, (fin, fc_features), jnp.float32) / jnp.sqrt(fin)
        b = 0.01 * jax.random.normal(k_b, (fc_features,), jnp.float32)
        raw_fcs.append((w, b))
        if i == 0:
            # Fold torch.flatten on NCHW: reorder rows (c,h,w)->(h,w,c), then split
            # into per-image-row blocks (H, W*C, F) so FC1 accumulates over h.
            w1 = jnp.transpose(w.reshape(C, H, W, fc_features), (1, 2, 0, 3))
            fc1_w = w1.reshape(H, W * C, fc_features).astype(jnp.bfloat16)
        else:
            fc_w_rest.append(w.astype(jnp.bfloat16))
        fc_b.append(b.reshape(1, fc_features))

    # Heads: normal(std=0.001) weights, zero bias (as in the PyTorch __init__);
    # the three heads are fused into one 23-wide matmul and split in the wrapper.
    key, k_s, k_y, k_k = jax.random.split(key, 4)
    size_w = 0.001 * jax.random.normal(k_s, (fc_features, SIZE_OUT), jnp.float32)
    yaw_w = 0.001 * jax.random.normal(k_y, (fc_features, YAW_OUT), jnp.float32)
    kpt_w = 0.001 * jax.random.normal(k_k, (fc_features, KPTS_OUT), jnp.float32)
    head_w = jnp.concatenate([size_w, yaw_w, kpt_w], axis=1)
    head_b = jnp.zeros((HEAD_OUT,), jnp.float32)

    params = {
        "conv_w": conv_w,
        "conv_shift": conv_shift,
        "fc1_w": fc1_w,
        "fc_w_rest": fc_w_rest,
        "fc_b": fc_b,
        "head_w": head_w.astype(jnp.bfloat16),
        "head_b": head_b.reshape(1, HEAD_OUT),
    }
    raw = {"convs": raw_convs, "fcs": raw_fcs, "head_w": head_w, "head_b": head_b}
    return params, raw


def reference_forward(raw, pooled_proposals_nchw):
    """Pure-JAX f32 reference mirroring the PyTorch module (eval-mode BN)."""
    x = jnp.transpose(pooled_proposals_nchw, (0, 2, 3, 1))   # NHWC
    for (w, b, gamma, beta, mean, var) in raw["convs"]:
        x = jax.lax.conv_general_dilated(
            x, w, window_strides=(1, 1), padding="SAME",
            dimension_numbers=("NHWC", "HWIO", "NHWC")) + b
        x = (x - mean) / jnp.sqrt(var + BN_EPS) * gamma + beta
        x = jnp.maximum(x, 0.0)
    n = x.shape[0]
    x = jnp.transpose(x, (0, 3, 1, 2)).reshape(n, -1)        # torch.flatten on NCHW
    for (w, b) in raw["fcs"]:
        x = jnp.maximum(x @ w + b, 0.0)
    heads = x @ raw["head_w"] + raw["head_b"]
    size = heads[:, :SIZE_OUT]
    yaw = heads[:, SIZE_OUT:SIZE_OUT + YAW_OUT]
    keypoints = heads[:, SIZE_OUT + YAW_OUT:].reshape(-1, 2, NUM_KEYPOINTS)
    return size, yaw, keypoints


# ----------------------------------------------------------------------------
if __name__ == "__main__":
    # Module hyper-parameters (small, consistent with the PyTorch module).
    num_conv_layers = 2
    num_channels = 32
    num_fc_layers = 2
    rpn_output_channels = 16
    pool_output_size = (8, 8)
    fc_features = 64
    batch = 4

    key = jax.random.PRNGKey(0)
    key, k_params, k_in = jax.random.split(key, 3)

    params, raw = init_params(
        k_params,
        num_conv_layers=num_conv_layers,
        num_channels=num_channels,
        num_fc_layers=num_fc_layers,
        rpn_output_channels=rpn_output_channels,
        pool_output_size=pool_output_size,
        fc_features=fc_features,
        num_classes=3,
    )

    # Input matches PyTorch NCHW: (N, rpn_output_channels, H, W)
    pooled_proposals = jax.random.normal(
        k_in, (batch, rpn_output_channels, *pool_output_size), jnp.float32)

    fwd = jax.jit(attribute_head_forward)
    size, yaw, keypoints = fwd(params, pooled_proposals)
    jax.block_until_ready((size, yaw, keypoints))

    assert size.shape == (batch, SIZE_OUT)
    assert yaw.shape == (batch, YAW_OUT)
    assert keypoints.shape == (batch, 2, NUM_KEYPOINTS)

    # Numerical check vs a pure-JAX f32 reference (kernel uses bf16 matmul operands
    # with f32 accumulation, so allow a small tolerance).
    ref_size, ref_yaw, ref_kpts = reference_forward(raw, pooled_proposals)
    for got, ref in ((size, ref_size), (yaw, ref_yaw), (keypoints, ref_kpts)):
        err = float(jnp.max(jnp.abs(got - ref)))
        assert err < 3e-3, f"max abs error {err}"

    print("KERNEL_OK")
</pallas_src>

<mosaic_0001>
module attributes {stable_mosaic.version = 11 : i64} {
  func.func @kernel(%arg0: i32, %arg1: memref<8x8x128xbf16, #tpu.memory_space<vmem>>, %arg2: memref<3x128x256xbf16, #tpu.memory_space<vmem>>, %arg3: memref<3x256x256xbf16, #tpu.memory_space<vmem>>, %arg4: memref<1x256xf32, #tpu.memory_space<vmem>>, %arg5: memref<1x256xf32, #tpu.memory_space<vmem>>, %arg6: memref<8x256x64xbf16, #tpu.memory_space<vmem>>, %arg7: memref<64x64xbf16, #tpu.memory_space<vmem>>, %arg8: memref<1x64xf32, #tpu.memory_space<vmem>>, %arg9: memref<1x64xf32, #tpu.memory_space<vmem>>, %arg10: memref<64x23xbf16, #tpu.memory_space<vmem>>, %arg11: memref<1x23xf32, #tpu.memory_space<vmem>>, %arg12: memref<8x23xf32, #tpu.memory_space<vmem>>, %arg13: memref<8x10x128xbf16, #tpu.memory_space<vmem>>, %arg14: memref<8x10x256xbf16, #tpu.memory_space<vmem>>) attributes {dimension_semantics = [#tpu.dimension_semantics<parallel>], iteration_bounds = array<i64: 1>, scalar_prefetch = 0 : i64, scratch_operands = 2 : i64, tpu.core_type = #tpu.core_type<tc>, window_params = [{transform_indices = @transform_0, window_bounds = array<i64: 8, 8, 128>}, {pipeline_mode = #tpu.pipeline_mode<synchronous>, transform_indices = @transform_1, window_bounds = array<i64: 3, 128, 256>}, {pipeline_mode = #tpu.pipeline_mode<synchronous>, transform_indices = @transform_2, window_bounds = array<i64: 3, 256, 256>}, {pipeline_mode = #tpu.pipeline_mode<synchronous>, transform_indices = @transform_3, window_bounds = array<i64: 1, 256>}, {pipeline_mode = #tpu.pipeline_mode<synchronous>, transform_indices = @transform_4, window_bounds = array<i64: 1, 256>}, {pipeline_mode = #tpu.pipeline_mode<synchronous>, transform_indices = @transform_5, window_bounds = array<i64: 8, 256, 64>}, {pipeline_mode = #tpu.pipeline_mode<synchronous>, transform_indices = @transform_6, window_bounds = array<i64: 64, 64>}, {pipeline_mode = #tpu.pipeline_mode<synchronous>, transform_indices = @transform_7, window_bounds = array<i64: 1, 64>}, {pipeline_mode = #tpu.pipeline_mode<synchronous>, transform_indices = @transform_8, window_bounds = array<i64: 1, 64>}, {pipeline_mode = #tpu.pipeline_mode<synchronous>, transform_indices = @transform_9, window_bounds = array<i64: 64, 23>}, {pipeline_mode = #tpu.pipeline_mode<synchronous>, transform_indices = @transform_10, window_bounds = array<i64: 1, 23>}, {transform_indices = @transform_11, window_bounds = array<i64: 8, 23>}]} {
    %cst = arith.constant 0.000000e+00 : bf16
    %0 = vector.broadcast %cst : bf16 to vector<8x128xbf16>
    %c0 = arith.constant 0 : index
    %c0_0 = arith.constant 0 : index
    %c0_1 = arith.constant 0 : index
    %1 = vector.load %arg13[%c0, %c0_0, %c0_1] : memref<8x10x128xbf16, #tpu.memory_space<vmem>>, vector<8x1x128xbf16>
    %2 = vector.shape_cast %1 : vector<8x1x128xbf16> to vector<8x128xbf16>
    %3 = vector.shape_cast %0 : vector<8x128xbf16> to vector<8x1x128xbf16>
    tpu.vector_store %arg13[%c0, %c0_0, %c0_1], %3 {strides = array<i32>} : memref<8x10x128xbf16, #tpu.memory_space<vmem>>, vector<8x1x128xbf16>,
    %c0_2 = arith.constant 0 : index
    %c9 = arith.constant 9 : index
    %c0_3 = arith.constant 0 : index
    %4 = vector.load %arg13[%c0_2, %c9, %c0_3] : memref<8x10x128xbf16, #tpu.memory_space<vmem>>, vector<8x1x128xbf16>
    %5 = vector.shape_cast %4 : vector<8x1x128xbf16> to vector<8x128xbf16>
    %6 = vector.shape_cast %0 : vector<8x128xbf16> to vector<8x1x128xbf16>
    tpu.vector_store %arg13[%c0_2, %c9, %c0_3], %6 {strides = array<i32>} : memref<8x10x128xbf16, #tpu.memory_space<vmem>>, vector<8x1x128xbf16>,
    %c0_4 = arith.constant 0 : index
    %c0_5 = arith.constant 0 : index
    %c0_6 = arith.constant 0 : index
    %7 = vector.load %arg1[%c0_4, %c0_5, %c0_6] : memref<8x8x128xbf16, #tpu.memory_space<vmem>>, vector<8x8x128xbf16>
    %c0_7 = arith.constant 0 : index
    %c1 = arith.constant 1 : index
    %c0_8 = arith.constant 0 : index
    %8 = vector.load %arg13[%c0_7, %c1, %c0_8] : memref<8x10x128xbf16, #tpu.memory_space<vmem>>, vector<8x8x128xbf16>
    tpu.vector_store %arg13[%c0_7, %c1, %c0_8], %7 {strides = array<i32>} : memref<8x10x128xbf16, #tpu.memory_space<vmem>>, vector<8x8x128xbf16>,
    %c0_9 = arith.constant 0 : index
    %c0_10 = arith.constant 0 : index
    %c0_11 = arith.constant 0 : index
    %9 = vector.load %arg13[%c0_9, %c0_10, %c0_11] : memref<8x10x128xbf16, #tpu.memory_space<vmem>>, vector<8x8x128xbf16>
    %10 = vector.shape_cast %9 : vector<8x8x128xbf16> to vector<64x128xbf16>
    %c0_12 = arith.constant 0 : index
    %c0_13 = arith.constant 0 : index
    %c0_14 = arith.constant 0 : index
    %11 = vector.load %arg2[%c0_12, %c0_13, %c0_14] : memref<3x128x256xbf16, #tpu.memory_space<vmem>>, vector<1x128x256xbf16>
    %12 = vector.shape_cast %11 : vector<1x128x256xbf16> to vector<128x256xbf16>
    %cst_15 = arith.constant dense<0.000000e+00> : vector<64x256xf32>
    %13 = tpu.matmul %10, %12, %cst_15 {dimension_numbers = #tpu.dot_dimension_numbers<[1], [0], [0], [1], [0, 0, 1, 1], [], []>} : vector<64x128xbf16>, vector<128x256xbf16>, vector<64x256xf32> -> vector<64x256xf32>
    %c0_16 = arith.constant 0 : index
    %c1_17 = arith.constant 1 : index
    %c0_18 = arith.constant 0 : index
    %14 = vector.load %arg13[%c0_16, %c1_17, %c0_18] : memref<8x10x128xbf16, #tpu.memory_space<vmem>>, vector<8x8x128xbf16>
    %15 = vector.shape_cast %14 : vector<8x8x128xbf16> to vector<64x128xbf16>
    %c1_19 = arith.constant 1 : index
    %c0_20 = arith.constant 0 : index
    %c0_21 = arith.constant 0 : index
    %16 = vector.load %arg2[%c1_19, %c0_20, %c0_21] : memref<3x128x256xbf16, #tpu.memory_space<vmem>>, vector<1x128x256xbf16>
    %17 = vector.shape_cast %16 : vector<1x128x256xbf16> to vector<128x256xbf16>
    %cst_22 = arith.constant dense<0.000000e+00> : vector<64x256xf32>
    %18 = tpu.matmul %15, %17, %cst_22 {dimension_numbers = #tpu.dot_dimension_numbers<[1], [0], [0], [1], [0, 0, 1, 1], [], []>} : vector<64x128xbf16>, vector<128x256xbf16>, vector<64x256xf32> -> vector<64x256xf32>
    %19 = arith.addf %13, %18 : vector<64x256xf32>
    %c0_23 = arith.constant 0 : index
    %c2 = arith.constant 2 : index
    %c0_24 = arith.constant 0 : index
    %20 = vector.load %arg13[%c0_23, %c2, %c0_24] : memref<8x10x128xbf16, #tpu.memory_space<vmem>>, vector<8x8x128xbf16>
    %21 = vector.shape_cast %20 : vector<8x8x128xbf16> to vector<64x128xbf16>
    %c2_25 = arith.constant 2 : index
    %c0_26 = arith.constant 0 : index
    %c0_27 = arith.constant 0 : index
    %22 = vector.load %arg2[%c2_25, %c0_26, %c0_27] : memref<3x128x256xbf16, #tpu.memory_space<vmem>>, vector<1x128x256xbf16>
    %23 = vector.shape_cast %22 : vector<1x128x256xbf16> to vector<128x256xbf16>
    %cst_28 = arith.constant dense<0.000000e+00> : vector<64x256xf32>
    %24 = tpu.matmul %21, %23, %cst_28 {dimension_numbers = #tpu.dot_dimension_numbers<[1], [0], [0], [1], [0, 0, 1, 1], [], []>} : vector<64x128xbf16>, vector<128x256xbf16>, vector<64x256xf32> -> vector<64x256xf32>
    %25 = arith.addf %19, %24 : vector<64x256xf32>
    %c0_29 = arith.constant 0 : index
    %c0_30 = arith.constant 0 : index
    %26 = vector.load %arg4[%c0_29, %c0_30] : memref<1x256xf32, #tpu.memory_space<vmem>>, vector<1x256xf32>
    %27 = vector.broadcast %26 : vector<1x256xf32> to vector<64x256xf32>
    %28 = arith.addf %25, %27 : vector<64x256xf32>
    %cst_31 = arith.constant 0.000000e+00 : f32
    %29 = vector.broadcast %cst_31 : f32 to vector<64x256xf32>
    %30 = arith.maximumf %28, %29 : vector<64x256xf32>
    %31 = vector.shape_cast %30 : vector<64x256xf32> to vector<8x8x256xf32>
    %cst_32 = arith.constant 0.000000e+00 : bf16
    %32 = vector.broadcast %cst_32 : bf16 to vector<8x256xbf16>
    %c0_33 = arith.constant 0 : index
    %c0_34 = arith.constant 0 : index
    %c0_35 = arith.constant 0 : index
    %33 = vector.load %arg14[%c0_33, %c0_34, %c0_35] : memref<8x10x256xbf16, #tpu.memory_space<vmem>>, vector<8x1x256xbf16>
    %34 = vector.shape_cast %33 : vector<8x1x256xbf16> to vector<8x256xbf16>
    %35 = vector.shape_cast %32 : vector<8x256xbf16> to vector<8x1x256xbf16>
    tpu.vector_store %arg14[%c0_33, %c0_34, %c0_35], %35 {strides = array<i32>} : memref<8x10x256xbf16, #tpu.memory_space<vmem>>, vector<8x1x256xbf16>,
    %c0_36 = arith.constant 0 : index
    %c9_37 = arith.constant 9 : index
    %c0_38 = arith.constant 0 : index
    %36 = vector.load %arg14[%c0_36, %c9_37, %c0_38] : memref<8x10x256xbf16, #tpu.memory_space<vmem>>, vector<8x1x256xbf16>
    %37 = vector.shape_cast %36 : vector<8x1x256xbf16> to vector<8x256xbf16>
    %38 = vector.shape_cast %32 : vector<8x256xbf16> to vector<8x1x256xbf16>
    tpu.vector_store %arg14[%c0_36, %c9_37, %c0_38], %38 {strides = array<i32>} : memref<8x10x256xbf16, #tpu.memory_space<vmem>>, vector<8x1x256xbf16>,
    %39 = arith.truncf %31 : vector<8x8x256xf32> to vector<8x8x256xbf16>
    %c0_39 = arith.constant 0 : index
    %c1_40 = arith.constant 1 : index
    %c0_41 = arith.constant 0 : index
    %40 = vector.load %arg14[%c0_39, %c1_40, %c0_41] : memref<8x10x256xbf16, #tpu.memory_space<vmem>>, vector<8x8x256xbf16>
    tpu.vector_store %arg14[%c0_39, %c1_40, %c0_41], %39 {strides = array<i32>} : memref<8x10x256xbf16, #tpu.memory_space<vmem>>, vector<8x8x256xbf16>,
    %c0_42 = arith.constant 0 : index
    %c0_43 = arith.constant 0 : index
    %c0_44 = arith.constant 0 : index
    %41 = vector.load %arg14[%c0_42, %c0_43, %c0_44] : memref<8x10x256xbf16, #tpu.memory_space<vmem>>, vector<8x8x256xbf16>
    %42 = vector.shape_cast %41 : vector<8x8x256xbf16> to vector<64x256xbf16>
    %c0_45 = arith.constant 0 : index
    %c0_46 = arith.constant 0 : index
    %c0_47 = arith.constant 0 : index
    %43 = vector.load %arg3[%c0_45, %c0_46, %c0_47] : memref<3x256x256xbf16, #tpu.memory_space<vmem>>, vector<1x256x256xbf16>
    %44 = vector.shape_cast %43 : vector<1x256x256xbf16> to vector<256x256xbf16>
    %cst_48 = arith.constant dense<0.000000e+00> : vector<64x256xf32>
    %45 = tpu.matmul %42, %44, %cst_48 {dimension_numbers = #tpu.dot_dimension_numbers<[1], [0], [0], [1], [0, 0, 1, 1], [], []>} : vector<64x256xbf16>, vector<256x256xbf16>, vector<64x256xf32> -> vector<64x256xf32>
    %c0_49 = arith.constant 0 : index
    %c1_50 = arith.constant 1 : index
    %c0_51 = arith.constant 0 : index
    %46 = vector.load %arg14[%c0_49, %c1_50, %c0_51] : memref<8x10x256xbf16, #tpu.memory_space<vmem>>, vector<8x8x256xbf16>
    %47 = vector.shape_cast %46 : vector<8x8x256xbf16> to vector<64x256xbf16>
    %c1_52 = arith.constant 1 : index
    %c0_53 = arith.constant 0 : index
    %c0_54 = arith.constant 0 : index
    %48 = vector.load %arg3[%c1_52, %c0_53, %c0_54] : memref<3x256x256xbf16, #tpu.memory_space<vmem>>, vector<1x256x256xbf16>
    %49 = vector.shape_cast %48 : vector<1x256x256xbf16> to vector<256x256xbf16>
    %cst_55 = arith.constant dense<0.000000e+00> : vector<64x256xf32>
    %50 = tpu.matmul %47, %49, %cst_55 {dimension_numbers = #tpu.dot_dimension_numbers<[1], [0], [0], [1], [0, 0, 1, 1], [], []>} : vector<64x256xbf16>, vector<256x256xbf16>, vector<64x256xf32> -> vector<64x256xf32>
    %51 = arith.addf %45, %50 : vector<64x256xf32>
    %c0_56 = arith.constant 0 : index
    %c2_57 = arith.constant 2 : index
    %c0_58 = arith.constant 0 : index
    %52 = vector.load %arg14[%c0_56, %c2_57, %c0_58] : memref<8x10x256xbf16, #tpu.memory_space<vmem>>, vector<8x8x256xbf16>
    %53 = vector.shape_cast %52 : vector<8x8x256xbf16> to vector<64x256xbf16>
    %c2_59 = arith.constant 2 : index
    %c0_60 = arith.constant 0 : index
    %c0_61 = arith.constant 0 : index
    %54 = vector.load %arg3[%c2_59, %c0_60, %c0_61] : memref<3x256x256xbf16, #tpu.memory_space<vmem>>, vector<1x256x256xbf16>
    %55 = vector.shape_cast %54 : vector<1x256x256xbf16> to vector<256x256xbf16>
    %cst_62 = arith.constant dense<0.000000e+00> : vector<64x256xf32>
    %56 = tpu.matmul %53, %55, %cst_62 {dimension_numbers = #tpu.dot_dimension_numbers<[1], [0], [0], [1], [0, 0, 1, 1], [], []>} : vector<64x256xbf16>, vector<256x256xbf16>, vector<64x256xf32> -> vector<64x256xf32>
    %57 = arith.addf %51, %56 : vector<64x256xf32>
    %c0_63 = arith.constant 0 : index
    %c0_64 = arith.constant 0 : index
    %58 = vector.load %arg5[%c0_63, %c0_64] : memref<1x256xf32, #tpu.memory_space<vmem>>, vector<1x256xf32>
    %59 = vector.broadcast %58 : vector<1x256xf32> to vector<64x256xf32>
    %60 = arith.addf %57, %59 : vector<64x256xf32>
    %cst_65 = arith.constant 0.000000e+00 : f32
    %61 = vector.broadcast %cst_65 : f32 to vector<64x256xf32>
    %62 = arith.maximumf %60, %61 : vector<64x256xf32>
    %63 = vector.shape_cast %62 : vector<64x256xf32> to vector<8x8x256xf32>
    %64 = vector.extract_strided_slice %63 {offsets = [0, 0, 0], sizes = [8, 1, 256], strides = [1, 1, 1]} : vector<8x8x256xf32> to vector<8x1x256xf32>
    %65 = vector.shape_cast %64 : vector<8x1x256xf32> to vector<8x256xf32>
    %66 = arith.truncf %65 : vector<8x256xf32> to vector<8x256xbf16>
    %c0_66 = arith.constant 0 : index
    %c0_67 = arith.constant 0 : index
    %c0_68 = arith.constant 0 : index
    %67 = vector.load %arg6[%c0_66, %c0_67, %c0_68] : memref<8x256x64xbf16, #tpu.memory_space<vmem>>, vector<1x256x64xbf16>
    %68 = vector.shape_cast %67 : vector<1x256x64xbf16> to vector<256x64xbf16>
    %cst_69 = arith.constant dense<0.000000e+00> : vector<8x64xf32>
    %69 = tpu.matmul %66, %68, %cst_69 {dimension_numbers = #tpu.dot_dimension_numbers<[1], [0], [0], [1], [0, 0, 1, 1], [], []>} : vector<8x256xbf16>, vector<256x64xbf16>, vector<8x64xf32> -> vector<8x64xf32>
    %70 = vector.extract_strided_slice %63 {offsets = [0, 1, 0], sizes = [8, 1, 256], strides = [1, 1, 1]} : vector<8x8x256xf32> to vector<8x1x256xf32>
    %71 = vector.shape_cast %70 : vector<8x1x256xf32> to vector<8x256xf32>
    %72 = arith.truncf %71 : vector<8x256xf32> to vector<8x256xbf16>
    %c1_70 = arith.constant 1 : index
    %c0_71 = arith.constant 0 : index
    %c0_72 = arith.constant 0 : index
    %73 = vector.load %arg6[%c1_70, %c0_71, %c0_72] : memref<8x256x64xbf16, #tpu.memory_space<vmem>>, vector<1x256x64xbf16>
    %74 = vector.shape_cast %73 : vector<1x256x64xbf16> to vector<256x64xbf16>
    %cst_73 = arith.constant dense<0.000000e+00> : vector<8x64xf32>
    %75 = tpu.matmul %72, %74, %cst_73 {dimension_numbers = #tpu.dot_dimension_numbers<[1], [0], [0], [1], [0, 0, 1, 1], [], []>} : vector<8x256xbf16>, vector<256x64xbf16>, vector<8x64xf32> -> vector<8x64xf32>
    %76 = arith.addf %69, %75 : vector<8x64xf32>
    %77 = vector.extract_strided_slice %63 {offsets = [0, 2, 0], sizes = [8, 1, 256], strides = [1, 1, 1]} : vector<8x8x256xf32> to vector<8x1x256xf32>
    %78 = vector.shape_cast %77 : vector<8x1x256xf32> to vector<8x256xf32>
    %79 = arith.truncf %78 : vector<8x256xf32> to vector<8x256xbf16>
    %c2_74 = arith.constant 2 : index
    %c0_75 = arith.constant 0 : index
    %c0_76 = arith.constant 0 : index
    %80 = vector.load %arg6[%c2_74, %c0_75, %c0_76] : memref<8x256x64xbf16, #tpu.memory_space<vmem>>, vector<1x256x64xbf16>
    %81 = vector.shape_cast %80 : vector<1x256x64xbf16> to vector<256x64xbf16>
    %cst_77 = arith.constant dense<0.000000e+00> : vector<8x64xf32>
    %82 = tpu.matmul %79, %81, %cst_77 {dimension_numbers = #tpu.dot_dimension_numbers<[1], [0], [0], [1], [0, 0, 1, 1], [], []>} : vector<8x256xbf16>, vector<256x64xbf16>, vector<8x64xf32> -> vector<8x64xf32>
    %83 = arith.addf %76, %82 : vector<8x64xf32>
    %84 = vector.extract_strided_slice %63 {offsets = [0, 3, 0], sizes = [8, 1, 256], strides = [1, 1, 1]} : vector<8x8x256xf32> to vector<8x1x256xf32>
    %85 = vector.shape_cast %84 : vector<8x1x256xf32> to vector<8x256xf32>
    %86 = arith.truncf %85 : vector<8x256xf32> to vector<8x256xbf16>
    %c3 = arith.constant 3 : index
    %c0_78 = arith.constant 0 : index
    %c0_79 = arith.constant 0 : index
    %87 = vector.load %arg6[%c3, %c0_78, %c0_79] : memref<8x256x64xbf16, #tpu.memory_space<vmem>>, vector<1x256x64xbf16>
    %88 = vector.shape_cast %87 : vector<1x256x64xbf16> to vector<256x64xbf16>
    %cst_80 = arith.constant dense<0.000000e+00> : vector<8x64xf32>
    %89 = tpu.matmul %86, %88, %cst_80 {dimension_numbers = #tpu.dot_dimension_numbers<[1], [0], [0], [1], [0, 0, 1, 1], [], []>} : vector<8x256xbf16>, vector<256x64xbf16>, vector<8x64xf32> -> vector<8x64xf32>
    %90 = arith.addf %83, %89 : vector<8x64xf32>
    %91 = vector.extract_strided_slice %63 {offsets = [0, 4, 0], sizes = [8, 1, 256], strides = [1, 1, 1]} : vector<8x8x256xf32> to vector<8x1x256xf32>
    %92 = vector.shape_cast %91 : vector<8x1x256xf32> to vector<8x256xf32>
    %93 = arith.truncf %92 : vector<8x256xf32> to vector<8x256xbf16>
    %c4 = arith.constant 4 : index
    %c0_81 = arith.constant 0 : index
    %c0_82 = arith.constant 0 : index
    %94 = vector.load %arg6[%c4, %c0_81, %c0_82] : memref<8x256x64xbf16, #tpu.memory_space<vmem>>, vector<1x256x64xbf16>
    %95 = vector.shape_cast %94 : vector<1x256x64xbf16> to vector<256x64xbf16>
    %cst_83 = arith.constant dense<0.000000e+00> : vector<8x64xf32>
    %96 = tpu.matmul %93, %95, %cst_83 {dimension_numbers = #tpu.dot_dimension_numbers<[1], [0], [0], [1], [0, 0, 1, 1], [], []>} : vector<8x256xbf16>, vector<256x64xbf16>, vector<8x64xf32> -> vector<8x64xf32>
    %97 = arith.addf %90, %96 : vector<8x64xf32>
    %98 = vector.extract_strided_slice %63 {offsets = [0, 5, 0], sizes = [8, 1, 256], strides = [1, 1, 1]} : vector<8x8x256xf32> to vector<8x1x256xf32>
    %99 = vector.shape_cast %98 : vector<8x1x256xf32> to vector<8x256xf32>
    %100 = arith.truncf %99 : vector<8x256xf32> to vector<8x256xbf16>
    %c5 = arith.constant 5 : index
    %c0_84 = arith.constant 0 : index
    %c0_85 = arith.constant 0 : index
    %101 = vector.load %arg6[%c5, %c0_84, %c0_85] : memref<8x256x64xbf16, #tpu.memory_space<vmem>>, vector<1x256x64xbf16>
    %102 = vector.shape_cast %101 : vector<1x256x64xbf16> to vector<256x64xbf16>
    %cst_86 = arith.constant dense<0.000000e+00> : vector<8x64xf32>
    %103 = tpu.matmul %100, %102, %cst_86 {dimension_numbers = #tpu.dot_dimension_numbers<[1], [0], [0], [1], [0, 0, 1, 1], [], []>} : vector<8x256xbf16>, vector<256x64xbf16>, vector<8x64xf32> -> vector<8x64xf32>
    %104 = arith.addf %97, %103 : vector<8x64xf32>
    %105 = vector.extract_strided_slice %63 {offsets = [0, 6, 0], sizes = [8, 1, 256], strides = [1, 1, 1]} : vector<8x8x256xf32> to vector<8x1x256xf32>
    %106 = vector.shape_cast %105 : vector<8x1x256xf32> to vector<8x256xf32>
    %107 = arith.truncf %106 : vector<8x256xf32> to vector<8x256xbf16>
    %c6 = arith.constant 6 : index
    %c0_87 = arith.constant 0 : index
    %c0_88 = arith.constant 0 : index
    %108 = vector.load %arg6[%c6, %c0_87, %c0_88] : memref<8x256x64xbf16, #tpu.memory_space<vmem>>, vector<1x256x64xbf16>
    %109 = vector.shape_cast %108 : vector<1x256x64xbf16> to vector<256x64xbf16>
    %cst_89 = arith.constant dense<0.000000e+00> : vector<8x64xf32>
    %110 = tpu.matmul %107, %109, %cst_89 {dimension_numbers = #tpu.dot_dimension_numbers<[1], [0], [0], [1], [0, 0, 1, 1], [], []>} : vector<8x256xbf16>, vector<256x64xbf16>, vector<8x64xf32> -> vector<8x64xf32>
    %111 = arith.addf %104, %110 : vector<8x64xf32>
    %112 = vector.extract_strided_slice %63 {offsets = [0, 7, 0], sizes = [8, 1, 256], strides = [1, 1, 1]} : vector<8x8x256xf32> to vector<8x1x256xf32>
    %113 = vector.shape_cast %112 : vector<8x1x256xf32> to vector<8x256xf32>
    %114 = arith.truncf %113 : vector<8x256xf32> to vector<8x256xbf16>
    %c7 = arith.constant 7 : index
    %c0_90 = arith.constant 0 : index
    %c0_91 = arith.constant 0 : index
    %115 = vector.load %arg6[%c7, %c0_90, %c0_91] : memref<8x256x64xbf16, #tpu.memory_space<vmem>>, vector<1x256x64xbf16>
    %116 = vector.shape_cast %115 : vector<1x256x64xbf16> to vector<256x64xbf16>
    %cst_92 = arith.constant dense<0.000000e+00> : vector<8x64xf32>
    %117 = tpu.matmul %114, %116, %cst_92 {dimension_numbers = #tpu.dot_dimension_numbers<[1], [0], [0], [1], [0, 0, 1, 1], [], []>} : vector<8x256xbf16>, vector<256x64xbf16>, vector<8x64xf32> -> vector<8x64xf32>
    %118 = arith.addf %111, %117 : vector<8x64xf32>
    %c0_93 = arith.constant 0 : index
    %c0_94 = arith.constant 0 : index
    %119 = vector.load %arg8[%c0_93, %c0_94] : memref<1x64xf32, #tpu.memory_space<vmem>>, vector<1x64xf32>
    %120 = vector.broadcast %119 : vector<1x64xf32> to vector<8x64xf32>
    %121 = arith.addf %118, %120 : vector<8x64xf32>
    %cst_95 = arith.constant 0.000000e+00 : f32
    %122 = vector.broadcast %cst_95 : f32 to vector<8x64xf32>
    %123 = arith.maximumf %121, %122 : vector<8x64xf32>
    %124 = arith.truncf %123 : vector<8x64xf32> to vector<8x64xbf16>
    %c0_96 = arith.constant 0 : index
    %c0_97 = arith.constant 0 : index
    %125 = vector.load %arg7[%c0_96, %c0_97] : memref<64x64xbf16, #tpu.memory_space<vmem>>, vector<64x64xbf16>
    %cst_98 = arith.constant dense<0.000000e+00> : vector<8x64xf32>
    %126 = tpu.matmul %124, %125, %cst_98 {dimension_numbers = #tpu.dot_dimension_numbers<[1], [0], [0], [1], [0, 0, 1, 1], [], []>} : vector<8x64xbf16>, vector<64x64xbf16>, vector<8x64xf32> -> vector<8x64xf32>
    %c0_99 = arith.constant 0 : index
    %c0_100 = arith.constant 0 : index
    %127 = vector.load %arg9[%c0_99, %c0_100] : memref<1x64xf32, #tpu.memory_space<vmem>>, vector<1x64xf32>
    %128 = vector.broadcast %127 : vector<1x64xf32> to vector<8x64xf32>
    %129 = arith.addf %126, %128 : vector<8x64xf32>
    %cst_101 = arith.constant 0.000000e+00 : f32
    %130 = vector.broadcast %cst_101 : f32 to vector<8x64xf32>
    %131 = arith.maximumf %129, %130 : vector<8x64xf32>
    %132 = arith.truncf %131 : vector<8x64xf32> to vector<8x64xbf16>
    %c0_102 = arith.constant 0 : index
    %c0_103 = arith.constant 0 : index
    %133 = vector.load %arg10[%c0_102, %c0_103] : memref<64x23xbf16, #tpu.memory_space<vmem>>, vector<64x23xbf16>
    %cst_104 = arith.constant dense<0.000000e+00> : vector<8x23xf32>
    %134 = tpu.matmul %132, %133, %cst_104 {dimension_numbers = #tpu.dot_dimension_numbers<[1], [0], [0], [1], [0, 0, 1, 1], [], []>} : vector<8x64xbf16>, vector<64x23xbf16>, vector<8x23xf32> -> vector<8x23xf32>
    %c0_105 = arith.constant 0 : index
    %c0_106 = arith.constant 0 : index
    %135 = vector.load %arg11[%c0_105, %c0_106] : memref<1x23xf32, #tpu.memory_space<vmem>>, vector<1x23xf32>
    %136 = vector.broadcast %135 : vector<1x23xf32> to vector<8x23xf32>
    %137 = arith.addf %134, %136 : vector<8x23xf32>
    %c0_107 = arith.constant 0 : index
    %c0_108 = arith.constant 0 : index
    %138 = vector.load %arg12[%c0_107, %c0_108] : memref<8x23xf32, #tpu.memory_space<vmem>>, vector<8x23xf32>
    tpu.vector_store %arg12[%c0_107, %c0_108], %137 {strides = array<i32>} : memref<8x23xf32, #tpu.memory_space<vmem>>, vector<8x23xf32>,
    return
  }
  func.func @transform_0(%arg0: i32) -> (i32, i32, i32) {
    %c0_i32 = arith.constant 0 : i32
    %c0_i32_0 = arith.constant 0 : i32
    %c0_i32_1 = arith.constant 0 : i32
    return %arg0, %c0_i32, %c0_i32_0 : i32, i32, i32
  }
  func.func @transform_1(%arg0: i32) -> (i32, i32, i32) {
    %c0_i32 = arith.constant 0 : i32
    %c0_i32_0 = arith.constant 0 : i32
    %c0_i32_1 = arith.constant 0 : i32
    %c0_i32_2 = arith.constant 0 : i32
    return %c0_i32, %c0_i32_0, %c0_i32_1 : i32, i32, i32
  }
  func.func @transform_2(%arg0: i32) -> (i32, i32, i32) {
    %c0_i32 = arith.constant 0 : i32
    %c0_i32_0 = arith.constant 0 : i32
    %c0_i32_1 = arith.constant 0 : i32
    %c0_i32_2 = arith.constant 0 : i32
    return %c0_i32, %c0_i32_0, %c0_i32_1 : i32, i32, i32
  }
  func.func @transform_3(%arg0: i32) -> (i32, i32) {
    %c0_i32 = arith.constant 0 : i32
    %c0_i32_0 = arith.constant 0 : i32
    %c0_i32_1 = arith.constant 0 : i32
    return %c0_i32, %c0_i32_0 : i32, i32
  }
  func.func @transform_4(%arg0: i32) -> (i32, i32) {
    %c0_i32 = arith.constant 0 : i32
    %c0_i32_0 = arith.constant 0 : i32
    %c0_i32_1 = arith.constant 0 : i32
    return %c0_i32, %c0_i32_0 : i32, i32
  }
  func.func @transform_5(%arg0: i32) -> (i32, i32, i32) {
    %c0_i32 = arith.constant 0 : i32
    %c0_i32_0 = arith.constant 0 : i32
    %c0_i32_1 = arith.constant 0 : i32
    %c0_i32_2 = arith.constant 0 : i32
    return %c0_i32, %c0_i32_0, %c0_i32_1 : i32, i32, i32
  }
  func.func @transform_6(%arg0: i32) -> (i32, i32) {
    %c0_i32 = arith.constant 0 : i32
    %c0_i32_0 = arith.constant 0 : i32
    %c0_i32_1 = arith.constant 0 : i32
    return %c0_i32, %c0_i32_0 : i32, i32
  }
  func.func @transform_7(%arg0: i32) -> (i32, i32) {
    %c0_i32 = arith.constant 0 : i32
    %c0_i32_0 = arith.constant 0 : i32
    %c0_i32_1 = arith.constant 0 : i32
    return %c0_i32, %c0_i32_0 : i32, i32
  }
  func.func @transform_8(%arg0: i32) -> (i32, i32) {
    %c0_i32 = arith.constant 0 : i32
    %c0_i32_0 = arith.constant 0 : i32
    %c0_i32_1 = arith.constant 0 : i32
    return %c0_i32, %c0_i32_0 : i32, i32
  }
  func.func @transform_9(%arg0: i32) -> (i32, i32) {
    %c0_i32 = arith.constant 0 : i32
    %c0_i32_0 = arith.constant 0 : i32
    %c0_i32_1 = arith.constant 0 : i32
    return %c0_i32, %c0_i32_0 : i32, i32
  }
  func.func @transform_10(%arg0: i32) -> (i32, i32) {
    %c0_i32 = arith.constant 0 : i32
    %c0_i32_0 = arith.constant 0 : i32
    %c0_i32_1 = arith.constant 0 : i32
    return %c0_i32, %c0_i32_0 : i32, i32
  }
  func.func @transform_11(%arg0: i32) -> (i32, i32) {
    %c0_i32 = arith.constant 0 : i32
    %c0_i32_0 = arith.constant 0 : i32
    return %arg0, %c0_i32 : i32, i32
  }
}

</mosaic_0001>

<llo_original>
// kernel: attribute_head_forward.1
$region0: #{attribute_head_forward.1}
  #allocation0 [shape = 'u32[]', space=smem, size = 0x4, offset = 0x4, fixed_abs, tag = 'smem constant byte address 0x4 - core index']
  #allocation1 [shape = 'u32[144,128]{1,0:T(1,128)}', space=vmem, size = 0x12000, scoped, tag = 'internal scratch']
  #allocation2 [shape = 'bf16[8,10,128]{2,1,0:T(8,128)(2,1)}', space=vmem, size = 0x8000, scoped, tag = 'scratch operand']
  #allocation3 [shape = 'bf16[8,10,256]{2,1,0:T(8,128)(2,1)}', space=vmem, size = 0x10000, scoped, tag = 'scratch operand']
  %s0 = inlined_call_operand.vmem [shape: bf16[8,8,128], index: 0, kind: input, shape index: {}]
  %s1 = inlined_call_operand.vmem [shape: bf16[3,128,256], index: 1, kind: input, shape index: {}]
  %s2 = inlined_call_operand.vmem [shape: bf16[3,256,256], index: 2, kind: input, shape index: {}]
  %s3 = inlined_call_operand.vmem [shape: f32[1,256], index: 3, kind: input, shape index: {}]
  %s4 = inlined_call_operand.vmem [shape: f32[1,256], index: 4, kind: input, shape index: {}]
  %s5 = inlined_call_operand.vmem [shape: bf16[8,256,64], index: 5, kind: input, shape index: {}]
  %s6 = inlined_call_operand.vmem [shape: bf16[64,64], index: 6, kind: input, shape index: {}]
  %s7 = inlined_call_operand.vmem [shape: f32[1,64], index: 7, kind: input, shape index: {}]
  %s8 = inlined_call_operand.vmem [shape: f32[1,64], index: 8, kind: input, shape index: {}]
  %s9 = inlined_call_operand.vmem [shape: bf16[64,23], index: 9, kind: input, shape index: {}]
  %s10 = inlined_call_operand.vmem [shape: f32[1,23], index: 10, kind: input, shape index: {}]
  %s11 = inlined_call_operand.vmem [shape: f32[8,23], index: 11, kind: output, shape index: {}]
  %s12 = sld [smem:[#allocation0]]
  $region54: #{attribute_head_forward.1} parent=0
    _
  %s14 = ssub.s32 1, %s12
  %s15 = scalar_select 0, %s14, %s12
  // Predicated region
  $region2: #{attribute_head_forward.1} parent=0 // pred_check
    _
  $region3: #{attribute_head_forward.1} parent=0 // pred_check_branch
    %17 = sbr.rel (0) target = $region5
  $region4: #{attribute_head_forward.1} parent=0 // pred_region
    _
  $region5: #{attribute_head_forward.1} parent=0 // pred_fallthru
    _
  // Predicated region
  $region6: #{attribute_head_forward.1} parent=0 // pred_check
    _
  $region7: #{attribute_head_forward.1} parent=0 // pred_check_branch
    %19 = sbr.rel (0) target = $region9
  $region8: #{attribute_head_forward.1} parent=0 // pred_region
    _
  $region9: #{attribute_head_forward.1} parent=0 // pred_fallthru
    _
  // Predicated region
  $region10: #{attribute_head_forward.1} parent=0 // pred_check
    _
  $region11: #{attribute_head_forward.1} parent=0 // pred_check_branch
    %21 = sbr.rel (0) target = $region13
  $region12: #{attribute_head_forward.1} parent=0 // pred_region
    _
  $region13: #{attribute_head_forward.1} parent=0 // pred_fallthru
    _
  // Predicated region
  $region14: #{attribute_head_forward.1} parent=0 // pred_check
    _
  $region15: #{attribute_head_forward.1} parent=0 // pred_check_branch
    %23 = sbr.rel (0) target = $region17
  $region16: #{attribute_head_forward.1} parent=0 // pred_region
    _
  $region17: #{attribute_head_forward.1} parent=0 // pred_fallthru
    _
  // Predicated region
  $region18: #{attribute_head_forward.1} parent=0 // pred_check
    _
  $region19: #{attribute_head_forward.1} parent=0 // pred_check_branch
    %25 = sbr.rel (0) target = $region21
  $region20: #{attribute_head_forward.1} parent=0 // pred_region
    _
  $region21: #{attribute_head_forward.1} parent=0 // pred_fallthru
    _
  // Predicated region
  $region22: #{attribute_head_forward.1} parent=0 // pred_check
    _
  $region23: #{attribute_head_forward.1} parent=0 // pred_check_branch
    %27 = sbr.rel (0) target = $region25
  $region24: #{attribute_head_forward.1} parent=0 // pred_region
    _
  $region25: #{attribute_head_forward.1} parent=0 // pred_fallthru
    _
  // Predicated region
  $region26: #{attribute_head_forward.1} parent=0 // pred_check
    _
  $region27: #{attribute_head_forward.1} parent=0 // pred_check_branch
    %29 = sbr.rel (0) target = $region29
  $region28: #{attribute_head_forward.1} parent=0 // pred_region
    _
  $region29: #{attribute_head_forward.1} parent=0 // pred_fallthru
    _
  // Predicated region
  $region30: #{attribute_head_forward.1} parent=0 // pred_check
    _
  $region31: #{attribute_head_forward.1} parent=0 // pred_check_branch
    %31 = sbr.rel (0) target = $region33
  $region32: #{attribute_head_forward.1} parent=0 // pred_region
    _
  $region33: #{attribute_head_forward.1} parent=0 // pred_fallthru
    _
  // Predicated region
  $region34: #{attribute_head_forward.1} parent=0 // pred_check
    _
  $region35: #{attribute_head_forward.1} parent=0 // pred_check_branch
    %33 = sbr.rel (0) target = $region37
  $region36: #{attribute_head_forward.1} parent=0 // pred_region
    _
  $region37: #{attribute_head_forward.1} parent=0 // pred_fallthru
    _
  // Predicated region
  $region38: #{attribute_head_forward.1} parent=0 // pred_check
    _
  $region39: #{attribute_head_forward.1} parent=0 // pred_check_branch
    %35 = sbr.rel (0) target = $region41
  $region40: #{attribute_head_forward.1} parent=0 // pred_region
    _
  $region41: #{attribute_head_forward.1} parent=0 // pred_fallthru
    _
  // Predicated region
  $region42: #{attribute_head_forward.1} parent=0 // pred_check
    _
  $region43: #{attribute_head_forward.1} parent=0 // pred_check_branch
    %37 = sbr.rel (0) target = $region45
  $region44: #{attribute_head_forward.1} parent=0 // pred_region
    _
  $region45: #{attribute_head_forward.1} parent=0 // pred_fallthru
    _
  %vm39 = vcmask 1040384
  %vm40 = vsmask.f32 256
  %vm41 = vmand %vm39, %vm40
  %v42 = vld [vmem:[#allocation2] sm:$0x1]
  %v43 = vsel %vm41, 0, %v42
  %44 = vst [vmem:[#allocation2] sm:$0x1] %v43
  %v45 = vld [vmem:[#allocation2 + $0x8] sm:$0x1]
  %v46 = vsel %vm41, 0, %v45
  %47 = vst [vmem:[#allocation2 + $0x8] sm:$0x1] %v46
  %v48 = vld [vmem:[#allocation2 + $0x10] sm:$0x1]
  %v49 = vsel %vm41, 0, %v48
  %50 = vst [vmem:[#allocation2 + $0x10] sm:$0x1] %v49
  %v51 = vld [vmem:[#allocation2 + $0x18] sm:$0x1]
  %v52 = vsel %vm41, 0, %v51
  %53 = vst [vmem:[#allocation2 + $0x18] sm:$0x1] %v52
  %v54 = vld [vmem:[#allocation2 + $0x20] sm:$0x1]
  %v55 = vsel %vm41, 0, %v54
  %56 = vst [vmem:[#allocation2 + $0x20] sm:$0x1] %v55
  %v57 = vld [vmem:[#allocation2 + $0x28] sm:$0x1]
  %v58 = vsel %vm41, 0, %v57
  %59 = vst [vmem:[#allocation2 + $0x28] sm:$0x1] %v58
  %v60 = vld [vmem:[#allocation2 + $0x30] sm:$0x1]
  %v61 = vsel %vm41, 0, %v60
  %62 = vst [vmem:[#allocation2 + $0x30] sm:$0x1] %v61
  %v63 = vld [vmem:[#allocation2 + $0x38] sm:$0x1]
  %v64 = vsel %vm41, 0, %v63
  %65 = vst [vmem:[#allocation2 + $0x38] sm:$0x1] %v64
  %vm66 = vsmask.f32 7938
  %vm67 = vmand %vm39, %vm66
  %v68 = vld [vmem:[#allocation2 + $0x4] sm:$0x1]
  %v69 = vsel %vm67, 0, %v68
  %70 = vst [vmem:[#allocation2 + $0x4] sm:$0x1] %v69
  %v71 = vld [vmem:[#allocation2 + $0xc] sm:$0x1]
  %v72 = vsel %vm67, 0, %v71
  %73 = vst [vmem:[#allocation2 + $0xc] sm:$0x1] %v72
  %v74 = vld [vmem:[#allocation2 + $0x14] sm:$0x1]
  %v75 = vsel %vm67, 0, %v74
  %76 = vst [vmem:[#allocation2 + $0x14] sm:$0x1] %v75
  %v77 = vld [vmem:[#allocation2 + $0x1c] sm:$0x1]
  %v78 = vsel %vm67, 0, %v77
  %79 = vst [vmem:[#allocation2 + $0x1c] sm:$0x1] %v78
  %v80 = vld [vmem:[#allocation2 + $0x24] sm:$0x1]
  %v81 = vsel %vm67, 0, %v80
  %82 = vst [vmem:[#allocation2 + $0x24] sm:$0x1] %v81
  %v83 = vld [vmem:[#allocation2 + $0x2c] sm:$0x1]
  %v84 = vsel %vm67, 0, %v83
  %85 = vst [vmem:[#allocation2 + $0x2c] sm:$0x1] %v84
  %v86 = vld [vmem:[#allocation2 + $0x34] sm:$0x1]
  %v87 = vsel %vm67, 0, %v86
  %88 = vst [vmem:[#allocation2 + $0x34] sm:$0x1] %v87
  %v89 = vld [vmem:[#allocation2 + $0x3c] sm:$0x1]
  %v90 = vsel %vm67, 0, %v89
  %91 = vst [vmem:[#allocation2 + $0x3c] sm:$0x1] %v90
  %v92 = vld [vmem:[%s0] sm:$0xf]
  %v93 = vld [vmem:[%s0 + $0x4] sm:$0xf]
  %v94 = vld [vmem:[%s0 + $0x8] sm:$0xf]
  %v95 = vld [vmem:[%s0 + $0xc] sm:$0xf]
  %v96 = vld [vmem:[%s0 + $0x10] sm:$0xf]
  %v97 = vld [vmem:[%s0 + $0x14] sm:$0xf]
  %v98 = vld [vmem:[%s0 + $0x18] sm:$0xf]
  %v99 = vld [vmem:[%s0 + $0x1c] sm:$0xf]
  %v101 = vshrl.u32 %v92, 16
  %v103 = vrot.slane %v101, 7
  %v104 = vshll.u32 %v92, 16
  %v106 = vor.u32 %v103, %v104
  %v107 = vrot.slane %v103, 4
  %v109 = vshrl.u32 %v93, 16
  %v111 = vrot.slane %v109, 7
  %v112 = vshll.u32 %v93, 16
  %v114 = vor.u32 %v111, %v112
  %v115 = vrot.slane %v111, 4
  %v117 = vshrl.u32 %v94, 16
  %v119 = vrot.slane %v117, 7
  %v120 = vshll.u32 %v94, 16
  %v122 = vor.u32 %v119, %v120
  %v123 = vrot.slane %v119, 4
  %v125 = vshrl.u32 %v95, 16
  %v127 = vrot.slane %v125, 7
  %v128 = vshll.u32 %v95, 16
  %v130 = vor.u32 %v127, %v128
  %v131 = vrot.slane %v127, 4
  %v133 = vshrl.u32 %v96, 16
  %v135 = vrot.slane %v133, 7
  %v136 = vshll.u32 %v96, 16
  %v138 = vor.u32 %v135, %v136
  %v139 = vrot.slane %v135, 4
  %v141 = vshrl.u32 %v97, 16
  %v143 = vrot.slane %v141, 7
  %v144 = vshll.u32 %v97, 16
  %v146 = vor.u32 %v143, %v144
  %v147 = vrot.slane %v143, 4
  %v149 = vshrl.u32 %v98, 16
  %v151 = vrot.slane %v149, 7
  %v152 = vshll.u32 %v98, 16
  %v154 = vor.u32 %v151, %v152
  %v155 = vrot.slane %v151, 4
  %v157 = vshrl.u32 %v99, 16
  %v159 = vrot.slane %v157, 7
  %v160 = vshll.u32 %v99, 16
  %v162 = vor.u32 %v159, %v160
  %v163 = vrot.slane %v159, 4
  %vm180 = vcmask 1043456
  %vm181 = vmand %vm180, %vm66
  %v182 = vld [vmem:[#allocation2] sm:$0xf]
  %v183 = vsel %vm181, %v106, %v182
  %184 = vst [vmem:[#allocation2] sm:$0xf] %v183
  %v185 = vld [vmem:[#allocation2 + $0x4] sm:$0x1]
  %v186 = vsel %vm41, %v107, %v185
  %187 = vst [vmem:[#allocation2 + $0x4] sm:$0x1] %v186
  %v188 = vld [vmem:[#allocation2 + $0x8] sm:$0xf]
  %v189 = vsel %vm181, %v114, %v188
  %190 = vst [vmem:[#allocation2 + $0x8] sm:$0xf] %v189
  %v191 = vld [vmem:[#allocation2 + $0xc] sm:$0x1]
  %v192 = vsel %vm41, %v115, %v191
  %193 = vst [vmem:[#allocation2 + $0xc] sm:$0x1] %v192
  %v194 = vld [vmem:[#allocation2 + $0x10] sm:$0xf]
  %v195 = vsel %vm181, %v122, %v194
  %196 = vst [vmem:[#allocation2 + $0x10] sm:$0xf] %v195
  %v197 = vld [vmem:[#allocation2 + $0x14] sm:$0x1]
  %v198 = vsel %vm41, %v123, %v197
  %199 = vst [vmem:[#allocation2 + $0x14] sm:$0x1] %v198
  %v200 = vld [vmem:[#allocation2 + $0x18] sm:$0xf]
  %v201 = vsel %vm181, %v130, %v200
  %202 = vst [vmem:[#allocation2 + $0x18] sm:$0xf] %v201
  %v203 = vld [vmem:[#allocation2 + $0x1c] sm:$0x1]
  %v204 = vsel %vm41, %v131, %v203
  %205 = vst [vmem:[#allocation2 + $0x1c] sm:$0x1] %v204
  %v206 = vld [vmem:[#allocation2 + $0x20] sm:$0xf]
  %v207 = vsel %vm181, %v138, %v206
  %208 = vst [vmem:[#allocation2 + $0x20] sm:$0xf] %v207
  %v209 = vld [vmem:[#allocation2 + $0x24] sm:$0x1]
  %v210 = vsel %vm41, %v139, %v209
  %211 = vst [vmem:[#allocation2 + $0x24] sm:$0x1] %v210
  %v212 = vld [vmem:[#allocation2 + $0x28] sm:$0xf]
  %v213 = vsel %vm181, %v146, %v212
  %214 = vst [vmem:[#allocation2 + $0x28] sm:$0xf] %v213
  %v215 = vld [vmem:[#allocation2 + $0x2c] sm:$0x1]
  %v216 = vsel %vm41, %v147, %v215
  %217 = vst [vmem:[#allocation2 + $0x2c] sm:$0x1] %v216
  %v218 = vld [vmem:[#allocation2 + $0x30] sm:$0xf]
  %v219 = vsel %vm181, %v154, %v218
  %220 = vst [vmem:[#allocation2 + $0x30] sm:$0xf] %v219
  %v221 = vld [vmem:[#allocation2 + $0x34] sm:$0x1]
  %v222 = vsel %vm41, %v155, %v221
  %223 = vst [vmem:[#allocation2 + $0x34] sm:$0x1] %v222
  %v224 = vld [vmem:[#allocation2 + $0x38] sm:$0xf]
  %v225 = vsel %vm181, %v162, %v224
  %226 = vst [vmem:[#allocation2 + $0x38] sm:$0xf] %v225
  %v227 = vld [vmem:[#allocation2 + $0x3c] sm:$0x1]
  %v228 = vsel %vm41, %v163, %v227
  %229 = vst [vmem:[#allocation2 + $0x3c] sm:$0x1] %v228
  %v230 = vld [vmem:[#allocation2] sm:$0xf]
  %v231 = vld [vmem:[#allocation2 + $0x8] sm:$0xf]
  %v232 = vld [vmem:[#allocation2 + $0x10] sm:$0xf]
  %v233 = vld [vmem:[#allocation2 + $0x18] sm:$0xf]
  %v234 = vld [vmem:[#allocation2 + $0x20] sm:$0xf]
  %v235 = vld [vmem:[#allocation2 + $0x28] sm:$0xf]
  %v236 = vld [vmem:[#allocation2 + $0x30] sm:$0xf]
  %v237 = vld [vmem:[#allocation2 + $0x38] sm:$0xf]
  %v238 = vld [vmem:[%s1] sm:$0xff]
  %v239 = vld [vmem:[%s1 + $0x8] sm:$0xff]
  %v240 = vld [vmem:[%s1 + $0x10] sm:$0xff]
  %v241 = vld [vmem:[%s1 + $0x18] sm:$0xff]
  %v242 = vld [vmem:[%s1 + $0x20] sm:$0xff]
  %v243 = vld [vmem:[%s1 + $0x28] sm:$0xff]
  %v244 = vld [vmem:[%s1 + $0x30] sm:$0xff]
  %v245 = vld [vmem:[%s1 + $0x38] sm:$0xff]
  %v246 = vld [vmem:[%s1 + $0x40] sm:$0xff]
  %v247 = vld [vmem:[%s1 + $0x48] sm:$0xff]
  %v248 = vld [vmem:[%s1 + $0x50] sm:$0xff]
  %v249 = vld [vmem:[%s1 + $0x58] sm:$0xff]
  %v250 = vld [vmem:[%s1 + $0x60] sm:$0xff]
  %v251 = vld [vmem:[%s1 + $0x68] sm:$0xff]
  %v252 = vld [vmem:[%s1 + $0x70] sm:$0xff]
  %v253 = vld [vmem:[%s1 + $0x78] sm:$0xff]
  %v254 = vld [vmem:[#allocation2 + $0x4] sm:$0x1]
  %v255 = vld [vmem:[#allocation2 + $0xc] sm:$0x1]
  %v256 = vld [vmem:[#allocation2 + $0x14] sm:$0x1]
  %v257 = vld [vmem:[#allocation2 + $0x1c] sm:$0x1]
  %v258 = vld [vmem:[#allocation2 + $0x24] sm:$0x1]
  %v259 = vld [vmem:[#allocation2 + $0x2c] sm:$0x1]
  %v260 = vld [vmem:[#allocation2 + $0x34] sm:$0x1]
  %v261 = vld [vmem:[#allocation2 + $0x3c] sm:$0x1]
  %vm262 = vsmask.f32 3328
  %vm263 = vsmask.f32 7440
  %vm264 = vmor %vm262, %vm263
  %v266 = vshrl.u32 %v230, 16
  %v268 = vrot.slane %v266, 4
  %v269 = vshll.u32 %v230, 16
  %v271 = vrot.slane %v269, 5
  %v272 = vor.u32 %v268, %v271
  %v273 = vrot.slane %v272, 4
  %v275 = vshll.u32 %v254, 16
  %v277 = vrot.slane %v275, 5
  %v278 = vsel %vm264, %v273, %v277
  %v280 = vshrl.u32 %v231, 16
  %v282 = vrot.slane %v280, 4
  %v283 = vshll.u32 %v231, 16
  %v285 = vrot.slane %v283, 5
  %v286 = vor.u32 %v282, %v285
  %v287 = vrot.slane %v286, 4
  %v289 = vshll.u32 %v255, 16
  %v291 = vrot.slane %v289, 5
  %v292 = vsel %vm264, %v287, %v291
  %v294 = vshrl.u32 %v232, 16
  %v296 = vrot.slane %v294, 4
  %v297 = vshll.u32 %v232, 16
  %v299 = vrot.slane %v297, 5
  %v300 = vor.u32 %v296, %v299
  %v301 = vrot.slane %v300, 4
  %v303 = vshll.u32 %v256, 16
  %v305 = vrot.slane %v303, 5
  %v306 = vsel %vm264, %v301, %v305
  %v308 = vshrl.u32 %v233, 16
  %v310 = vrot.slane %v308, 4
  %v311 = vshll.u32 %v233, 16
  %v313 = vrot.slane %v311, 5
  %v314 = vor.u32 %v310, %v313
  %v315 = vrot.slane %v314, 4
  %v317 = vshll.u32 %v257, 16
  %v319 = vrot.slane %v317, 5
  %v320 = vsel %vm264, %v315, %v319
  %v322 = vshrl.u32 %v234, 16
  %v324 = vrot.slane %v322, 4
  %v325 = vshll.u32 %v234, 16
  %v327 = vrot.slane %v325, 5
  %v328 = vor.u32 %v324, %v327
  %v329 = vrot.slane %v328, 4
  %v331 = vshll.u32 %v258, 16
  %v333 = vrot.slane %v331, 5
  %v334 = vsel %vm264, %v329, %v333
  %v336 = vshrl.u32 %v235, 16
  %v338 = vrot.slane %v336, 4
  %v339 = vshll.u32 %v235, 16
  %v341 = vrot.slane %v339, 5
  %v342 = vor.u32 %v338, %v341
  %v343 = vrot.slane %v342, 4
  %v345 = vshll.u32 %v259, 16
  %v347 = vrot.slane %v345, 5
  %v348 = vsel %vm264, %v343, %v347
  %v350 = vshrl.u32 %v236, 16
  %v352 = vrot.slane %v350, 4
  %v353 = vshll.u32 %v236, 16
  %v355 = vrot.slane %v353, 5
  %v356 = vor.u32 %v352, %v355
  %v357 = vrot.slane %v356, 4
  %v359 = vshll.u32 %v260, 16
  %v361 = vrot.slane %v359, 5
  %v362 = vsel %vm264, %v357, %v361
  %v364 = vshrl.u32 %v237, 16
  %v366 = vrot.slane %v364, 4
  %v367 = vshll.u32 %v237, 16
  %v369 = vrot.slane %v367, 5
  %v370 = vor.u32 %v366, %v369
  %v371 = vrot.slane %v370, 4
  %v373 = vshll.u32 %v261, 16
  %v375 = vrot.slane %v373, 5
  %v376 = vsel %vm264, %v371, %v375
  %s377 = scalar_lea.vmem %s1, 128
  %v378 = vld [vmem:[%s377] sm:$0xff]
  %v379 = vld [vmem:[%s377 + $0x8] sm:$0xff]
  %v380 = vld [vmem:[%s377 + $0x10] sm:$0xff]
  %v381 = vld [vmem:[%s377 + $0x18] sm:$0xff]
  %v382 = vld [vmem:[%s377 + $0x20] sm:$0xff]
  %v383 = vld [vmem:[%s377 + $0x28] sm:$0xff]
  %v384 = vld [vmem:[%s377 + $0x30] sm:$0xff]
  %v385 = vld [vmem:[%s377 + $0x38] sm:$0xff]
  %v386 = vld [vmem:[%s377 + $0x40] sm:$0xff]
  %v387 = vld [vmem:[%s377 + $0x48] sm:$0xff]
  %v388 = vld [vmem:[%s377 + $0x50] sm:$0xff]
  %v389 = vld [vmem:[%s377 + $0x58] sm:$0xff]
  %v390 = vld [vmem:[%s377 + $0x60] sm:$0xff]
  %v391 = vld [vmem:[%s377 + $0x68] sm:$0xff]
  %v392 = vld [vmem:[%s377 + $0x70] sm:$0xff]
  %v393 = vld [vmem:[%s377 + $0x78] sm:$0xff]
  %v394 = vunpack.c.l.b16 %v278
  %v395 = vunpack.c.l.b16 %v292
  %v396 = vunpack.c.l.b16 %v306
  %v397 = vunpack.c.l.b16 %v320
  %v398 = vunpack.c.l.b16 %v334
  %v399 = vunpack.c.l.b16 %v348
  %v400 = vunpack.c.l.b16 %v362
  %v401 = vunpack.c.l.b16 %v376
  %v402 = vpack.c.b16 %v395, %v394
  %v403 = vpack.c.b16 %v397, %v396
  %v404 = vpack.c.b16 %v399, %v398
  %v405 = vpack.c.b16 %v401, %v400
  %v426 = vunpack.c.l.b16 %v378
  %v427 = vunpack.c.h.b16 %v378
  %v428 = vunpack.c.l.b16 %v379
  %v429 = vunpack.c.h.b16 %v379
  %v430 = vunpack.c.l.b16 %v380
  %v431 = vunpack.c.h.b16 %v380
  %v432 = vunpack.c.l.b16 %v381
  %v433 = vunpack.c.h.b16 %v381
  %v434 = vunpack.c.l.b16 %v382
  %v435 = vunpack.c.h.b16 %v382
  %v436 = vunpack.c.l.b16 %v383
  %v437 = vunpack.c.h.b16 %v383
  %v438 = vunpack.c.l.b16 %v384
  %v439 = vunpack.c.h.b16 %v384
  %v440 = vunpack.c.l.b16 %v385
  %v441 = vunpack.c.h.b16 %v385
  %v442 = vunpack.c.l.b16 %v386
  %v443 = vunpack.c.h.b16 %v386
  %v444 = vunpack.c.l.b16 %v387
  %v445 = vunpack.c.h.b16 %v387
  %v446 = vunpack.c.l.b16 %v388
  %v447 = vunpack.c.h.b16 %v388
  %v448 = vunpack.c.l.b16 %v389
  %v449 = vunpack.c.h.b16 %v389
  %v450 = vunpack.c.l.b16 %v390
  %v451 = vunpack.c.h.b16 %v390
  %v452 = vunpack.c.l.b16 %v391
  %v453 = vunpack.c.h.b16 %v391
  %v454 = vunpack.c.l.b16 %v392
  %v455 = vunpack.c.h.b16 %v392
  %v456 = vunpack.c.l.b16 %v393
  %v457 = vunpack.c.h.b16 %v393
  %v458 = vpack.c.b16 %v428, %v426
  %v459 = vpack.c.b16 %v429, %v427
  %v460 = vpack.c.b16 %v432, %v430
  %v461 = vpack.c.b16 %v433, %v431
  %v462 = vpack.c.b16 %v436, %v434
  %v463 = vpack.c.b16 %v437, %v435
  %v464 = vpack.c.b16 %v440, %v438
  %v465 = vpack.c.b16 %v441, %v439
  %v466 = vpack.c.b16 %v444, %v442
  %v467 = vpack.c.b16 %v445, %v443
  %v468 = vpack.c.b16 %v448, %v446
  %v469 = vpack.c.b16 %v449, %v447
  %v470 = vpack.c.b16 %v452, %v450
  %v471 = vpack.c.b16 %v453, %v451
  %v472 = vpack.c.b16 %v456, %v454
  %v473 = vpack.c.b16 %v457, %v455
  %490 = vmatprep.subr.bf16.mxu0 %v459
  %491 = vmatpush1.bf16.msra.mxu0 %v458
  %492 = vmatprep.subr.bf16.mxu0 %v461
  %493 = vmatpush1.bf16.msra.mxu0 %v460
  %494 = vmatprep.subr.bf16.mxu0 %v463
  %495 = vmatpush1.bf16.msra.mxu0 %v462
  %496 = vmatprep.subr.bf16.mxu0 %v465
  %497 = vmatpush1.bf16.msra.mxu0 %v464
  %498 = vmatprep.subr.bf16.mxu0 %v467
  %499 = vmatpush1.bf16.msra.mxu0 %v466
  %500 = vmatprep.subr.bf16.mxu0 %v469
  %501 = vmatpush1.bf16.msra.mxu0 %v468
  %502 = vmatprep.subr.bf16.mxu0 %v471
  %503 = vmatpush1.bf16.msra.mxu0 %v470
  %504 = vmatprep.subr.bf16.mxu0 %v473
  %505 = vmatpush1.bf16.msra.mxu0 %v472
  %506 = vmatprep.subr.bf16.mxu0 0
  %507 = vmatpush1.bf16.msra.mxu0 0
  %508 = vmatprep.subr.bf16.mxu0 0
  %509 = vmatpush1.bf16.msra.mxu0 0
  %510 = vmatprep.subr.bf16.mxu0 0
  %511 = vmatpush1.bf16.msra.mxu0 0
  %512 = vmatprep.subr.bf16.mxu0 0
  %513 = vmatpush1.bf16.msra.mxu0 0
  %514 = vmatprep.subr.bf16.mxu0 0
  %515 = vmatpush1.bf16.msra.mxu0 0
  %516 = vmatprep.subr.bf16.mxu0 0
  %517 = vmatpush1.bf16.msra.mxu0 0
  %518 = vmatprep.subr.bf16.mxu0 0
  %519 = vmatpush1.bf16.msra.mxu0 0
  %520 = vmatprep.subr.bf16.mxu0 0
  %521 = vmatpush1.bf16.msra.mxu0 0
  %522 = vmatprep.mubr.bf16.mxu0 0
  %523 = vmatmul.mubr.bf16.gmra.mrb[0].mxu0 %v402
  %v524 = vpop.f32.mrb[0].mxu0
  %v525 = vadd.f32 0.0, %v524
  %v526 = vpop.f32.mrb[0].mxu0
  %v527 = vadd.f32 0.0, %v526
  %v528 = vpop.f32.mrb[0].mxu0
  %v529 = vadd.f32 0.0, %v528
  %v530 = vpop.f32.mrb[0].mxu0
  %v531 = vadd.f32 0.0, %v530
  %532 = vmatprep.mubr.bf16.mxu0 0
  %533 = vmatmul.mubr.bf16.gmra.mrb[0].mxu0 %v403
  %v534 = vpop.f32.mrb[0].mxu0
  %v535 = vadd.f32 0.0, %v534
  %v536 = vpop.f32.mrb[0].mxu0
  %v537 = vadd.f32 0.0, %v536
  %v538 = vpop.f32.mrb[0].mxu0
  %v539 = vadd.f32 0.0, %v538
  %v540 = vpop.f32.mrb[0].mxu0
  %v541 = vadd.f32 0.0, %v540
  %542 = vmatprep.mubr.bf16.mxu0 0
  %543 = vmatmul.mubr.bf16.gmra.mrb[0].mxu0 %v404
  %v544 = vpop.f32.mrb[0].mxu0
  %v545 = vadd.f32 0.0, %v544
  %v546 = vpop.f32.mrb[0].mxu0
  %v547 = vadd.f32 0.0, %v546
  %v548 = vpop.f32.mrb[0].mxu0
  %v549 = vadd.f32 0.0, %v548
  %v550 = vpop.f32.mrb[0].mxu0
  %v551 = vadd.f32 0.0, %v550
  %552 = vmatprep.mubr.bf16.mxu0 0
  %553 = vmatmul.mubr.bf16.gmra.mrb[0].mxu0 %v405
  %v554 = vpop.f32.mrb[0].mxu0
  %v555 = vadd.f32 0.0, %v554
  %v556 = vpop.f32.mrb[0].mxu0
  %v557 = vadd.f32 0.0, %v556
  %v558 = vpop.f32.mrb[0].mxu0
  %v559 = vadd.f32 0.0, %v558
  %v560 = vpop.f32.mrb[0].mxu0
  %v561 = vadd.f32 0.0, %v560
  %562 = vdwg.mxu0
  %v571 = vunpack.c.l.b16 %v230
  %v572 = vunpack.c.l.b16 %v231
  %v573 = vunpack.c.l.b16 %v232
  %v574 = vunpack.c.l.b16 %v233
  %v575 = vunpack.c.l.b16 %v234
  %v576 = vunpack.c.l.b16 %v235
  %v577 = vunpack.c.l.b16 %v236
  %v578 = vunpack.c.l.b16 %v237
  %v579 = vpack.c.b16 %v572, %v571
  %v580 = vpack.c.b16 %v574, %v573
  %v581 = vpack.c.b16 %v576, %v575
  %v582 = vpack.c.b16 %v578, %v577
  %v603 = vunpack.c.l.b16 %v238
  %v604 = vunpack.c.h.b16 %v238
  %v605 = vunpack.c.l.b16 %v239
  %v606 = vunpack.c.h.b16 %v239
  %v607 = vunpack.c.l.b16 %v240
  %v608 = vunpack.c.h.b16 %v240
  %v609 = vunpack.c.l.b16 %v241
  %v610 = vunpack.c.h.b16 %v241
  %v611 = vunpack.c.l.b16 %v242
  %v612 = vunpack.c.h.b16 %v242
  %v613 = vunpack.c.l.b16 %v243
  %v614 = vunpack.c.h.b16 %v243
  %v615 = vunpack.c.l.b16 %v244
  %v616 = vunpack.c.h.b16 %v244
  %v617 = vunpack.c.l.b16 %v245
  %v618 = vunpack.c.h.b16 %v245
  %v619 = vunpack.c.l.b16 %v246
  %v620 = vunpack.c.h.b16 %v246
  %v621 = vunpack.c.l.b16 %v247
  %v622 = vunpack.c.h.b16 %v247
  %v623 = vunpack.c.l.b16 %v248
  %v624 = vunpack.c.h.b16 %v248
  %v625 = vunpack.c.l.b16 %v249
  %v626 = vunpack.c.h.b16 %v249
  %v627 = vunpack.c.l.b16 %v250
  %v628 = vunpack.c.h.b16 %v250
  %v629 = vunpack.c.l.b16 %v251
  %v630 = vunpack.c.h.b16 %v251
  %v631 = vunpack.c.l.b16 %v252
  %v632 = vunpack.c.h.b16 %v252
  %v633 = vunpack.c.l.b16 %v253
  %v634 = vunpack.c.h.b16 %v253
  %v635 = vpack.c.b16 %v605, %v603
  %v636 = vpack.c.b16 %v606, %v604
  %v637 = vpack.c.b16 %v609, %v607
  %v638 = vpack.c.b16 %v610, %v608
  %v639 = vpack.c.b16 %v613, %v611
  %v640 = vpack.c.b16 %v614, %v612
  %v641 = vpack.c.b16 %v617, %v615
  %v642 = vpack.c.b16 %v618, %v616
  %v643 = vpack.c.b16 %v621, %v619
  %v644 = vpack.c.b16 %v622, %v620
  %v645 = vpack.c.b16 %v625, %v623
  %v646 = vpack.c.b16 %v626, %v624
  %v647 = vpack.c.b16 %v629, %v627
  %v648 = vpack.c.b16 %v630, %v628
  %v649 = vpack.c.b16 %v633, %v631
  %v650 = vpack.c.b16 %v634, %v632
  %667 = vmatprep.subr.bf16.mxu0 %v636
  %668 = vmatpush1.bf16.msra.mxu0 %v635
  %669 = vmatprep.subr.bf16.mxu0 %v638
  %670 = vmatpush1.bf16.msra.mxu0 %v637
  %671 = vmatprep.subr.bf16.mxu0 %v640
  %672 = vmatpush1.bf16.msra.mxu0 %v639
  %673 = vmatprep.subr.bf16.mxu0 %v642
  %674 = vmatpush1.bf16.msra.mxu0 %v641
  %675 = vmatprep.subr.bf16.mxu0 %v644
  %676 = vmatpush1.bf16.msra.mxu0 %v643
  %677 = vmatprep.subr.bf16.mxu0 %v646
  %678 = vmatpush1.bf16.msra.mxu0 %v645
  %679 = vmatprep.subr.bf16.mxu0 %v648
  %680 = vmatpush1.bf16.msra.mxu0 %v647
  %681 = vmatprep.subr.bf16.mxu0 %v650
  %682 = vmatpush1.bf16.msra.mxu0 %v649
  %683 = vmatprep.subr.bf16.mxu0 0
  %684 = vmatpush1.bf16.msra.mxu0 0
  %685 = vmatprep.subr.bf16.mxu0 0
  %686 = vmatpush1.bf16.msra.mxu0 0
  %687 = vmatprep.subr.bf16.mxu0 0
  %688 = vmatpush1.bf16.msra.mxu0 0
  %689 = vmatprep.subr.bf16.mxu0 0
  %690 = vmatpush1.bf16.msra.mxu0 0
  %691 = vmatprep.subr.bf16.mxu0 0
  %692 = vmatpush1.bf16.msra.mxu0 0
  %693 = vmatprep.subr.bf16.mxu0 0
  %694 = vmatpush1.bf16.msra.mxu0 0
  %695 = vmatprep.subr.bf16.mxu0 0
  %696 = vmatpush1.bf16.msra.mxu0 0
  %697 = vmatprep.subr.bf16.mxu0 0
  %698 = vmatpush1.bf16.msra.mxu0 0
  %699 = vmatprep.mubr.bf16.mxu0 0
  %700 = vmatmul.mubr.bf16.gmra.mrb[0].mxu0 %v579
  %v701 = vpop.f32.mrb[0].mxu0
  %v702 = vadd.f32 %v525, %v701
  %v703 = vpop.f32.mrb[0].mxu0
  %v704 = vadd.f32 %v527, %v703
  %v705 = vpop.f32.mrb[0].mxu0
  %v706 = vadd.f32 %v529, %v705
  %v707 = vpop.f32.mrb[0].mxu0
  %v708 = vadd.f32 %v531, %v707
  %709 = vmatprep.mubr.bf16.mxu0 0
  %710 = vmatmul.mubr.bf16.gmra.mrb[0].mxu0 %v580
  %v711 = vpop.f32.mrb[0].mxu0
  %v712 = vadd.f32 %v535, %v711
  %v713 = vpop.f32.mrb[0].mxu0
  %v714 = vadd.f32 %v537, %v713
  %v715 = vpop.f32.mrb[0].mxu0
  %v716 = vadd.f32 %v539, %v715
  %v717 = vpop.f32.mrb[0].mxu0
  %v718 = vadd.f32 %v541, %v717
  %719 = vmatprep.mubr.bf16.mxu0 0
  %720 = vmatmul.mubr.bf16.gmra.mrb[0].mxu0 %v581
  %v721 = vpop.f32.mrb[0].mxu0
  %v722 = vadd.f32 %v545, %v721
  %v723 = vpop.f32.mrb[0].mxu0
  %v724 = vadd.f32 %v547, %v723
  %v725 = vpop.f32.mrb[0].mxu0
  %v726 = vadd.f32 %v549, %v725
  %v727 = vpop.f32.mrb[0].mxu0
  %v728 = vadd.f32 %v551, %v727
  %729 = vmatprep.mubr.bf16.mxu0 0
  %730 = vmatmul.mubr.bf16.gmra.mrb[0].mxu0 %v582
  %v731 = vpop.f32.mrb[0].mxu0
  %v732 = vadd.f32 %v555, %v731
  %v733 = vpop.f32.mrb[0].mxu0
  %v734 = vadd.f32 %v557, %v733
  %v735 = vpop.f32.mrb[0].mxu0
  %v736 = vadd.f32 %v559, %v735
  %v737 = vpop.f32.mrb[0].mxu0
  %v738 = vadd.f32 %v561, %v737
  %739 = vdwg.mxu0
  %v740 = vld [vmem:[#allocation2] sm:$0xe]
  %v741 = vld [vmem:[#allocation2 + $0x8] sm:$0xe]
  %v742 = vld [vmem:[#allocation2 + $0x10] sm:$0xe]
  %v743 = vld [vmem:[#allocation2 + $0x18] sm:$0xe]
  %v744 = vld [vmem:[#allocation2 + $0x20] sm:$0xe]
  %v745 = vld [vmem:[#allocation2 + $0x28] sm:$0xe]
  %v746 = vld [vmem:[#allocation2 + $0x30] sm:$0xe]
  %v747 = vld [vmem:[#allocation2 + $0x38] sm:$0xe]
  %vm764 = vcmask 1042432
  %vm765 = vcmask 1046532
  %vm766 = vmor %vm764, %vm765
  %v767 = vrot.slane %v740, 5
  %v768 = vrot.slane %v767, 4
  %v769 = vrot.slane %v254, 5
  %v770 = vsel %vm766, %v768, %v769
  %v771 = vrot.slane %v741, 5
  %v772 = vrot.slane %v771, 4
  %v773 = vrot.slane %v255, 5
  %v774 = vsel %vm766, %v772, %v773
  %v775 = vrot.slane %v742, 5
  %v776 = vrot.slane %v775, 4
  %v777 = vrot.slane %v256, 5
  %v778 = vsel %vm766, %v776, %v777
  %v779 = vrot.slane %v743, 5
  %v780 = vrot.slane %v779, 4
  %v781 = vrot.slane %v257, 5
  %v782 = vsel %vm766, %v780, %v781
  %v783 = vrot.slane %v744, 5
  %v784 = vrot.slane %v783, 4
  %v785 = vrot.slane %v258, 5
  %v786 = vsel %vm766, %v784, %v785
  %v787 = vrot.slane %v745, 5
  %v788 = vrot.slane %v787, 4
  %v789 = vrot.slane %v259, 5
  %v790 = vsel %vm766, %v788, %v789
  %v791 = vrot.slane %v746, 5
  %v792 = vrot.slane %v791, 4
  %v793 = vrot.slane %v260, 5
  %v794 = vsel %vm766, %v792, %v793
  %v795 = vrot.slane %v747, 5
  %v796 = vrot.slane %v795, 4
  %v797 = vrot.slane %v261, 5
  %v798 = vsel %vm766, %v796, %v797
  %s799 = scalar_lea.vmem %s1, 256
  %v800 = vld [vmem:[%s799] sm:$0xff]
  %v801 = vld [vmem:[%s799 + $0x8] sm:$0xff]
  %v802 = vld [vmem:[%s799 + $0x10] sm:$0xff]
  %v803 = vld [vmem:[%s799 + $0x18] sm:$0xff]
  %v804 = vld [vmem:[%s799 + $0x20] sm:$0xff]
  %v805 = vld [vmem:[%s799 + $0x28] sm:$0xff]
  %v806 = vld [vmem:[%s799 + $0x30] sm:$0xff]
  %v807 = vld [vmem:[%s799 + $0x38] sm:$0xff]
  %v808 = vld [vmem:[%s799 + $0x40] sm:$0xff]
  %v809 = vld [vmem:[%s799 + $0x48] sm:$0xff]
  %v810 = vld [vmem:[%s799 + $0x50] sm:$0xff]
  %v811 = vld [vmem:[%s799 + $0x58] sm:$0xff]
  %v812 = vld [vmem:[%s799 + $0x60] sm:$0xff]
  %v813 = vld [vmem:[%s799 + $0x68] sm:$0xff]
  %v814 = vld [vmem:[%s799 + $0x70] sm:$0xff]
  %v815 = vld [vmem:[%s799 + $0x78] sm:$0xff]
  %v816 = vunpack.c.l.b16 %v770
  %v817 = vunpack.c.l.b16 %v774
  %v818 = vunpack.c.l.b16 %v778
  %v819 = vunpack.c.l.b16 %v782
  %v820 = vunpack.c.l.b16 %v786
  %v821 = vunpack.c.l.b16 %v790
  %v822 = vunpack.c.l.b16 %v794
  %v823 = vunpack.c.l.b16 %v798
  %v824 = vpack.c.b16 %v817, %v816
  %v825 = vpack.c.b16 %v819, %v818
  %v826 = vpack.c.b16 %v821, %v820
  %v827 = vpack.c.b16 %v823, %v822
  %v848 = vunpack.c.l.b16 %v800
  %v849 = vunpack.c.h.b16 %v800
  %v850 = vunpack.c.l.b16 %v801
  %v851 = vunpack.c.h.b16 %v801
  %v852 = vunpack.c.l.b16 %v802
  %v853 = vunpack.c.h.b16 %v802
  %v854 = vunpack.c.l.b16 %v803
  %v855 = vunpack.c.h.b16 %v803
  %v856 = vunpack.c.l.b16 %v804
  %v857 = vunpack.c.h.b16 %v804
  %v858 = vunpack.c.l.b16 %v805
  %v859 = vunpack.c.h.b16 %v805
  %v860 = vunpack.c.l.b16 %v806
  %v861 = vunpack.c.h.b16 %v806
  %v862 = vunpack.c.l.b16 %v807
  %v863 = vunpack.c.h.b16 %v807
  %v864 = vunpack.c.l.b16 %v808
  %v865 = vunpack.c.h.b16 %v808
  %v866 = vunpack.c.l.b16 %v809
  %v867 = vunpack.c.h.b16 %v809
  %v868 = vunpack.c.l.b16 %v810
  %v869 = vunpack.c.h.b16 %v810
  %v870 = vunpack.c.l.b16 %v811
  %v871 = vunpack.c.h.b16 %v811
  %v872 = vunpack.c.l.b16 %v812
  %v873 = vunpack.c.h.b16 %v812
  %v874 = vunpack.c.l.b16 %v813
  %v875 = vunpack.c.h.b16 %v813
  %v876 = vunpack.c.l.b16 %v814
  %v877 = vunpack.c.h.b16 %v814
  %v878 = vunpack.c.l.b16 %v815
  %v879 = vunpack.c.h.b16 %v815
  %v880 = vpack.c.b16 %v850, %v848
  %v881 = vpack.c.b16 %v851, %v849
  %v882 = vpack.c.b16 %v854, %v852
  %v883 = vpack.c.b16 %v855, %v853
  %v884 = vpack.c.b16 %v858, %v856
  %v885 = vpack.c.b16 %v859, %v857
  %v886 = vpack.c.b16 %v862, %v860
  %v887 = vpack.c.b16 %v863, %v861
  %v888 = vpack.c.b16 %v866, %v864
  %v889 = vpack.c.b16 %v867, %v865
  %v890 = vpack.c.b16 %v870, %v868
  %v891 = vpack.c.b16 %v871, %v869
  %v892 = vpack.c.b16 %v874, %v872
  %v893 = vpack.c.b16 %v875, %v873
  %v894 = vpack.c.b16 %v878, %v876
  %v895 = vpack.c.b16 %v879, %v877
  %912 = vmatprep.subr.bf16.mxu0 %v881
  %913 = vmatpush1.bf16.msra.mxu0 %v880
  %914 = vmatprep.subr.bf16.mxu0 %v883
  %915 = vmatpush1.bf16.msra.mxu0 %v882
  %916 = vmatprep.subr.bf16.mxu0 %v885
  %917 = vmatpush1.bf16.msra.mxu0 %v884
  %918 = vmatprep.subr.bf16.mxu0 %v887
  %919 = vmatpush1.bf16.msra.mxu0 %v886
  %920 = vmatprep.subr.bf16.mxu0 %v889
  %921 = vmatpush1.bf16.msra.mxu0 %v888
  %922 = vmatprep.subr.bf16.mxu0 %v891
  %923 = vmatpush1.bf16.msra.mxu0 %v890
  %924 = vmatprep.subr.bf16.mxu0 %v893
  %925 = vmatpush1.bf16.msra.mxu0 %v892
  %926 = vmatprep.subr.bf16.mxu0 %v895
  %927 = vmatpush1.bf16.msra.mxu0 %v894
  %928 = vmatprep.subr.bf16.mxu0 0
  %929 = vmatpush1.bf16.msra.mxu0 0
  %930 = vmatprep.subr.bf16.mxu0 0
  %931 = vmatpush1.bf16.msra.mxu0 0
  %932 = vmatprep.subr.bf16.mxu0 0
  %933 = vmatpush1.bf16.msra.mxu0 0
  %934 = vmatprep.subr.bf16.mxu0 0
  %935 = vmatpush1.bf16.msra.mxu0 0
  %936 = vmatprep.subr.bf16.mxu0 0
  %937 = vmatpush1.bf16.msra.mxu0 0
  %938 = vmatprep.subr.bf16.mxu0 0
  %939 = vmatpush1.bf16.msra.mxu0 0
  %940 = vmatprep.subr.bf16.mxu0 0
  %941 = vmatpush1.bf16.msra.mxu0 0
  %942 = vmatprep.subr.bf16.mxu0 0
  %943 = vmatpush1.bf16.msra.mxu0 0
  %944 = vmatprep.mubr.bf16.mxu0 0
  %945 = vmatmul.mubr.bf16.gmra.mrb[0].mxu0 %v824
  %v946 = vpop.f32.mrb[0].mxu0
  %v947 = vadd.f32 0.0, %v946
  %v948 = vpop.f32.mrb[0].mxu0
  %v949 = vadd.f32 0.0, %v948
  %v950 = vpop.f32.mrb[0].mxu0
  %v951 = vadd.f32 0.0, %v950
  %v952 = vpop.f32.mrb[0].mxu0
  %v953 = vadd.f32 0.0, %v952
  %954 = vmatprep.mubr.bf16.mxu0 0
  %955 = vmatmul.mubr.bf16.gmra.mrb[0].mxu0 %v825
  %v956 = vpop.f32.mrb[0].mxu0
  %v957 = vadd.f32 0.0, %v956
  %v958 = vpop.f32.mrb[0].mxu0
  %v959 = vadd.f32 0.0, %v958
  %v960 = vpop.f32.mrb[0].mxu0
  %v961 = vadd.f32 0.0, %v960
  %v962 = vpop.f32.mrb[0].mxu0
  %v963 = vadd.f32 0.0, %v962
  %964 = vmatprep.mubr.bf16.mxu0 0
  %965 = vmatmul.mubr.bf16.gmra.mrb[0].mxu0 %v826
  %v966 = vpop.f32.mrb[0].mxu0
  %v967 = vadd.f32 0.0, %v966
  %v968 = vpop.f32.mrb[0].mxu0
  %v969 = vadd.f32 0.0, %v968
  %v970 = vpop.f32.mrb[0].mxu0
  %v971 = vadd.f32 0.0, %v970
  %v972 = vpop.f32.mrb[0].mxu0
  %v973 = vadd.f32 0.0, %v972
  %974 = vmatprep.mubr.bf16.mxu0 0
  %975 = vmatmul.mubr.bf16.gmra.mrb[0].mxu0 %v827
  %v976 = vpop.f32.mrb[0].mxu0
  %v977 = vadd.f32 0.0, %v976
  %v978 = vpop.f32.mrb[0].mxu0
  %v979 = vadd.f32 0.0, %v978
  %v980 = vpop.f32.mrb[0].mxu0
  %v981 = vadd.f32 0.0, %v980
  %v982 = vpop.f32.mrb[0].mxu0
  %v983 = vadd.f32 0.0, %v982
  %984 = vdwg.mxu0
  %v985 = vadd.f32 %v702, %v947
  %v986 = vadd.f32 %v704, %v949
  %v987 = vadd.f32 %v706, %v951
  %v988 = vadd.f32 %v708, %v953
  %v989 = vadd.f32 %v712, %v957
  %v990 = vadd.f32 %v714, %v959
  %v991 = vadd.f32 %v716, %v961
  %v992 = vadd.f32 %v718, %v963
  %v993 = vadd.f32 %v722, %v967
  %v994 = vadd.f32 %v724, %v969
  %v995 = vadd.f32 %v726, %v971
  %v996 = vadd.f32 %v728, %v973
  %v997 = vadd.f32 %v732, %v977
  %v998 = vadd.f32 %v734, %v979
  %v999 = vadd.f32 %v736, %v981
  %v1000 = vadd.f32 %v738, %v983
  %v1001 = vld [vmem:[%s3] sm:$0x3]
  %v1003 = vlaneseq
  %v1004 = vshrl.u32 %v1003, 7
  %v1005 = vsub.s32 0, %v1004
  %v1006 = vrot.slane %v1001, %v1005
  %v1007 = vlaneseq
  %v1008 = vshrl.u32 %v1007, 7
  %v1009 = vsub.s32 1, %v1008
  %v1010 = vrot.slane %v1001, %v1009
  %v1013 = vadd.f32 %v985, %v1006
  %v1014 = vadd.f32 %v986, %v1010
  %v1015 = vadd.f32 %v987, %v1006
  %v1016 = vadd.f32 %v988, %v1010
  %v1017 = vadd.f32 %v989, %v1006
  %v1018 = vadd.f32 %v990, %v1010
  %v1019 = vadd.f32 %v991, %v1006
  %v1020 = vadd.f32 %v992, %v1010
  %v1021 = vadd.f32 %v993, %v1006
  %v1022 = vadd.f32 %v994, %v1010
  %v1023 = vadd.f32 %v995, %v1006
  %v1024 = vadd.f32 %v996, %v1010
  %v1025 = vadd.f32 %v997, %v1006
  %v1026 = vadd.f32 %v998, %v1010
  %v1027 = vadd.f32 %v999, %v1006
  %v1028 = vadd.f32 %v1000, %v1010
  %v1029 = vmax.f32 %v1013, 0.0
  %v1030 = vmax.f32 %v1014, 0.0
  %v1031 = vmax.f32 %v1015, 0.0
  %v1032 = vmax.f32 %v1016, 0.0
  %v1033 = vmax.f32 %v1017, 0.0
  %v1034 = vmax.f32 %v1018, 0.0
  %v1035 = vmax.f32 %v1019, 0.0
  %v1036 = vmax.f32 %v1020, 0.0
  %v1037 = vmax.f32 %v1021, 0.0
  %v1038 = vmax.f32 %v1022, 0.0
  %v1039 = vmax.f32 %v1023, 0.0
  %v1040 = vmax.f32 %v1024, 0.0
  %v1041 = vmax.f32 %v1025, 0.0
  %v1042 = vmax.f32 %v1026, 0.0
  %v1043 = vmax.f32 %v1027, 0.0
  %v1044 = vmax.f32 %v1028, 0.0
  %vm1045 = vcmask 1044484
  %vm1046 = vsmask.f32 4352
  %vm1047 = vmand %vm1045, %vm1046
  %vm1048 = vmor %vm1047, %vm41
  %v1049 = vld [vmem:[#allocation3] sm:$0x11]
  %v1050 = vsel %vm1048, 0, %v1049
  %1051 = vst [vmem:[#allocation3] sm:$0x11] %v1050
  %v1052 = vld [vmem:[#allocation3 + $0x10] sm:$0x11]
  %v1053 = vsel %vm1048, 0, %v1052
  %1054 = vst [vmem:[#allocation3 + $0x10] sm:$0x11] %v1053
  %v1055 = vld [vmem:[#allocation3 + $0x20] sm:$0x11]
  %v1056 = vsel %vm1048, 0, %v1055
  %1057 = vst [vmem:[#allocation3 + $0x20] sm:$0x11] %v1056
  %v1058 = vld [vmem:[#allocation3 + $0x30] sm:$0x11]
  %v1059 = vsel %vm1048, 0, %v1058
  %1060 = vst [vmem:[#allocation3 + $0x30] sm:$0x11] %v1059
  %v1061 = vld [vmem:[#allocation3 + $0x40] sm:$0x11]
  %v1062 = vsel %vm1048, 0, %v1061
  %1063 = vst [vmem:[#allocation3 + $0x40] sm:$0x11] %v1062
  %v1064 = vld [vmem:[#allocation3 + $0x50] sm:$0x11]
  %v1065 = vsel %vm1048, 0, %v1064
  %1066 = vst [vmem:[#allocation3 + $0x50] sm:$0x11] %v1065
  %v1067 = vld [vmem:[#allocation3 + $0x60] sm:$0x11]
  %v1068 = vsel %vm1048, 0, %v1067
  %1069 = vst [vmem:[#allocation3 + $0x60] sm:$0x11] %v1068
  %v1070 = vld [vmem:[#allocation3 + $0x70] sm:$0x11]
  %v1071 = vsel %vm1048, 0, %v1070
  %1072 = vst [vmem:[#allocation3 + $0x70] sm:$0x11] %v1071
  %vm1073 = vsmask.f32 7954
  %vm1074 = vmand %vm1045, %vm1073
  %vm1075 = vmor %vm1074, %vm67
  %v1076 = vld [vmem:[#allocation3 + $0x8] sm:$0x11]
  %v1077 = vsel %vm1075, 0, %v1076
  %1078 = vst [vmem:[#allocation3 + $0x8] sm:$0x11] %v1077
  %v1079 = vld [vmem:[#allocation3 + $0x18] sm:$0x11]
  %v1080 = vsel %vm1075, 0, %v1079
  %1081 = vst [vmem:[#allocation3 + $0x18] sm:$0x11] %v1080
  %v1082 = vld [vmem:[#allocation3 + $0x28] sm:$0x11]
  %v1083 = vsel %vm1075, 0, %v1082
  %1084 = vst [vmem:[#allocation3 + $0x28] sm:$0x11] %v1083
  %v1085 = vld [vmem:[#allocation3 + $0x38] sm:$0x11]
  %v1086 = vsel %vm1075, 0, %v1085
  %1087 = vst [vmem:[#allocation3 + $0x38] sm:$0x11] %v1086
  %v1088 = vld [vmem:[#allocation3 + $0x48] sm:$0x11]
  %v1089 = vsel %vm1075, 0, %v1088
  %1090 = vst [vmem:[#allocation3 + $0x48] sm:$0x11] %v1089
  %v1091 = vld [vmem:[#allocation3 + $0x58] sm:$0x11]
  %v1092 = vsel %vm1075, 0, %v1091
  %1093 = vst [vmem:[#allocation3 + $0x58] sm:$0x11] %v1092
  %v1094 = vld [vmem:[#allocation3 + $0x68] sm:$0x11]
  %v1095 = vsel %vm1075, 0, %v1094
  %1096 = vst [vmem:[#allocation3 + $0x68] sm:$0x11] %v1095
  %v1097 = vld [vmem:[#allocation3 + $0x78] sm:$0x11]
  %v1098 = vsel %vm1075, 0, %v1097
  %1099 = vst [vmem:[#allocation3 + $0x78] sm:$0x11] %v1098
  %v1100 = vpack.c.bf16 %v1029, %v1029
  %v1101 = vpack.c.bf16 %v1030, %v1030
  %v1102 = vpack.c.bf16 %v1031, %v1031
  %v1103 = vpack.c.bf16 %v1032, %v1032
  %v1104 = vpack.c.bf16 %v1033, %v1033
  %v1105 = vpack.c.bf16 %v1034, %v1034
  %v1106 = vpack.c.bf16 %v1035, %v1035
  %v1107 = vpack.c.bf16 %v1036, %v1036
  %v1108 = vpack.c.bf16 %v1037, %v1037
  %v1109 = vpack.c.bf16 %v1038, %v1038
  %v1110 = vpack.c.bf16 %v1039, %v1039
  %v1111 = vpack.c.bf16 %v1040, %v1040
  %v1112 = vpack.c.bf16 %v1041, %v1041
  %v1113 = vpack.c.bf16 %v1042, %v1042
  %v1114 = vpack.c.bf16 %v1043, %v1043
  %v1115 = vpack.c.bf16 %v1044, %v1044
  %v1132 = vunpack.c.l.b16 %v1100
  %v1133 = vunpack.c.l.b16 %v1101
  %v1134 = vunpack.c.l.b16 %v1102
  %v1135 = vunpack.c.l.b16 %v1103
  %v1136 = vunpack.c.l.b16 %v1104
  %v1137 = vunpack.c.l.b16 %v1105
  %v1138 = vunpack.c.l.b16 %v1106
  %v1139 = vunpack.c.l.b16 %v1107
  %v1140 = vunpack.c.l.b16 %v1108
  %v1141 = vunpack.c.l.b16 %v1109
  %v1142 = vunpack.c.l.b16 %v1110
  %v1143 = vunpack.c.l.b16 %v1111
  %v1144 = vunpack.c.l.b16 %v1112
  %v1145 = vunpack.c.l.b16 %v1113
  %v1146 = vunpack.c.l.b16 %v1114
  %v1147 = vunpack.c.l.b16 %v1115
  %v1148 = vpack.c.b16 %v1133, %v1132
  %v1149 = vpack.c.b16 %v1135, %v1134
  %v1150 = vpack.c.b16 %v1137, %v1136
  %v1151 = vpack.c.b16 %v1139, %v1138
  %v1152 = vpack.c.b16 %v1141, %v1140
  %v1153 = vpack.c.b16 %v1143, %v1142
  %v1154 = vpack.c.b16 %v1145, %v1144
  %v1155 = vpack.c.b16 %v1147, %v1146
  %v1157 = vshrl.u32 %v1148, 16
  %v1159 = vrot.slane %v1157, 7
  %v1160 = vshll.u32 %v1148, 16
  %v1162 = vor.u32 %v1159, %v1160
  %v1163 = vrot.slane %v1159, 4
  %v1165 = vshrl.u32 %v1149, 16
  %v1167 = vrot.slane %v1165, 7
  %v1168 = vshll.u32 %v1149, 16
  %v1170 = vor.u32 %v1167, %v1168
  %v1171 = vrot.slane %v1167, 4
  %v1173 = vshrl.u32 %v1150, 16
  %v1175 = vrot.slane %v1173, 7
  %v1176 = vshll.u32 %v1150, 16
  %v1178 = vor.u32 %v1175, %v1176
  %v1179 = vrot.slane %v1175, 4
  %v1181 = vshrl.u32 %v1151, 16
  %v1183 = vrot.slane %v1181, 7
  %v1184 = vshll.u32 %v1151, 16
  %v1186 = vor.u32 %v1183, %v1184
  %v1187 = vrot.slane %v1183, 4
  %v1189 = vshrl.u32 %v1152, 16
  %v1191 = vrot.slane %v1189, 7
  %v1192 = vshll.u32 %v1152, 16
  %v1194 = vor.u32 %v1191, %v1192
  %v1195 = vrot.slane %v1191, 4
  %v1197 = vshrl.u32 %v1153, 16
  %v1199 = vrot.slane %v1197, 7
  %v1200 = vshll.u32 %v1153, 16
  %v1202 = vor.u32 %v1199, %v1200
  %v1203 = vrot.slane %v1199, 4
  %v1205 = vshrl.u32 %v1154, 16
  %v1207 = vrot.slane %v1205, 7
  %v1208 = vshll.u32 %v1154, 16
  %v1210 = vor.u32 %v1207, %v1208
  %v1211 = vrot.slane %v1207, 4
  %v1213 = vshrl.u32 %v1155, 16
  %v1215 = vrot.slane %v1213, 7
  %v1216 = vshll.u32 %v1155, 16
  %v1218 = vor.u32 %v1215, %v1216
  %v1219 = vrot.slane %v1215, 4
  %vm1236 = vcmask 1047556
  %vm1237 = vmand %vm1236, %vm1073
  %vm1238 = vmor %vm1237, %vm181
  %v1239 = vld [vmem:[#allocation3] sm:$0xff]
  %v1240 = vsel %vm1238, %v1162, %v1239
  %1241 = vst [vmem:[#allocation3] sm:$0xff] %v1240
  %v1242 = vld [vmem:[#allocation3 + $0x8] sm:$0x11]
  %v1243 = vsel %vm1048, %v1163, %v1242
  %1244 = vst [vmem:[#allocation3 + $0x8] sm:$0x11] %v1243
  %v1245 = vld [vmem:[#allocation3 + $0x10] sm:$0xff]
  %v1246 = vsel %vm1238, %v1170, %v1245
  %1247 = vst [vmem:[#allocation3 + $0x10] sm:$0xff] %v1246
  %v1248 = vld [vmem:[#allocation3 + $0x18] sm:$0x11]
  %v1249 = vsel %vm1048, %v1171, %v1248
  %1250 = vst [vmem:[#allocation3 + $0x18] sm:$0x11] %v1249
  %v1251 = vld [vmem:[#allocation3 + $0x20] sm:$0xff]
  %v1252 = vsel %vm1238, %v1178, %v1251
  %1253 = vst [vmem:[#allocation3 + $0x20] sm:$0xff] %v1252
  %v1254 = vld [vmem:[#allocation3 + $0x28] sm:$0x11]
  %v1255 = vsel %vm1048, %v1179, %v1254
  %1256 = vst [vmem:[#allocation3 + $0x28] sm:$0x11] %v1255
  %v1257 = vld [vmem:[#allocation3 + $0x30] sm:$0xff]
  %v1258 = vsel %vm1238, %v1186, %v1257
  %1259 = vst [vmem:[#allocation3 + $0x30] sm:$0xff] %v1258
  %v1260 = vld [vmem:[#allocation3 + $0x38] sm:$0x11]
  %v1261 = vsel %vm1048, %v1187, %v1260
  %1262 = vst [vmem:[#allocation3 + $0x38] sm:$0x11] %v1261
  %v1263 = vld [vmem:[#allocation3 + $0x40] sm:$0xff]
  %v1264 = vsel %vm1238, %v1194, %v1263
  %1265 = vst [vmem:[#allocation3 + $0x40] sm:$0xff] %v1264
  %v1266 = vld [vmem:[#allocation3 + $0x48] sm:$0x11]
  %v1267 = vsel %vm1048, %v1195, %v1266
  %1268 = vst [vmem:[#allocation3 + $0x48] sm:$0x11] %v1267
  %v1269 = vld [vmem:[#allocation3 + $0x50] sm:$0xff]
  %v1270 = vsel %vm1238, %v1202, %v1269
  %1271 = vst [vmem:[#allocation3 + $0x50] sm:$0xff] %v1270
  %v1272 = vld [vmem:[#allocation3 + $0x58] sm:$0x11]
  %v1273 = vsel %vm1048, %v1203, %v1272
  %1274 = vst [vmem:[#allocation3 + $0x58] sm:$0x11] %v1273
  %v1275 = vld [vmem:[#allocation3 + $0x60] sm:$0xff]
  %v1276 = vsel %vm1238, %v1210, %v1275
  %1277 = vst [vmem:[#allocation3 + $0x60] sm:$0xff] %v1276
  %v1278 = vld [vmem:[#allocation3 + $0x68] sm:$0x11]
  %v1279 = vsel %vm1048, %v1211, %v1278
  %1280 = vst [vmem:[#allocation3 + $0x68] sm:$0x11] %v1279
  %v1281 = vld [vmem:[#allocation3 + $0x70] sm:$0xff]
  %v1282 = vsel %vm1238, %v1218, %v1281
  %1283 = vst [vmem:[#allocation3 + $0x70] sm:$0xff] %v1282
  %v1284 = vld [vmem:[#allocation3 + $0x78] sm:$0x11]
  %v1285 = vsel %vm1048, %v1219, %v1284
  %1286 = vst [vmem:[#allocation3 + $0x78] sm:$0x11] %v1285
  %v1287 = vld [vmem:[#allocation3] sm:$0xff]
  %v1288 = vld [vmem:[#allocation3 + $0x10] sm:$0xff]
  %v1289 = vld [vmem:[#allocation3 + $0x20] sm:$0xff]
  %v1290 = vld [vmem:[#allocation3 + $0x30] sm:$0xff]
  %v1291 = vld [vmem:[#allocation3 + $0x40] sm:$0xff]
  %v1292 = vld [vmem:[#allocation3 + $0x50] sm:$0xff]
  %v1293 = vld [vmem:[#allocation3 + $0x60] sm:$0xff]
  %v1294 = vld [vmem:[#allocation3 + $0x70] sm:$0xff]
  %v1295 = vld [vmem:[%s2] sm:$0xff]
  %v1296 = vld [vmem:[%s2 + $0x8] sm:$0xff]
  %v1297 = vld [vmem:[%s2 + $0x10] sm:$0xff]
  %v1298 = vld [vmem:[%s2 + $0x18] sm:$0xff]
  %v1299 = vld [vmem:[%s2 + $0x20] sm:$0xff]
  %v1300 = vld [vmem:[%s2 + $0x28] sm:$0xff]
  %v1301 = vld [vmem:[%s2 + $0x30] sm:$0xff]
  %v1302 = vld [vmem:[%s2 + $0x38] sm:$0xff]
  %v1303 = vld [vmem:[%s2 + $0x40] sm:$0xff]
  %v1304 = vld [vmem:[%s2 + $0x48] sm:$0xff]
  %v1305 = vld [vmem:[%s2 + $0x50] sm:$0xff]
  %v1306 = vld [vmem:[%s2 + $0x58] sm:$0xff]
  %v1307 = vld [vmem:[%s2 + $0x60] sm:$0xff]
  %v1308 = vld [vmem:[%s2 + $0x68] sm:$0xff]
  %v1309 = vld [vmem:[%s2 + $0x70] sm:$0xff]
  %v1310 = vld [vmem:[%s2 + $0x78] sm:$0xff]
  %v1311 = vld [vmem:[%s2 + $0x80] sm:$0xff]
  %v1312 = vld [vmem:[%s2 + $0x88] sm:$0xff]
  %v1313 = vld [vmem:[%s2 + $0x90] sm:$0xff]
  %v1314 = vld [vmem:[%s2 + $0x98] sm:$0xff]
  %v1315 = vld [vmem:[%s2 + $0xa0] sm:$0xff]
  %v1316 = vld [vmem:[%s2 + $0xa8] sm:$0xff]
  %v1317 = vld [vmem:[%s2 + $0xb0] sm:$0xff]
  %v1318 = vld [vmem:[%s2 + $0xb8] sm:$0xff]
  %v1319 = vld [vmem:[%s2 + $0xc0] sm:$0xff]
  %v1320 = vld [vmem:[%s2 + $0xc8] sm:$0xff]
  %v1321 = vld [vmem:[%s2 + $0xd0] sm:$0xff]
  %v1322 = vld [vmem:[%s2 + $0xd8] sm:$0xff]
  %v1323 = vld [vmem:[%s2 + $0xe0] sm:$0xff]
  %v1324 = vld [vmem:[%s2 + $0xe8] sm:$0xff]
  %v1325 = vld [vmem:[%s2 + $0xf0] sm:$0xff]
  %v1326 = vld [vmem:[%s2 + $0xf8] sm:$0xff]
  %v1327 = vld [vmem:[#allocation3 + $0x8] sm:$0x11]
  %v1328 = vld [vmem:[#allocation3 + $0x18] sm:$0x11]
  %v1329 = vld [vmem:[#allocation3 + $0x28] sm:$0x11]
  %v1330 = vld [vmem:[#allocation3 + $0x38] sm:$0x11]
  %v1331 = vld [vmem:[#allocation3 + $0x48] sm:$0x11]
  %v1332 = vld [vmem:[#allocation3 + $0x58] sm:$0x11]
  %v1333 = vld [vmem:[#allocation3 + $0x68] sm:$0x11]
  %v1334 = vld [vmem:[#allocation3 + $0x78] sm:$0x11]
  %v1336 = vshrl.u32 %v1287, 16
  %v1338 = vrot.slane %v1336, 4
  %v1339 = vshll.u32 %v1287, 16
  %v1341 = vrot.slane %v1339, 5
  %v1342 = vor.u32 %v1338, %v1341
  %v1343 = vrot.slane %v1342, 4
  %v1345 = vshll.u32 %v1327, 16
  %v1347 = vrot.slane %v1345, 5
  %v1348 = vsel %vm264, %v1343, %v1347
  %v1350 = vshrl.u32 %v1288, 16
  %v1352 = vrot.slane %v1350, 4
  %v1353 = vshll.u32 %v1288, 16
  %v1355 = vrot.slane %v1353, 5
  %v1356 = vor.u32 %v1352, %v1355
  %v1357 = vrot.slane %v1356, 4
  %v1359 = vshll.u32 %v1328, 16
  %v1361 = vrot.slane %v1359, 5
  %v1362 = vsel %vm264, %v1357, %v1361
  %v1364 = vshrl.u32 %v1289, 16
  %v1366 = vrot.slane %v1364, 4
  %v1367 = vshll.u32 %v1289, 16
  %v1369 = vrot.slane %v1367, 5
  %v1370 = vor.u32 %v1366, %v1369
  %v1371 = vrot.slane %v1370, 4
  %v1373 = vshll.u32 %v1329, 16
  %v1375 = vrot.slane %v1373, 5
  %v1376 = vsel %vm264, %v1371, %v1375
  %v1378 = vshrl.u32 %v1290, 16
  %v1380 = vrot.slane %v1378, 4
  %v1381 = vshll.u32 %v1290, 16
  %v1383 = vrot.slane %v1381, 5
  %v1384 = vor.u32 %v1380, %v1383
  %v1385 = vrot.slane %v1384, 4
  %v1387 = vshll.u32 %v1330, 16
  %v1389 = vrot.slane %v1387, 5
  %v1390 = vsel %vm264, %v1385, %v1389
  %v1392 = vshrl.u32 %v1291, 16
  %v1394 = vrot.slane %v1392, 4
  %v1395 = vshll.u32 %v1291, 16
  %v1397 = vrot.slane %v1395, 5
  %v1398 = vor.u32 %v1394, %v1397
  %v1399 = vrot.slane %v1398, 4
  %v1401 = vshll.u32 %v1331, 16
  %v1403 = vrot.slane %v1401, 5
  %v1404 = vsel %vm264, %v1399, %v1403
  %v1406 = vshrl.u32 %v1292, 16
  %v1408 = vrot.slane %v1406, 4
  %v1409 = vshll.u32 %v1292, 16
  %v1411 = vrot.slane %v1409, 5
  %v1412 = vor.u32 %v1408, %v1411
  %v1413 = vrot.slane %v1412, 4
  %v1415 = vshll.u32 %v1332, 16
  %v1417 = vrot.slane %v1415, 5
  %v1418 = vsel %vm264, %v1413, %v1417
  %v1420 = vshrl.u32 %v1293, 16
  %v1422 = vrot.slane %v1420, 4
  %v1423 = vshll.u32 %v1293, 16
  %v1425 = vrot.slane %v1423, 5
  %v1426 = vor.u32 %v1422, %v1425
  %v1427 = vrot.slane %v1426, 4
  %v1429 = vshll.u32 %v1333, 16
  %v1431 = vrot.slane %v1429, 5
  %v1432 = vsel %vm264, %v1427, %v1431
  %v1434 = vshrl.u32 %v1294, 16
  %v1436 = vrot.slane %v1434, 4
  %v1437 = vshll.u32 %v1294, 16
  %v1439 = vrot.slane %v1437, 5
  %v1440 = vor.u32 %v1436, %v1439
  %v1441 = vrot.slane %v1440, 4
  %v1443 = vshll.u32 %v1334, 16
  %v1445 = vrot.slane %v1443, 5
  %v1446 = vsel %vm264, %v1441, %v1445
  %s1447 = scalar_lea.vmem %s2, 256
  %v1448 = vld [vmem:[%s1447] sm:$0xff]
  %v1449 = vld [vmem:[%s1447 + $0x8] sm:$0xff]
  %v1450 = vld [vmem:[%s1447 + $0x10] sm:$0xff]
  %v1451 = vld [vmem:[%s1447 + $0x18] sm:$0xff]
  %v1452 = vld [vmem:[%s1447 + $0x20] sm:$0xff]
  %v1453 = vld [vmem:[%s1447 + $0x28] sm:$0xff]
  %v1454 = vld [vmem:[%s1447 + $0x30] sm:$0xff]
  %v1455 = vld [vmem:[%s1447 + $0x38] sm:$0xff]
  %v1456 = vld [vmem:[%s1447 + $0x40] sm:$0xff]
  %v1457 = vld [vmem:[%s1447 + $0x48] sm:$0xff]
  %v1458 = vld [vmem:[%s1447 + $0x50] sm:$0xff]
  %v1459 = vld [vmem:[%s1447 + $0x58] sm:$0xff]
  %v1460 = vld [vmem:[%s1447 + $0x60] sm:$0xff]
  %v1461 = vld [vmem:[%s1447 + $0x68] sm:$0xff]
  %v1462 = vld [vmem:[%s1447 + $0x70] sm:$0xff]
  %v1463 = vld [vmem:[%s1447 + $0x78] sm:$0xff]
  %v1464 = vld [vmem:[%s1447 + $0x80] sm:$0xff]
  %v1465 = vld [vmem:[%s1447 + $0x88] sm:$0xff]
  %v1466 = vld [vmem:[%s1447 + $0x90] sm:$0xff]
  %v1467 = vld [vmem:[%s1447 + $0x98] sm:$0xff]
  %v1468 = vld [vmem:[%s1447 + $0xa0] sm:$0xff]
  %v1469 = vld [vmem:[%s1447 + $0xa8] sm:$0xff]
  %v1470 = vld [vmem:[%s1447 + $0xb0] sm:$0xff]
  %v1471 = vld [vmem:[%s1447 + $0xb8] sm:$0xff]
  %v1472 = vld [vmem:[%s1447 + $0xc0] sm:$0xff]
  %v1473 = vld [vmem:[%s1447 + $0xc8] sm:$0xff]
  %v1474 = vld [vmem:[%s1447 + $0xd0] sm:$0xff]
  %v1475 = vld [vmem:[%s1447 + $0xd8] sm:$0xff]
  %v1476 = vld [vmem:[%s1447 + $0xe0] sm:$0xff]
  %v1477 = vld [vmem:[%s1447 + $0xe8] sm:$0xff]
  %v1478 = vld [vmem:[%s1447 + $0xf0] sm:$0xff]
  %v1479 = vld [vmem:[%s1447 + $0xf8] sm:$0xff]
  %v1480 = vunpack.c.l.b16 %v1348
  %v1481 = vunpack.c.h.b16 %v1348
  %v1482 = vunpack.c.l.b16 %v1362
  %v1483 = vunpack.c.h.b16 %v1362
  %v1484 = vunpack.c.l.b16 %v1376
  %v1485 = vunpack.c.h.b16 %v1376
  %v1486 = vunpack.c.l.b16 %v1390
  %v1487 = vunpack.c.h.b16 %v1390
  %v1488 = vunpack.c.l.b16 %v1404
  %v1489 = vunpack.c.h.b16 %v1404
  %v1490 = vunpack.c.l.b16 %v1418
  %v1491 = vunpack.c.h.b16 %v1418
  %v1492 = vunpack.c.l.b16 %v1432
  %v1493 = vunpack.c.h.b16 %v1432
  %v1494 = vunpack.c.l.b16 %v1446
  %v1495 = vunpack.c.h.b16 %v1446
  %v1496 = vpack.c.b16 %v1482, %v1480
  %v1497 = vpack.c.b16 %v1483, %v1481
  %v1498 = vpack.c.b16 %v1486, %v1484
  %v1499 = vpack.c.b16 %v1487, %v1485
  %v1500 = vpack.c.b16 %v1490, %v1488
  %v1501 = vpack.c.b16 %v1491, %v1489
  %v1502 = vpack.c.b16 %v1494, %v1492
  %v1503 = vpack.c.b16 %v1495, %v1493
  %v1544 = vunpack.c.l.b16 %v1448
  %v1545 = vunpack.c.h.b16 %v1448
  %v1546 = vunpack.c.l.b16 %v1449
  %v1547 = vunpack.c.h.b16 %v1449
  %v1548 = vunpack.c.l.b16 %v1450
  %v1549 = vunpack.c.h.b16 %v1450
  %v1550 = vunpack.c.l.b16 %v1451
  %v1551 = vunpack.c.h.b16 %v1451
  %v1552 = vunpack.c.l.b16 %v1452
  %v1553 = vunpack.c.h.b16 %v1452
  %v1554 = vunpack.c.l.b16 %v1453
  %v1555 = vunpack.c.h.b16 %v1453
  %v1556 = vunpack.c.l.b16 %v1454
  %v1557 = vunpack.c.h.b16 %v1454
  %v1558 = vunpack.c.l.b16 %v1455
  %v1559 = vunpack.c.h.b16 %v1455
  %v1560 = vunpack.c.l.b16 %v1456
  %v1561 = vunpack.c.h.b16 %v1456
  %v1562 = vunpack.c.l.b16 %v1457
  %v1563 = vunpack.c.h.b16 %v1457
  %v1564 = vunpack.c.l.b16 %v1458
  %v1565 = vunpack.c.h.b16 %v1458
  %v1566 = vunpack.c.l.b16 %v1459
  %v1567 = vunpack.c.h.b16 %v1459
  %v1568 = vunpack.c.l.b16 %v1460
  %v1569 = vunpack.c.h.b16 %v1460
  %v1570 = vunpack.c.l.b16 %v1461
  %v1571 = vunpack.c.h.b16 %v1461
  %v1572 = vunpack.c.l.b16 %v1462
  %v1573 = vunpack.c.h.b16 %v1462
  %v1574 = vunpack.c.l.b16 %v1463
  %v1575 = vunpack.c.h.b16 %v1463
  %v1576 = vunpack.c.l.b16 %v1464
  %v1577 = vunpack.c.h.b16 %v1464
  %v1578 = vunpack.c.l.b16 %v1465
  %v1579 = vunpack.c.h.b16 %v1465
  %v1580 = vunpack.c.l.b16 %v1466
  %v1581 = vunpack.c.h.b16 %v1466
  %v1582 = vunpack.c.l.b16 %v1467
  %v1583 = vunpack.c.h.b16 %v1467
  %v1584 = vunpack.c.l.b16 %v1468
  %v1585 = vunpack.c.h.b16 %v1468
  %v1586 = vunpack.c.l.b16 %v1469
  %v1587 = vunpack.c.h.b16 %v1469
  %v1588 = vunpack.c.l.b16 %v1470
  %v1589 = vunpack.c.h.b16 %v1470
  %v1590 = vunpack.c.l.b16 %v1471
  %v1591 = vunpack.c.h.b16 %v1471
  %v1592 = vunpack.c.l.b16 %v1472
  %v1593 = vunpack.c.h.b16 %v1472
  %v1594 = vunpack.c.l.b16 %v1473
  %v1595 = vunpack.c.h.b16 %v1473
  %v1596 = vunpack.c.l.b16 %v1474
  %v1597 = vunpack.c.h.b16 %v1474
  %v1598 = vunpack.c.l.b16 %v1475
  %v1599 = vunpack.c.h.b16 %v1475
  %v1600 = vunpack.c.l.b16 %v1476
  %v1601 = vunpack.c.h.b16 %v1476
  %v1602 = vunpack.c.l.b16 %v1477
  %v1603 = vunpack.c.h.b16 %v1477
  %v1604 = vunpack.c.l.b16 %v1478
  %v1605 = vunpack.c.h.b16 %v1478
  %v1606 = vunpack.c.l.b16 %v1479
  %v1607 = vunpack.c.h.b16 %v1479
  %v1608 = vpack.c.b16 %v1546, %v1544
  %v1609 = vpack.c.b16 %v1547, %v1545
  %v1610 = vpack.c.b16 %v1550, %v1548
  %v1611 = vpack.c.b16 %v1551, %v1549
  %v1612 = vpack.c.b16 %v1554, %v1552
  %v1613 = vpack.c.b16 %v1555, %v1553
  %v1614 = vpack.c.b16 %v1558, %v1556
  %v1615 = vpack.c.b16 %v1559, %v1557
  %v1616 = vpack.c.b16 %v1562, %v1560
  %v1617 = vpack.c.b16 %v1563, %v1561
  %v1618 = vpack.c.b16 %v1566, %v1564
  %v1619 = vpack.c.b16 %v1567, %v1565
  %v1620 = vpack.c.b16 %v1570, %v1568
  %v1621 = vpack.c.b16 %v1571, %v1569
  %v1622 = vpack.c.b16 %v1574, %v1572
  %v1623 = vpack.c.b16 %v1575, %v1573
  %v1624 = vpack.c.b16 %v1578, %v1576
  %v1625 = vpack.c.b16 %v1579, %v1577
  %v1626 = vpack.c.b16 %v1582, %v1580
  %v1627 = vpack.c.b16 %v1583, %v1581
  %v1628 = vpack.c.b16 %v1586, %v1584
  %v1629 = vpack.c.b16 %v1587, %v1585
  %v1630 = vpack.c.b16 %v1590, %v1588
  %v1631 = vpack.c.b16 %v1591, %v1589
  %v1632 = vpack.c.b16 %v1594, %v1592
  %v1633 = vpack.c.b16 %v1595, %v1593
  %v1634 = vpack.c.b16 %v1598, %v1596
  %v1635 = vpack.c.b16 %v1599, %v1597
  %v1636 = vpack.c.b16 %v1602, %v1600
  %v1637 = vpack.c.b16 %v1603, %v1601
  %v1638 = vpack.c.b16 %v1606, %v1604
  %v1639 = vpack.c.b16 %v1607, %v1605
  %1672 = vmatprep.subr.bf16.mxu0 %v1609
  %1673 = vmatpush1.bf16.msra.mxu0 %v1608
  %1674 = vmatprep.subr.bf16.mxu0 %v1611
  %1675 = vmatpush1.bf16.msra.mxu0 %v1610
  %1676 = vmatprep.subr.bf16.mxu0 %v1613
  %1677 = vmatpush1.bf16.msra.mxu0 %v1612
  %1678 = vmatprep.subr.bf16.mxu0 %v1615
  %1679 = vmatpush1.bf16.msra.mxu0 %v1614
  %1680 = vmatprep.subr.bf16.mxu0 %v1617
  %1681 = vmatpush1.bf16.msra.mxu0 %v1616
  %1682 = vmatprep.subr.bf16.mxu0 %v1619
  %1683 = vmatpush1.bf16.msra.mxu0 %v1618
  %1684 = vmatprep.subr.bf16.mxu0 %v1621
  %1685 = vmatpush1.bf16.msra.mxu0 %v1620
  %1686 = vmatprep.subr.bf16.mxu0 %v1623
  %1687 = vmatpush1.bf16.msra.mxu0 %v1622
  %1688 = vmatprep.subr.bf16.mxu0 %v1625
  %1689 = vmatpush1.bf16.msra.mxu0 %v1624
  %1690 = vmatprep.subr.bf16.mxu0 %v1627
  %1691 = vmatpush1.bf16.msra.mxu0 %v1626
  %1692 = vmatprep.subr.bf16.mxu0 %v1629
  %1693 = vmatpush1.bf16.msra.mxu0 %v1628
  %1694 = vmatprep.subr.bf16.mxu0 %v1631
  %1695 = vmatpush1.bf16.msra.mxu0 %v1630
  %1696 = vmatprep.subr.bf16.mxu0 %v1633
  %1697 = vmatpush1.bf16.msra.mxu0 %v1632
  %1698 = vmatprep.subr.bf16.mxu0 %v1635
  %1699 = vmatpush1.bf16.msra.mxu0 %v1634
  %1700 = vmatprep.subr.bf16.mxu0 %v1637
  %1701 = vmatpush1.bf16.msra.mxu0 %v1636
  %1702 = vmatprep.subr.bf16.mxu0 %v1639
  %1703 = vmatpush1.bf16.msra.mxu0 %v1638
  %1704 = vmatprep.mubr.bf16.mxu0 %v1497
  %1705 = vmatmul.mubr.bf16.gmra.mrb[0].mxu0 %v1496
  %v1706 = vpop.f32.mrb[0].mxu0
  %v1707 = vadd.f32 0.0, %v1706
  %v1708 = vpop.f32.mrb[0].mxu0
  %v1709 = vadd.f32 0.0, %v1708
  %v1710 = vpop.f32.mrb[0].mxu0
  %v1711 = vadd.f32 0.0, %v1710
  %v1712 = vpop.f32.mrb[0].mxu0
  %v1713 = vadd.f32 0.0, %v1712
  %1714 = vmatprep.mubr.bf16.mxu0 %v1499
  %1715 = vmatmul.mubr.bf16.gmra.mrb[0].mxu0 %v1498
  %v1716 = vpop.f32.mrb[0].mxu0
  %v1717 = vadd.f32 0.0, %v1716
  %v1718 = vpop.f32.mrb[0].mxu0
  %v1719 = vadd.f32 0.0, %v1718
  %v1720 = vpop.f32.mrb[0].mxu0
  %v1721 = vadd.f32 0.0, %v1720
  %v1722 = vpop.f32.mrb[0].mxu0
  %v1723 = vadd.f32 0.0, %v1722
  %1724 = vmatprep.mubr.bf16.mxu0 %v1501
  %1725 = vmatmul.mubr.bf16.gmra.mrb[0].mxu0 %v1500
  %v1726 = vpop.f32.mrb[0].mxu0
  %v1727 = vadd.f32 0.0, %v1726
  %v1728 = vpop.f32.mrb[0].mxu0
  %v1729 = vadd.f32 0.0, %v1728
  %v1730 = vpop.f32.mrb[0].mxu0
  %v1731 = vadd.f32 0.0, %v1730
  %v1732 = vpop.f32.mrb[0].mxu0
  %v1733 = vadd.f32 0.0, %v1732
  %1734 = vmatprep.mubr.bf16.mxu0 %v1503
  %1735 = vmatmul.mubr.bf16.gmra.mrb[0].mxu0 %v1502
  %v1736 = vpop.f32.mrb[0].mxu0
  %v1737 = vadd.f32 0.0, %v1736
  %v1738 = vpop.f32.mrb[0].mxu0
  %v1739 = vadd.f32 0.0, %v1738
  %v1740 = vpop.f32.mrb[0].mxu0
  %v1741 = vadd.f32 0.0, %v1740
  %v1742 = vpop.f32.mrb[0].mxu0
  %v1743 = vadd.f32 0.0, %v1742
  %1744 = vdwg.mxu0
  %v1753 = vunpack.c.l.b16 %v1287
  %v1754 = vunpack.c.h.b16 %v1287
  %v1755 = vunpack.c.l.b16 %v1288
  %v1756 = vunpack.c.h.b16 %v1288
  %v1757 = vunpack.c.l.b16 %v1289
  %v1758 = vunpack.c.h.b16 %v1289
  %v1759 = vunpack.c.l.b16 %v1290
  %v1760 = vunpack.c.h.b16 %v1290
  %v1761 = vunpack.c.l.b16 %v1291
  %v1762 = vunpack.c.h.b16 %v1291
  %v1763 = vunpack.c.l.b16 %v1292
  %v1764 = vunpack.c.h.b16 %v1292
  %v1765 = vunpack.c.l.b16 %v1293
  %v1766 = vunpack.c.h.b16 %v1293
  %v1767 = vunpack.c.l.b16 %v1294
  %v1768 = vunpack.c.h.b16 %v1294
  %v1769 = vpack.c.b16 %v1755, %v1753
  %v1770 = vpack.c.b16 %v1756, %v1754
  %v1771 = vpack.c.b16 %v1759, %v1757
  %v1772 = vpack.c.b16 %v1760, %v1758
  %v1773 = vpack.c.b16 %v1763, %v1761
  %v1774 = vpack.c.b16 %v1764, %v1762
  %v1775 = vpack.c.b16 %v1767, %v1765
  %v1776 = vpack.c.b16 %v1768, %v1766
  %v1817 = vunpack.c.l.b16 %v1295
  %v1818 = vunpack.c.h.b16 %v1295
  %v1819 = vunpack.c.l.b16 %v1296
  %v1820 = vunpack.c.h.b16 %v1296
  %v1821 = vunpack.c.l.b16 %v1297
  %v1822 = vunpack.c.h.b16 %v1297
  %v1823 = vunpack.c.l.b16 %v1298
  %v1824 = vunpack.c.h.b16 %v1298
  %v1825 = vunpack.c.l.b16 %v1299
  %v1826 = vunpack.c.h.b16 %v1299
  %v1827 = vunpack.c.l.b16 %v1300
  %v1828 = vunpack.c.h.b16 %v1300
  %v1829 = vunpack.c.l.b16 %v1301
  %v1830 = vunpack.c.h.b16 %v1301
  %v1831 = vunpack.c.l.b16 %v1302
  %v1832 = vunpack.c.h.b16 %v1302
  %v1833 = vunpack.c.l.b16 %v1303
  %v1834 = vunpack.c.h.b16 %v1303
  %v1835 = vunpack.c.l.b16 %v1304
  %v1836 = vunpack.c.h.b16 %v1304
  %v1837 = vunpack.c.l.b16 %v1305
  %v1838 = vunpack.c.h.b16 %v1305
  %v1839 = vunpack.c.l.b16 %v1306
  %v1840 = vunpack.c.h.b16 %v1306
  %v1841 = vunpack.c.l.b16 %v1307
  %v1842 = vunpack.c.h.b16 %v1307
  %v1843 = vunpack.c.l.b16 %v1308
  %v1844 = vunpack.c.h.b16 %v1308
  %v1845 = vunpack.c.l.b16 %v1309
  %v1846 = vunpack.c.h.b16 %v1309
  %v1847 = vunpack.c.l.b16 %v1310
  %v1848 = vunpack.c.h.b16 %v1310
  %v1849 = vunpack.c.l.b16 %v1311
  %v1850 = vunpack.c.h.b16 %v1311
  %v1851 = vunpack.c.l.b16 %v1312
  %v1852 = vunpack.c.h.b16 %v1312
  %v1853 = vunpack.c.l.b16 %v1313
  %v1854 = vunpack.c.h.b16 %v1313
  %v1855 = vunpack.c.l.b16 %v1314
  %v1856 = vunpack.c.h.b16 %v1314
  %v1857 = vunpack.c.l.b16 %v1315
  %v1858 = vunpack.c.h.b16 %v1315
  %v1859 = vunpack.c.l.b16 %v1316
  %v1860 = vunpack.c.h.b16 %v1316
  %v1861 = vunpack.c.l.b16 %v1317
  %v1862 = vunpack.c.h.b16 %v1317
  %v1863 = vunpack.c.l.b16 %v1318
  %v1864 = vunpack.c.h.b16 %v1318
  %v1865 = vunpack.c.l.b16 %v1319
  %v1866 = vunpack.c.h.b16 %v1319
  %v1867 = vunpack.c.l.b16 %v1320
  %v1868 = vunpack.c.h.b16 %v1320
  %v1869 = vunpack.c.l.b16 %v1321
  %v1870 = vunpack.c.h.b16 %v1321
  %v1871 = vunpack.c.l.b16 %v1322
  %v1872 = vunpack.c.h.b16 %v1322
  %v1873 = vunpack.c.l.b16 %v1323
  %v1874 = vunpack.c.h.b16 %v1323
  %v1875 = vunpack.c.l.b16 %v1324
  %v1876 = vunpack.c.h.b16 %v1324
  %v1877 = vunpack.c.l.b16 %v1325
  %v1878 = vunpack.c.h.b16 %v1325
  %v1879 = vunpack.c.l.b16 %v1326
  %v1880 = vunpack.c.h.b16 %v1326
  %v1881 = vpack.c.b16 %v1819, %v1817
  %v1882 = vpack.c.b16 %v1820, %v1818
  %v1883 = vpack.c.b16 %v1823, %v1821
  %v1884 = vpack.c.b16 %v1824, %v1822
  %v1885 = vpack.c.b16 %v1827, %v1825
  %v1886 = vpack.c.b16 %v1828, %v1826
  %v1887 = vpack.c.b16 %v1831, %v1829
  %v1888 = vpack.c.b16 %v1832, %v1830
  %v1889 = vpack.c.b16 %v1835, %v1833
  %v1890 = vpack.c.b16 %v1836, %v1834
  %v1891 = vpack.c.b16 %v1839, %v1837
  %v1892 = vpack.c.b16 %v1840, %v1838
  %v1893 = vpack.c.b16 %v1843, %v1841
  %v1894 = vpack.c.b16 %v1844, %v1842
  %v1895 = vpack.c.b16 %v1847, %v1845
  %v1896 = vpack.c.b16 %v1848, %v1846
  %v1897 = vpack.c.b16 %v1851, %v1849
  %v1898 = vpack.c.b16 %v1852, %v1850
  %v1899 = vpack.c.b16 %v1855, %v1853
  %v1900 = vpack.c.b16 %v1856, %v1854
  %v1901 = vpack.c.b16 %v1859, %v1857
  %v1902 = vpack.c.b16 %v1860, %v1858
  %v1903 = vpack.c.b16 %v1863, %v1861
  %v1904 = vpack.c.b16 %v1864, %v1862
  %v1905 = vpack.c.b16 %v1867, %v1865
  %v1906 = vpack.c.b16 %v1868, %v1866
  %v1907 = vpack.c.b16 %v1871, %v1869
  %v1908 = vpack.c.b16 %v1872, %v1870
  %v1909 = vpack.c.b16 %v1875, %v1873
  %v1910 = vpack.c.b16 %v1876, %v1874
  %v1911 = vpack.c.b16 %v1879, %v1877
  %v1912 = vpack.c.b16 %v1880, %v1878
  %1945 = vmatprep.subr.bf16.mxu0 %v1882
  %1946 = vmatpush1.bf16.msra.mxu0 %v1881
  %1947 = vmatprep.subr.bf16.mxu0 %v1884
  %1948 = vmatpush1.bf16.msra.mxu0 %v1883
  %1949 = vmatprep.subr.bf16.mxu0 %v1886
  %1950 = vmatpush1.bf16.msra.mxu0 %v1885
  %1951 = vmatprep.subr.bf16.mxu0 %v1888
  %1952 = vmatpush1.bf16.msra.mxu0 %v1887
  %1953 = vmatprep.subr.bf16.mxu0 %v1890
  %1954 = vmatpush1.bf16.msra.mxu0 %v1889
  %1955 = vmatprep.subr.bf16.mxu0 %v1892
  %1956 = vmatpush1.bf16.msra.mxu0 %v1891
  %1957 = vmatprep.subr.bf16.mxu0 %v1894
  %1958 = vmatpush1.bf16.msra.mxu0 %v1893
  %1959 = vmatprep.subr.bf16.mxu0 %v1896
  %1960 = vmatpush1.bf16.msra.mxu0 %v1895
  %1961 = vmatprep.subr.bf16.mxu0 %v1898
  %1962 = vmatpush1.bf16.msra.mxu0 %v1897
  %1963 = vmatprep.subr.bf16.mxu0 %v1900
  %1964 = vmatpush1.bf16.msra.mxu0 %v1899
  %1965 = vmatprep.subr.bf16.mxu0 %v1902
  %1966 = vmatpush1.bf16.msra.mxu0 %v1901
  %1967 = vmatprep.subr.bf16.mxu0 %v1904
  %1968 = vmatpush1.bf16.msra.mxu0 %v1903
  %1969 = vmatprep.subr.bf16.mxu0 %v1906
  %1970 = vmatpush1.bf16.msra.mxu0 %v1905
  %1971 = vmatprep.subr.bf16.mxu0 %v1908
  %1972 = vmatpush1.bf16.msra.mxu0 %v1907
  %1973 = vmatprep.subr.bf16.mxu0 %v1910
  %1974 = vmatpush1.bf16.msra.mxu0 %v1909
  %1975 = vmatprep.subr.bf16.mxu0 %v1912
  %1976 = vmatpush1.bf16.msra.mxu0 %v1911
  %1977 = vmatprep.mubr.bf16.mxu0 %v1770
  %1978 = vmatmul.mubr.bf16.gmra.mrb[0].mxu0 %v1769
  %v1979 = vpop.f32.mrb[0].mxu0
  %v1980 = vadd.f32 %v1707, %v1979
  %v1981 = vpop.f32.mrb[0].mxu0
  %v1982 = vadd.f32 %v1709, %v1981
  %v1983 = vpop.f32.mrb[0].mxu0
  %v1984 = vadd.f32 %v1711, %v1983
  %v1985 = vpop.f32.mrb[0].mxu0
  %v1986 = vadd.f32 %v1713, %v1985
  %1987 = vmatprep.mubr.bf16.mxu0 %v1772
  %1988 = vmatmul.mubr.bf16.gmra.mrb[0].mxu0 %v1771
  %v1989 = vpop.f32.mrb[0].mxu0
  %v1990 = vadd.f32 %v1717, %v1989
  %v1991 = vpop.f32.mrb[0].mxu0
  %v1992 = vadd.f32 %v1719, %v1991
  %v1993 = vpop.f32.mrb[0].mxu0
  %v1994 = vadd.f32 %v1721, %v1993
  %v1995 = vpop.f32.mrb[0].mxu0
  %v1996 = vadd.f32 %v1723, %v1995
  %1997 = vmatprep.mubr.bf16.mxu0 %v1774
  %1998 = vmatmul.mubr.bf16.gmra.mrb[0].mxu0 %v1773
  %v1999 = vpop.f32.mrb[0].mxu0
  %v2000 = vadd.f32 %v1727, %v1999
  %v2001 = vpop.f32.mrb[0].mxu0
  %v2002 = vadd.f32 %v1729, %v2001
  %v2003 = vpop.f32.mrb[0].mxu0
  %v2004 = vadd.f32 %v1731, %v2003
  %v2005 = vpop.f32.mrb[0].mxu0
  %v2006 = vadd.f32 %v1733, %v2005
  %2007 = vmatprep.mubr.bf16.mxu0 %v1776
  %2008 = vmatmul.mubr.bf16.gmra.mrb[0].mxu0 %v1775
  %v2009 = vpop.f32.mrb[0].mxu0
  %v2010 = vadd.f32 %v1737, %v2009
  %v2011 = vpop.f32.mrb[0].mxu0
  %v2012 = vadd.f32 %v1739, %v2011
  %v2013 = vpop.f32.mrb[0].mxu0
  %v2014 = vadd.f32 %v1741, %v2013
  %v2015 = vpop.f32.mrb[0].mxu0
  %v2016 = vadd.f32 %v1743, %v2015
  %2017 = vdwg.mxu0
  %v2018 = vld [vmem:[#allocation3] sm:$0xee]
  %v2019 = vld [vmem:[#allocation3 + $0x10] sm:$0xee]
  %v2020 = vld [vmem:[#allocation3 + $0x20] sm:$0xee]
  %v2021 = vld [vmem:[#allocation3 + $0x30] sm:$0xee]
  %v2022 = vld [vmem:[#allocation3 + $0x40] sm:$0xee]
  %v2023 = vld [vmem:[#allocation3 + $0x50] sm:$0xee]
  %v2024 = vld [vmem:[#allocation3 + $0x60] sm:$0xee]
  %v2025 = vld [vmem:[#allocation3 + $0x70] sm:$0xee]
  %v2042 = vrot.slane %v2018, 5
  %v2043 = vrot.slane %v2042, 4
  %v2044 = vrot.slane %v1327, 5
  %v2045 = vsel %vm766, %v2043, %v2044
  %v2046 = vrot.slane %v2019, 5
  %v2047 = vrot.slane %v2046, 4
  %v2048 = vrot.slane %v1328, 5
  %v2049 = vsel %vm766, %v2047, %v2048
  %v2050 = vrot.slane %v2020, 5
  %v2051 = vrot.slane %v2050, 4
  %v2052 = vrot.slane %v1329, 5
  %v2053 = vsel %vm766, %v2051, %v2052
  %v2054 = vrot.slane %v2021, 5
  %v2055 = vrot.slane %v2054, 4
  %v2056 = vrot.slane %v1330, 5
  %v2057 = vsel %vm766, %v2055, %v2056
  %v2058 = vrot.slane %v2022, 5
  %v2059 = vrot.slane %v2058, 4
  %v2060 = vrot.slane %v1331, 5
  %v2061 = vsel %vm766, %v2059, %v2060
  %v2062 = vrot.slane %v2023, 5
  %v2063 = vrot.slane %v2062, 4
  %v2064 = vrot.slane %v1332, 5
  %v2065 = vsel %vm766, %v2063, %v2064
  %v2066 = vrot.slane %v2024, 5
  %v2067 = vrot.slane %v2066, 4
  %v2068 = vrot.slane %v1333, 5
  %v2069 = vsel %vm766, %v2067, %v2068
  %v2070 = vrot.slane %v2025, 5
  %v2071 = vrot.slane %v2070, 4
  %v2072 = vrot.slane %v1334, 5
  %v2073 = vsel %vm766, %v2071, %v2072
  %s2074 = scalar_lea.vmem %s2, 512
  %v2075 = vld [vmem:[%s2074] sm:$0xff]
  %v2076 = vld [vmem:[%s2074 + $0x8] sm:$0xff]
  %v2077 = vld [vmem:[%s2074 + $0x10] sm:$0xff]
  %v2078 = vld [vmem:[%s2074 + $0x18] sm:$0xff]
  %v2079 = vld [vmem:[%s2074 + $0x20] sm:$0xff]
  %v2080 = vld [vmem:[%s2074 + $0x28] sm:$0xff]
  %v2081 = vld [vmem:[%s2074 + $0x30] sm:$0xff]
  %v2082 = vld [vmem:[%s2074 + $0x38] sm:$0xff]
  %v2083 = vld [vmem:[%s2074 + $0x40] sm:$0xff]
  %v2084 = vld [vmem:[%s2074 + $0x48] sm:$0xff]
  %v2085 = vld [vmem:[%s2074 + $0x50] sm:$0xff]
  %v2086 = vld [vmem:[%s2074 + $0x58] sm:$0xff]
  %v2087 = vld [vmem:[%s2074 + $0x60] sm:$0xff]
  %v2088 = vld [vmem:[%s2074 + $0x68] sm:$0xff]
  %v2089 = vld [vmem:[%s2074 + $0x70] sm:$0xff]
  %v2090 = vld [vmem:[%s2074 + $0x78] sm:$0xff]
  %v2091 = vld [vmem:[%s2074 + $0x80] sm:$0xff]
  %v2092 = vld [vmem:[%s2074 + $0x88] sm:$0xff]
  %v2093 = vld [vmem:[%s2074 + $0x90] sm:$0xff]
  %v2094 = vld [vmem:[%s2074 + $0x98] sm:$0xff]
  %v2095 = vld [vmem:[%s2074 + $0xa0] sm:$0xff]
  %v2096 = vld [vmem:[%s2074 + $0xa8] sm:$0xff]
  %v2097 = vld [vmem:[%s2074 + $0xb0] sm:$0xff]
  %v2098 = vld [vmem:[%s2074 + $0xb8] sm:$0xff]
  %v2099 = vld [vmem:[%s2074 + $0xc0] sm:$0xff]
  %v2100 = vld [vmem:[%s2074 + $0xc8] sm:$0xff]
  %v2101 = vld [vmem:[%s2074 + $0xd0] sm:$0xff]
  %v2102 = vld [vmem:[%s2074 + $0xd8] sm:$0xff]
  %v2103 = vld [vmem:[%s2074 + $0xe0] sm:$0xff]
  %v2104 = vld [vmem:[%s2074 + $0xe8] sm:$0xff]
  %v2105 = vld [vmem:[%s2074 + $0xf0] sm:$0xff]
  %v2106 = vld [vmem:[%s2074 + $0xf8] sm:$0xff]
  %v2107 = vunpack.c.l.b16 %v2045
  %v2108 = vunpack.c.h.b16 %v2045
  %v2109 = vunpack.c.l.b16 %v2049
  %v2110 = vunpack.c.h.b16 %v2049
  %v2111 = vunpack.c.l.b16 %v2053
  %v2112 = vunpack.c.h.b16 %v2053
  %v2113 = vunpack.c.l.b16 %v2057
  %v2114 = vunpack.c.h.b16 %v2057
  %v2115 = vunpack.c.l.b16 %v2061
  %v2116 = vunpack.c.h.b16 %v2061
  %v2117 = vunpack.c.l.b16 %v2065
  %v2118 = vunpack.c.h.b16 %v2065
  %v2119 = vunpack.c.l.b16 %v2069
  %v2120 = vunpack.c.h.b16 %v2069
  %v2121 = vunpack.c.l.b16 %v2073
  %v2122 = vunpack.c.h.b16 %v2073
  %v2123 = vpack.c.b16 %v2109, %v2107
  %v2124 = vpack.c.b16 %v2110, %v2108
  %v2125 = vpack.c.b16 %v2113, %v2111
  %v2126 = vpack.c.b16 %v2114, %v2112
  %v2127 = vpack.c.b16 %v2117, %v2115
  %v2128 = vpack.c.b16 %v2118, %v2116
  %v2129 = vpack.c.b16 %v2121, %v2119
  %v2130 = vpack.c.b16 %v2122, %v2120
  %v2171 = vunpack.c.l.b16 %v2075
  %v2172 = vunpack.c.h.b16 %v2075
  %v2173 = vunpack.c.l.b16 %v2076
  %v2174 = vunpack.c.h.b16 %v2076
  %v2175 = vunpack.c.l.b16 %v2077
  %v2176 = vunpack.c.h.b16 %v2077
  %v2177 = vunpack.c.l.b16 %v2078
  %v2178 = vunpack.c.h.b16 %v2078
  %v2179 = vunpack.c.l.b16 %v2079
  %v2180 = vunpack.c.h.b16 %v2079
  %v2181 = vunpack.c.l.b16 %v2080
  %v2182 = vunpack.c.h.b16 %v2080
  %v2183 = vunpack.c.l.b16 %v2081
  %v2184 = vunpack.c.h.b16 %v2081
  %v2185 = vunpack.c.l.b16 %v2082
  %v2186 = vunpack.c.h.b16 %v2082
  %v2187 = vunpack.c.l.b16 %v2083
  %v2188 = vunpack.c.h.b16 %v2083
  %v2189 = vunpack.c.l.b16 %v2084
  %v2190 = vunpack.c.h.b16 %v2084
  %v2191 = vunpack.c.l.b16 %v2085
  %v2192 = vunpack.c.h.b16 %v2085
  %v2193 = vunpack.c.l.b16 %v2086
  %v2194 = vunpack.c.h.b16 %v2086
  %v2195 = vunpack.c.l.b16 %v2087
  %v2196 = vunpack.c.h.b16 %v2087
  %v2197 = vunpack.c.l.b16 %v2088
  %v2198 = vunpack.c.h.b16 %v2088
  %v2199 = vunpack.c.l.b16 %v2089
  %v2200 = vunpack.c.h.b16 %v2089
  %v2201 = vunpack.c.l.b16 %v2090
  %v2202 = vunpack.c.h.b16 %v2090
  %v2203 = vunpack.c.l.b16 %v2091
  %v2204 = vunpack.c.h.b16 %v2091
  %v2205 = vunpack.c.l.b16 %v2092
  %v2206 = vunpack.c.h.b16 %v2092
  %v2207 = vunpack.c.l.b16 %v2093
  %v2208 = vunpack.c.h.b16 %v2093
  %v2209 = vunpack.c.l.b16 %v2094
  %v2210 = vunpack.c.h.b16 %v2094
  %v2211 = vunpack.c.l.b16 %v2095
  %v2212 = vunpack.c.h.b16 %v2095
  %v2213 = vunpack.c.l.b16 %v2096
  %v2214 = vunpack.c.h.b16 %v2096
  %v2215 = vunpack.c.l.b16 %v2097
  %v2216 = vunpack.c.h.b16 %v2097
  %v2217 = vunpack.c.l.b16 %v2098
  %v2218 = vunpack.c.h.b16 %v2098
  %v2219 = vunpack.c.l.b16 %v2099
  %v2220 = vunpack.c.h.b16 %v2099
  %v2221 = vunpack.c.l.b16 %v2100
  %v2222 = vunpack.c.h.b16 %v2100
  %v2223 = vunpack.c.l.b16 %v2101
  %v2224 = vunpack.c.h.b16 %v2101
  %v2225 = vunpack.c.l.b16 %v2102
  %v2226 = vunpack.c.h.b16 %v2102
  %v2227 = vunpack.c.l.b16 %v2103
  %v2228 = vunpack.c.h.b16 %v2103
  %v2229 = vunpack.c.l.b16 %v2104
  %v2230 = vunpack.c.h.b16 %v2104
  %v2231 = vunpack.c.l.b16 %v2105
  %v2232 = vunpack.c.h.b16 %v2105
  %v2233 = vunpack.c.l.b16 %v2106
  %v2234 = vunpack.c.h.b16 %v2106
  %v2235 = vpack.c.b16 %v2173, %v2171
  %v2236 = vpack.c.b16 %v2174, %v2172
  %v2237 = vpack.c.b16 %v2177, %v2175
  %v2238 = vpack.c.b16 %v2178, %v2176
  %v2239 = vpack.c.b16 %v2181, %v2179
  %v2240 = vpack.c.b16 %v2182, %v2180
  %v2241 = vpack.c.b16 %v2185, %v2183
  %v2242 = vpack.c.b16 %v2186, %v2184
  %v2243 = vpack.c.b16 %v2189, %v2187
  %v2244 = vpack.c.b16 %v2190, %v2188
  %v2245 = vpack.c.b16 %v2193, %v2191
  %v2246 = vpack.c.b16 %v2194, %v2192
  %v2247 = vpack.c.b16 %v2197, %v2195
  %v2248 = vpack.c.b16 %v2198, %v2196
  %v2249 = vpack.c.b16 %v2201, %v2199
  %v2250 = vpack.c.b16 %v2202, %v2200
  %v2251 = vpack.c.b16 %v2205, %v2203
  %v2252 = vpack.c.b16 %v2206, %v2204
  %v2253 = vpack.c.b16 %v2209, %v2207
  %v2254 = vpack.c.b16 %v2210, %v2208
  %v2255 = vpack.c.b16 %v2213, %v2211
  %v2256 = vpack.c.b16 %v2214, %v2212
  %v2257 = vpack.c.b16 %v2217, %v2215
  %v2258 = vpack.c.b16 %v2218, %v2216
  %v2259 = vpack.c.b16 %v2221, %v2219
  %v2260 = vpack.c.b16 %v2222, %v2220
  %v2261 = vpack.c.b16 %v2225, %v2223
  %v2262 = vpack.c.b16 %v2226, %v2224
  %v2263 = vpack.c.b16 %v2229, %v2227
  %v2264 = vpack.c.b16 %v2230, %v2228
  %v2265 = vpack.c.b16 %v2233, %v2231
  %v2266 = vpack.c.b16 %v2234, %v2232
  %2299 = vmatprep.subr.bf16.mxu0 %v2236
  %2300 = vmatpush1.bf16.msra.mxu0 %v2235
  %2301 = vmatprep.subr.bf16.mxu0 %v2238
  %2302 = vmatpush1.bf16.msra.mxu0 %v2237
  %2303 = vmatprep.subr.bf16.mxu0 %v2240
  %2304 = vmatpush1.bf16.msra.mxu0 %v2239
  %2305 = vmatprep.subr.bf16.mxu0 %v2242
  %2306 = vmatpush1.bf16.msra.mxu0 %v2241
  %2307 = vmatprep.subr.bf16.mxu0 %v2244
  %2308 = vmatpush1.bf16.msra.mxu0 %v2243
  %2309 = vmatprep.subr.bf16.mxu0 %v2246
  %2310 = vmatpush1.bf16.msra.mxu0 %v2245
  %2311 = vmatprep.subr.bf16.mxu0 %v2248
  %2312 = vmatpush1.bf16.msra.mxu0 %v2247
  %2313 = vmatprep.subr.bf16.mxu0 %v2250
  %2314 = vmatpush1.bf16.msra.mxu0 %v2249
  %2315 = vmatprep.subr.bf16.mxu0 %v2252
  %2316 = vmatpush1.bf16.msra.mxu0 %v2251
  %2317 = vmatprep.subr.bf16.mxu0 %v2254
  %2318 = vmatpush1.bf16.msra.mxu0 %v2253
  %2319 = vmatprep.subr.bf16.mxu0 %v2256
  %2320 = vmatpush1.bf16.msra.mxu0 %v2255
  %2321 = vmatprep.subr.bf16.mxu0 %v2258
  %2322 = vmatpush1.bf16.msra.mxu0 %v2257
  %2323 = vmatprep.subr.bf16.mxu0 %v2260
  %2324 = vmatpush1.bf16.msra.mxu0 %v2259
  %2325 = vmatprep.subr.bf16.mxu0 %v2262
  %2326 = vmatpush1.bf16.msra.mxu0 %v2261
  %2327 = vmatprep.subr.bf16.mxu0 %v2264
  %2328 = vmatpush1.bf16.msra.mxu0 %v2263
  %2329 = vmatprep.subr.bf16.mxu0 %v2266
  %2330 = vmatpush1.bf16.msra.mxu0 %v2265
  %2331 = vmatprep.mubr.bf16.mxu0 %v2124
  %2332 = vmatmul.mubr.bf16.gmra.mrb[0].mxu0 %v2123
  %v2333 = vpop.f32.mrb[0].mxu0
  %v2334 = vadd.f32 0.0, %v2333
  %v2335 = vpop.f32.mrb[0].mxu0
  %v2336 = vadd.f32 0.0, %v2335
  %v2337 = vpop.f32.mrb[0].mxu0
  %v2338 = vadd.f32 0.0, %v2337
  %v2339 = vpop.f32.mrb[0].mxu0
  %v2340 = vadd.f32 0.0, %v2339
  %2341 = vmatprep.mubr.bf16.mxu0 %v2126
  %2342 = vmatmul.mubr.bf16.gmra.mrb[0].mxu0 %v2125
  %v2343 = vpop.f32.mrb[0].mxu0
  %v2344 = vadd.f32 0.0, %v2343
  %v2345 = vpop.f32.mrb[0].mxu0
  %v2346 = vadd.f32 0.0, %v2345
  %v2347 = vpop.f32.mrb[0].mxu0
  %v2348 = vadd.f32 0.0, %v2347
  %v2349 = vpop.f32.mrb[0].mxu0
  %v2350 = vadd.f32 0.0, %v2349
  %2351 = vmatprep.mubr.bf16.mxu0 %v2128
  %2352 = vmatmul.mubr.bf16.gmra.mrb[0].mxu0 %v2127
  %v2353 = vpop.f32.mrb[0].mxu0
  %v2354 = vadd.f32 0.0, %v2353
  %v2355 = vpop.f32.mrb[0].mxu0
  %v2356 = vadd.f32 0.0, %v2355
  %v2357 = vpop.f32.mrb[0].mxu0
  %v2358 = vadd.f32 0.0, %v2357
  %v2359 = vpop.f32.mrb[0].mxu0
  %v2360 = vadd.f32 0.0, %v2359
  %2361 = vmatprep.mubr.bf16.mxu0 %v2130
  %2362 = vmatmul.mubr.bf16.gmra.mrb[0].mxu0 %v2129
  %v2363 = vpop.f32.mrb[0].mxu0
  %v2364 = vadd.f32 0.0, %v2363
  %v2365 = vpop.f32.mrb[0].mxu0
  %v2366 = vadd.f32 0.0, %v2365
  %v2367 = vpop.f32.mrb[0].mxu0
  %v2368 = vadd.f32 0.0, %v2367
  %v2369 = vpop.f32.mrb[0].mxu0
  %v2370 = vadd.f32 0.0, %v2369
  %2371 = vdwg.mxu0
  %v2372 = vadd.f32 %v1980, %v2334
  %v2373 = vadd.f32 %v1982, %v2336
  %v2374 = vadd.f32 %v1984, %v2338
  %v2375 = vadd.f32 %v1986, %v2340
  %v2376 = vadd.f32 %v1990, %v2344
  %v2377 = vadd.f32 %v1992, %v2346
  %v2378 = vadd.f32 %v1994, %v2348
  %v2379 = vadd.f32 %v1996, %v2350
  %v2380 = vadd.f32 %v2000, %v2354
  %v2381 = vadd.f32 %v2002, %v2356
  %v2382 = vadd.f32 %v2004, %v2358
  %v2383 = vadd.f32 %v2006, %v2360
  %v2384 = vadd.f32 %v2010, %v2364
  %v2385 = vadd.f32 %v2012, %v2366
  %v2386 = vadd.f32 %v2014, %v2368
  %v2387 = vadd.f32 %v2016, %v2370
  %v2388 = vld [vmem:[%s4] sm:$0x3]
  %v2390 = vlaneseq
  %v2391 = vshrl.u32 %v2390, 7
  %v2392 = vsub.s32 0, %v2391
  %v2393 = vrot.slane %v2388, %v2392
  %v2394 = vlaneseq
  %v2395 = vshrl.u32 %v2394, 7
  %v2396 = vsub.s32 1, %v2395
  %v2397 = vrot.slane %v2388, %v2396
  %v2400 = vadd.f32 %v2372, %v2393
  %v2401 = vadd.f32 %v2373, %v2397
  %v2402 = vadd.f32 %v2374, %v2393
  %v2403 = vadd.f32 %v2375, %v2397
  %v2404 = vadd.f32 %v2376, %v2393
  %v2405 = vadd.f32 %v2377, %v2397
  %v2406 = vadd.f32 %v2378, %v2393
  %v2407 = vadd.f32 %v2379, %v2397
  %v2408 = vadd.f32 %v2380, %v2393
  %v2409 = vadd.f32 %v2381, %v2397
  %v2410 = vadd.f32 %v2382, %v2393
  %v2411 = vadd.f32 %v2383, %v2397
  %v2412 = vadd.f32 %v2384, %v2393
  %v2413 = vadd.f32 %v2385, %v2397
  %v2414 = vadd.f32 %v2386, %v2393
  %v2415 = vadd.f32 %v2387, %v2397
  %v2416 = vmax.f32 %v2400, 0.0
  %v2417 = vmax.f32 %v2401, 0.0
  %v2418 = vmax.f32 %v2402, 0.0
  %v2419 = vmax.f32 %v2403, 0.0
  %v2420 = vmax.f32 %v2404, 0.0
  %v2421 = vmax.f32 %v2405, 0.0
  %v2422 = vmax.f32 %v2406, 0.0
  %v2423 = vmax.f32 %v2407, 0.0
  %v2424 = vmax.f32 %v2408, 0.0
  %v2425 = vmax.f32 %v2409, 0.0
  %v2426 = vmax.f32 %v2410, 0.0
  %v2427 = vmax.f32 %v2411, 0.0
  %v2428 = vmax.f32 %v2412, 0.0
  %v2429 = vmax.f32 %v2413, 0.0
  %v2430 = vmax.f32 %v2414, 0.0
  %v2431 = vmax.f32 %v2415, 0.0
  %v2432 = vpack.c.bf16 %v2416, %v2416
  %v2433 = vpack.c.bf16 %v2417, %v2417
  %v2434 = vpack.c.bf16 %v2418, %v2418
  %v2435 = vpack.c.bf16 %v2419, %v2419
  %v2436 = vpack.c.bf16 %v2420, %v2420
  %v2437 = vpack.c.bf16 %v2421, %v2421
  %v2438 = vpack.c.bf16 %v2422, %v2422
  %v2439 = vpack.c.bf16 %v2423, %v2423
  %v2440 = vpack.c.bf16 %v2424, %v2424
  %v2441 = vpack.c.bf16 %v2425, %v2425
  %v2442 = vpack.c.bf16 %v2426, %v2426
  %v2443 = vpack.c.bf16 %v2427, %v2427
  %v2444 = vpack.c.bf16 %v2428, %v2428
  %v2445 = vpack.c.bf16 %v2429, %v2429
  %v2446 = vpack.c.bf16 %v2430, %v2430
  %v2447 = vpack.c.bf16 %v2431, %v2431
  %v2448 = vld [vmem:[%s5] sm:$0xf]
  %v2449 = vld [vmem:[%s5 + $0x4] sm:$0xf]
  %v2450 = vld [vmem:[%s5 + $0x8] sm:$0xf]
  %v2451 = vld [vmem:[%s5 + $0xc] sm:$0xf]
  %v2452 = vld [vmem:[%s5 + $0x10] sm:$0xf]
  %v2453 = vld [vmem:[%s5 + $0x14] sm:$0xf]
  %v2454 = vld [vmem:[%s5 + $0x18] sm:$0xf]
  %v2455 = vld [vmem:[%s5 + $0x1c] sm:$0xf]
  %v2456 = vld [vmem:[%s5 + $0x20] sm:$0xf]
  %v2457 = vld [vmem:[%s5 + $0x24] sm:$0xf]
  %v2458 = vld [vmem:[%s5 + $0x28] sm:$0xf]
  %v2459 = vld [vmem:[%s5 + $0x2c] sm:$0xf]
  %v2460 = vld [vmem:[%s5 + $0x30] sm:$0xf]
  %v2461 = vld [vmem:[%s5 + $0x34] sm:$0xf]
  %v2462 = vld [vmem:[%s5 + $0x38] sm:$0xf]
  %v2463 = vld [vmem:[%s5 + $0x3c] sm:$0xf]
  %v2464 = vld [vmem:[%s5 + $0x40] sm:$0xf]
  %v2465 = vld [vmem:[%s5 + $0x44] sm:$0xf]
  %v2466 = vld [vmem:[%s5 + $0x48] sm:$0xf]
  %v2467 = vld [vmem:[%s5 + $0x4c] sm:$0xf]
  %v2468 = vld [vmem:[%s5 + $0x50] sm:$0xf]
  %v2469 = vld [vmem:[%s5 + $0x54] sm:$0xf]
  %v2470 = vld [vmem:[%s5 + $0x58] sm:$0xf]
  %v2471 = vld [vmem:[%s5 + $0x5c] sm:$0xf]
  %v2472 = vld [vmem:[%s5 + $0x60] sm:$0xf]
  %v2473 = vld [vmem:[%s5 + $0x64] sm:$0xf]
  %v2474 = vld [vmem:[%s5 + $0x68] sm:$0xf]
  %v2475 = vld [vmem:[%s5 + $0x6c] sm:$0xf]
  %v2476 = vld [vmem:[%s5 + $0x70] sm:$0xf]
  %v2477 = vld [vmem:[%s5 + $0x74] sm:$0xf]
  %v2478 = vld [vmem:[%s5 + $0x78] sm:$0xf]
  %v2479 = vld [vmem:[%s5 + $0x7c] sm:$0xf]
  %s2480 = scalar_lea.vmem %s5, 128
  %v2481 = vld [vmem:[%s2480] sm:$0xf]
  %v2482 = vld [vmem:[%s2480 + $0x4] sm:$0xf]
  %v2483 = vld [vmem:[%s2480 + $0x8] sm:$0xf]
  %v2484 = vld [vmem:[%s2480 + $0xc] sm:$0xf]
  %v2485 = vld [vmem:[%s2480 + $0x10] sm:$0xf]
  %v2486 = vld [vmem:[%s2480 + $0x14] sm:$0xf]
  %v2487 = vld [vmem:[%s2480 + $0x18] sm:$0xf]
  %v2488 = vld [vmem:[%s2480 + $0x1c] sm:$0xf]
  %v2489 = vld [vmem:[%s2480 + $0x20] sm:$0xf]
  %v2490 = vld [vmem:[%s2480 + $0x24] sm:$0xf]
  %v2491 = vld [vmem:[%s2480 + $0x28] sm:$0xf]
  %v2492 = vld [vmem:[%s2480 + $0x2c] sm:$0xf]
  %v2493 = vld [vmem:[%s2480 + $0x30] sm:$0xf]
  %v2494 = vld [vmem:[%s2480 + $0x34] sm:$0xf]
  %v2495 = vld [vmem:[%s2480 + $0x38] sm:$0xf]
  %v2496 = vld [vmem:[%s2480 + $0x3c] sm:$0xf]
  %v2497 = vld [vmem:[%s2480 + $0x40] sm:$0xf]
  %v2498 = vld [vmem:[%s2480 + $0x44] sm:$0xf]
  %v2499 = vld [vmem:[%s2480 + $0x48] sm:$0xf]
  %v2500 = vld [vmem:[%s2480 + $0x4c] sm:$0xf]
  %v2501 = vld [vmem:[%s2480 + $0x50] sm:$0xf]
  %v2502 = vld [vmem:[%s2480 + $0x54] sm:$0xf]
  %v2503 = vld [vmem:[%s2480 + $0x58] sm:$0xf]
  %v2504 = vld [vmem:[%s2480 + $0x5c] sm:$0xf]
  %v2505 = vld [vmem:[%s2480 + $0x60] sm:$0xf]
  %v2506 = vld [vmem:[%s2480 + $0x64] sm:$0xf]
  %v2507 = vld [vmem:[%s2480 + $0x68] sm:$0xf]
  %v2508 = vld [vmem:[%s2480 + $0x6c] sm:$0xf]
  %v2509 = vld [vmem:[%s2480 + $0x70] sm:$0xf]
  %v2510 = vld [vmem:[%s2480 + $0x74] sm:$0xf]
  %v2511 = vld [vmem:[%s2480 + $0x78] sm:$0xf]
  %v2512 = vld [vmem:[%s2480 + $0x7c] sm:$0xf]
  %v2529 = vunpack.c.l.b16 %v2432
  %v2530 = vunpack.c.l.b16 %v2433
  %v2531 = vunpack.c.l.b16 %v2434
  %v2532 = vunpack.c.l.b16 %v2435
  %v2533 = vunpack.c.l.b16 %v2436
  %v2534 = vunpack.c.l.b16 %v2437
  %v2535 = vunpack.c.l.b16 %v2438
  %v2536 = vunpack.c.l.b16 %v2439
  %v2537 = vunpack.c.l.b16 %v2440
  %v2538 = vunpack.c.l.b16 %v2441
  %v2539 = vunpack.c.l.b16 %v2442
  %v2540 = vunpack.c.l.b16 %v2443
  %v2541 = vunpack.c.l.b16 %v2444
  %v2542 = vunpack.c.l.b16 %v2445
  %v2543 = vunpack.c.l.b16 %v2446
  %v2544 = vunpack.c.l.b16 %v2447
  %v2545 = vrot.slane %v2529, 1
  %vm2546 = vcmask 1041409
  %v2547 = vsel %vm2546, %v2531, %v2545
  %v2548 = vrot.slane %v2533, 7
  %vm2549 = vcmask 1042434
  %v2550 = vsel %vm2549, %v2548, %v2547
  %v2551 = vrot.slane %v2535, 6
  %vm2552 = vcmask 1043459
  %v2553 = vsel %vm2552, %v2551, %v2550
  %v2554 = vrot.slane %v2537, 5
  %vm2555 = vcmask 1044484
  %v2556 = vsel %vm2555, %v2554, %v2553
  %v2557 = vrot.slane %v2539, 4
  %vm2558 = vcmask 1045509
  %v2559 = vsel %vm2558, %v2557, %v2556
  %v2560 = vrot.slane %v2541, 3
  %vm2561 = vcmask 1046534
  %v2562 = vsel %vm2561, %v2560, %v2559
  %v2563 = vrot.slane %v2543, 2
  %vm2564 = vcmask 1047559
  %v2565 = vsel %vm2564, %v2563, %v2562
  %v2566 = vrot.slane %v2530, 1
  %v2567 = vsel %vm2546, %v2532, %v2566
  %v2568 = vrot.slane %v2534, 7
  %v2569 = vsel %vm2549, %v2568, %v2567
  %v2570 = vrot.slane %v2536, 6
  %v2571 = vsel %vm2552, %v2570, %v2569
  %v2572 = vrot.slane %v2538, 5
  %v2573 = vsel %vm2555, %v2572, %v2571
  %v2574 = vrot.slane %v2540, 4
  %v2575 = vsel %vm2558, %v2574, %v2573
  %v2576 = vrot.slane %v2542, 3
  %v2577 = vsel %vm2561, %v2576, %v2575
  %v2578 = vrot.slane %v2544, 2
  %v2579 = vsel %vm2564, %v2578, %v2577
  %v2580 = vpack.c.b16 %v2565, %v2565
  %v2581 = vpack.c.b16 %v2579, %v2579
  %v2616 = vunpack.c.l.b16 %v2481
  %v2617 = vunpack.c.l.b16 %v2482
  %v2618 = vunpack.c.l.b16 %v2483
  %v2619 = vunpack.c.l.b16 %v2484
  %v2620 = vunpack.c.l.b16 %v2485
  %v2621 = vunpack.c.l.b16 %v2486
  %v2622 = vunpack.c.l.b16 %v2487
  %v2623 = vunpack.c.l.b16 %v2488
  %v2624 = vunpack.c.l.b16 %v2489
  %v2625 = vunpack.c.l.b16 %v2490
  %v2626 = vunpack.c.l.b16 %v2491
  %v2627 = vunpack.c.l.b16 %v2492
  %v2628 = vunpack.c.l.b16 %v2493
  %v2629 = vunpack.c.l.b16 %v2494
  %v2630 = vunpack.c.l.b16 %v2495
  %v2631 = vunpack.c.l.b16 %v2496
  %v2632 = vunpack.c.l.b16 %v2497
  %v2633 = vunpack.c.l.b16 %v2498
  %v2634 = vunpack.c.l.b16 %v2499
  %v2635 = vunpack.c.l.b16 %v2500
  %v2636 = vunpack.c.l.b16 %v2501
  %v2637 = vunpack.c.l.b16 %v2502
  %v2638 = vunpack.c.l.b16 %v2503
  %v2639 = vunpack.c.l.b16 %v2504
  %v2640 = vunpack.c.l.b16 %v2505
  %v2641 = vunpack.c.l.b16 %v2506
  %v2642 = vunpack.c.l.b16 %v2507
  %v2643 = vunpack.c.l.b16 %v2508
  %v2644 = vunpack.c.l.b16 %v2509
  %v2645 = vunpack.c.l.b16 %v2510
  %v2646 = vunpack.c.l.b16 %v2511
  %v2647 = vunpack.c.l.b16 %v2512
  %v2648 = vpack.c.b16 %v2617, %v2616
  %v2649 = vpack.c.b16 %v2619, %v2618
  %v2650 = vpack.c.b16 %v2621, %v2620
  %v2651 = vpack.c.b16 %v2623, %v2622
  %v2652 = vpack.c.b16 %v2625, %v2624
  %v2653 = vpack.c.b16 %v2627, %v2626
  %v2654 = vpack.c.b16 %v2629, %v2628
  %v2655 = vpack.c.b16 %v2631, %v2630
  %v2656 = vpack.c.b16 %v2633, %v2632
  %v2657 = vpack.c.b16 %v2635, %v2634
  %v2658 = vpack.c.b16 %v2637, %v2636
  %v2659 = vpack.c.b16 %v2639, %v2638
  %v2660 = vpack.c.b16 %v2641, %v2640
  %v2661 = vpack.c.b16 %v2643, %v2642
  %v2662 = vpack.c.b16 %v2645, %v2644
  %v2663 = vpack.c.b16 %v2647, %v2646
  %2680 = vmatprep.subr.bf16.mxu0 0
  %2681 = vmatpush1.bf16.msra.mxu0 %v2648
  %2682 = vmatprep.subr.bf16.mxu0 0
  %2683 = vmatpush1.bf16.msra.mxu0 %v2649
  %2684 = vmatprep.subr.bf16.mxu0 0
  %2685 = vmatpush1.bf16.msra.mxu0 %v2650
  %2686 = vmatprep.subr.bf16.mxu0 0
  %2687 = vmatpush1.bf16.msra.mxu0 %v2651
  %2688 = vmatprep.subr.bf16.mxu0 0
  %2689 = vmatpush1.bf16.msra.mxu0 %v2652
  %2690 = vmatprep.subr.bf16.mxu0 0
  %2691 = vmatpush1.bf16.msra.mxu0 %v2653
  %2692 = vmatprep.subr.bf16.mxu0 0
  %2693 = vmatpush1.bf16.msra.mxu0 %v2654
  %2694 = vmatprep.subr.bf16.mxu0 0
  %2695 = vmatpush1.bf16.msra.mxu0 %v2655
  %2696 = vmatprep.subr.bf16.mxu0 0
  %2697 = vmatpush1.bf16.msra.mxu0 %v2656
  %2698 = vmatprep.subr.bf16.mxu0 0
  %2699 = vmatpush1.bf16.msra.mxu0 %v2657
  %2700 = vmatprep.subr.bf16.mxu0 0
  %2701 = vmatpush1.bf16.msra.mxu0 %v2658
  %2702 = vmatprep.subr.bf16.mxu0 0
  %2703 = vmatpush1.bf16.msra.mxu0 %v2659
  %2704 = vmatprep.subr.bf16.mxu0 0
  %2705 = vmatpush1.bf16.msra.mxu0 %v2660
  %2706 = vmatprep.subr.bf16.mxu0 0
  %2707 = vmatpush1.bf16.msra.mxu0 %v2661
  %2708 = vmatprep.subr.bf16.mxu0 0
  %2709 = vmatpush1.bf16.msra.mxu0 %v2662
  %2710 = vmatprep.subr.bf16.mxu0 0
  %2711 = vmatpush1.bf16.msra.mxu0 %v2663
  %2712 = vmatprep.mubr.bf16.mxu0 %v2581
  %2713 = vmatmul.mubr.bf16.gmra.mrb[0].mxu0 %v2580
  %v2714 = vpop.f32.mrb[0].mxu0
  %v2715 = vadd.f32 0.0, %v2714
  %v2716 = vpop.f32.mrb[0].mxu0
  %v2717 = vpop.f32.mrb[0].mxu0
  %v2718 = vpop.f32.mrb[0].mxu0
  %2719 = vdwg.mxu0
  %v2720 = vrot.slane %v2531, 7
  %v2721 = vsel %vm2546, %v2720, %v2529
  %v2722 = vrot.slane %v2533, 6
  %v2723 = vsel %vm2549, %v2722, %v2721
  %v2724 = vrot.slane %v2535, 5
  %v2725 = vsel %vm2552, %v2724, %v2723
  %v2726 = vrot.slane %v2537, 4
  %v2727 = vsel %vm2555, %v2726, %v2725
  %v2728 = vrot.slane %v2539, 3
  %v2729 = vsel %vm2558, %v2728, %v2727
  %v2730 = vrot.slane %v2541, 2
  %v2731 = vsel %vm2561, %v2730, %v2729
  %v2732 = vrot.slane %v2543, 1
  %v2733 = vsel %vm2564, %v2732, %v2731
  %v2734 = vrot.slane %v2532, 7
  %v2735 = vsel %vm2546, %v2734, %v2530
  %v2736 = vrot.slane %v2534, 6
  %v2737 = vsel %vm2549, %v2736, %v2735
  %v2738 = vrot.slane %v2536, 5
  %v2739 = vsel %vm2552, %v2738, %v2737
  %v2740 = vrot.slane %v2538, 4
  %v2741 = vsel %vm2555, %v2740, %v2739
  %v2742 = vrot.slane %v2540, 3
  %v2743 = vsel %vm2558, %v2742, %v2741
  %v2744 = vrot.slane %v2542, 2
  %v2745 = vsel %vm2561, %v2744, %v2743
  %v2746 = vrot.slane %v2544, 1
  %v2747 = vsel %vm2564, %v2746, %v2745
  %v2748 = vpack.c.b16 %v2733, %v2733
  %v2749 = vpack.c.b16 %v2747, %v2747
  %v2784 = vunpack.c.l.b16 %v2448
  %v2785 = vunpack.c.l.b16 %v2449
  %v2786 = vunpack.c.l.b16 %v2450
  %v2787 = vunpack.c.l.b16 %v2451
  %v2788 = vunpack.c.l.b16 %v2452
  %v2789 = vunpack.c.l.b16 %v2453
  %v2790 = vunpack.c.l.b16 %v2454
  %v2791 = vunpack.c.l.b16 %v2455
  %v2792 = vunpack.c.l.b16 %v2456
  %v2793 = vunpack.c.l.b16 %v2457
  %v2794 = vunpack.c.l.b16 %v2458
  %v2795 = vunpack.c.l.b16 %v2459
  %v2796 = vunpack.c.l.b16 %v2460
  %v2797 = vunpack.c.l.b16 %v2461
  %v2798 = vunpack.c.l.b16 %v2462
  %v2799 = vunpack.c.l.b16 %v2463
  %v2800 = vunpack.c.l.b16 %v2464
  %v2801 = vunpack.c.l.b16 %v2465
  %v2802 = vunpack.c.l.b16 %v2466
  %v2803 = vunpack.c.l.b16 %v2467
  %v2804 = vunpack.c.l.b16 %v2468
  %v2805 = vunpack.c.l.b16 %v2469
  %v2806 = vunpack.c.l.b16 %v2470
  %v2807 = vunpack.c.l.b16 %v2471
  %v2808 = vunpack.c.l.b16 %v2472
  %v2809 = vunpack.c.l.b16 %v2473
  %v2810 = vunpack.c.l.b16 %v2474
  %v2811 = vunpack.c.l.b16 %v2475
  %v2812 = vunpack.c.l.b16 %v2476
  %v2813 = vunpack.c.l.b16 %v2477
  %v2814 = vunpack.c.l.b16 %v2478
  %v2815 = vunpack.c.l.b16 %v2479
  %v2816 = vpack.c.b16 %v2785, %v2784
  %v2817 = vpack.c.b16 %v2787, %v2786
  %v2818 = vpack.c.b16 %v2789, %v2788
  %v2819 = vpack.c.b16 %v2791, %v2790
  %v2820 = vpack.c.b16 %v2793, %v2792
  %v2821 = vpack.c.b16 %v2795, %v2794
  %v2822 = vpack.c.b16 %v2797, %v2796
  %v2823 = vpack.c.b16 %v2799, %v2798
  %v2824 = vpack.c.b16 %v2801, %v2800
  %v2825 = vpack.c.b16 %v2803, %v2802
  %v2826 = vpack.c.b16 %v2805, %v2804
  %v2827 = vpack.c.b16 %v2807, %v2806
  %v2828 = vpack.c.b16 %v2809, %v2808
  %v2829 = vpack.c.b16 %v2811, %v2810
  %v2830 = vpack.c.b16 %v2813, %v2812
  %v2831 = vpack.c.b16 %v2815, %v2814
  %2848 = vmatprep.subr.bf16.mxu0 0
  %2849 = vmatpush1.bf16.msra.mxu0 %v2816
  %2850 = vmatprep.subr.bf16.mxu0 0
  %2851 = vmatpush1.bf16.msra.mxu0 %v2817
  %2852 = vmatprep.subr.bf16.mxu0 0
  %2853 = vmatpush1.bf16.msra.mxu0 %v2818
  %2854 = vmatprep.subr.bf16.mxu0 0
  %2855 = vmatpush1.bf16.msra.mxu0 %v2819
  %2856 = vmatprep.subr.bf16.mxu0 0
  %2857 = vmatpush1.bf16.msra.mxu0 %v2820
  %2858 = vmatprep.subr.bf16.mxu0 0
  %2859 = vmatpush1.bf16.msra.mxu0 %v2821
  %2860 = vmatprep.subr.bf16.mxu0 0
  %2861 = vmatpush1.bf16.msra.mxu0 %v2822
  %2862 = vmatprep.subr.bf16.mxu0 0
  %2863 = vmatpush1.bf16.msra.mxu0 %v2823
  %2864 = vmatprep.subr.bf16.mxu0 0
  %2865 = vmatpush1.bf16.msra.mxu0 %v2824
  %2866 = vmatprep.subr.bf16.mxu0 0
  %2867 = vmatpush1.bf16.msra.mxu0 %v2825
  %2868 = vmatprep.subr.bf16.mxu0 0
  %2869 = vmatpush1.bf16.msra.mxu0 %v2826
  %2870 = vmatprep.subr.bf16.mxu0 0
  %2871 = vmatpush1.bf16.msra.mxu0 %v2827
  %2872 = vmatprep.subr.bf16.mxu0 0
  %2873 = vmatpush1.bf16.msra.mxu0 %v2828
  %2874 = vmatprep.subr.bf16.mxu0 0
  %2875 = vmatpush1.bf16.msra.mxu0 %v2829
  %2876 = vmatprep.subr.bf16.mxu0 0
  %2877 = vmatpush1.bf16.msra.mxu0 %v2830
  %2878 = vmatprep.subr.bf16.mxu0 0
  %2879 = vmatpush1.bf16.msra.mxu0 %v2831
  %2880 = vmatprep.mubr.bf16.mxu0 %v2749
  %2881 = vmatmul.mubr.bf16.gmra.mrb[0].mxu0 %v2748
  %v2882 = vpop.f32.mrb[0].mxu0
  %v2883 = vadd.f32 %v2715, %v2882
  %v2884 = vpop.f32.mrb[0].mxu0
  %v2885 = vpop.f32.mrb[0].mxu0
  %v2886 = vpop.f32.mrb[0].mxu0
  %2887 = vdwg.mxu0
  %s2888 = scalar_lea.vmem %s5, 256
  %v2889 = vld [vmem:[%s2888] sm:$0xf]
  %v2890 = vld [vmem:[%s2888 + $0x4] sm:$0xf]
  %v2891 = vld [vmem:[%s2888 + $0x8] sm:$0xf]
  %v2892 = vld [vmem:[%s2888 + $0xc] sm:$0xf]
  %v2893 = vld [vmem:[%s2888 + $0x10] sm:$0xf]
  %v2894 = vld [vmem:[%s2888 + $0x14] sm:$0xf]
  %v2895 = vld [vmem:[%s2888 + $0x18] sm:$0xf]
  %v2896 = vld [vmem:[%s2888 + $0x1c] sm:$0xf]
  %v2897 = vld [vmem:[%s2888 + $0x20] sm:$0xf]
  %v2898 = vld [vmem:[%s2888 + $0x24] sm:$0xf]
  %v2899 = vld [vmem:[%s2888 + $0x28] sm:$0xf]
  %v2900 = vld [vmem:[%s2888 + $0x2c] sm:$0xf]
  %v2901 = vld [vmem:[%s2888 + $0x30] sm:$0xf]
  %v2902 = vld [vmem:[%s2888 + $0x34] sm:$0xf]
  %v2903 = vld [vmem:[%s2888 + $0x38] sm:$0xf]
  %v2904 = vld [vmem:[%s2888 + $0x3c] sm:$0xf]
  %v2905 = vld [vmem:[%s2888 + $0x40] sm:$0xf]
  %v2906 = vld [vmem:[%s2888 + $0x44] sm:$0xf]
  %v2907 = vld [vmem:[%s2888 + $0x48] sm:$0xf]
  %v2908 = vld [vmem:[%s2888 + $0x4c] sm:$0xf]
  %v2909 = vld [vmem:[%s2888 + $0x50] sm:$0xf]
  %v2910 = vld [vmem:[%s2888 + $0x54] sm:$0xf]
  %v2911 = vld [vmem:[%s2888 + $0x58] sm:$0xf]
  %v2912 = vld [vmem:[%s2888 + $0x5c] sm:$0xf]
  %v2913 = vld [vmem:[%s2888 + $0x60] sm:$0xf]
  %v2914 = vld [vmem:[%s2888 + $0x64] sm:$0xf]
  %v2915 = vld [vmem:[%s2888 + $0x68] sm:$0xf]
  %v2916 = vld [vmem:[%s2888 + $0x6c] sm:$0xf]
  %v2917 = vld [vmem:[%s2888 + $0x70] sm:$0xf]
  %v2918 = vld [vmem:[%s2888 + $0x74] sm:$0xf]
  %v2919 = vld [vmem:[%s2888 + $0x78] sm:$0xf]
  %v2920 = vld [vmem:[%s2888 + $0x7c] sm:$0xf]
  %v2921 = vrot.slane %v2529, 2
  %v2922 = vrot.slane %v2531, 1
  %v2923 = vsel %vm2546, %v2922, %v2921
  %v2924 = vsel %vm2549, %v2533, %v2923
  %v2925 = vrot.slane %v2535, 7
  %v2926 = vsel %vm2552, %v2925, %v2924
  %v2927 = vrot.slane %v2537, 6
  %v2928 = vsel %vm2555, %v2927, %v2926
  %v2929 = vrot.slane %v2539, 5
  %v2930 = vsel %vm2558, %v2929, %v2928
  %v2931 = vrot.slane %v2541, 4
  %v2932 = vsel %vm2561, %v2931, %v2930
  %v2933 = vrot.slane %v2543, 3
  %v2934 = vsel %vm2564, %v2933, %v2932
  %v2935 = vrot.slane %v2530, 2
  %v2936 = vrot.slane %v2532, 1
  %v2937 = vsel %vm2546, %v2936, %v2935
  %v2938 = vsel %vm2549, %v2534, %v2937
  %v2939 = vrot.slane %v2536, 7
  %v2940 = vsel %vm2552, %v2939, %v2938
  %v2941 = vrot.slane %v2538, 6
  %v2942 = vsel %vm2555, %v2941, %v2940
  %v2943 = vrot.slane %v2540, 5
  %v2944 = vsel %vm2558, %v2943, %v2942
  %v2945 = vrot.slane %v2542, 4
  %v2946 = vsel %vm2561, %v2945, %v2944
  %v2947 = vrot.slane %v2544, 3
  %v2948 = vsel %vm2564, %v2947, %v2946
  %v2949 = vpack.c.b16 %v2934, %v2934
  %v2950 = vpack.c.b16 %v2948, %v2948
  %v2985 = vunpack.c.l.b16 %v2889
  %v2986 = vunpack.c.l.b16 %v2890
  %v2987 = vunpack.c.l.b16 %v2891
  %v2988 = vunpack.c.l.b16 %v2892
  %v2989 = vunpack.c.l.b16 %v2893
  %v2990 = vunpack.c.l.b16 %v2894
  %v2991 = vunpack.c.l.b16 %v2895
  %v2992 = vunpack.c.l.b16 %v2896
  %v2993 = vunpack.c.l.b16 %v2897
  %v2994 = vunpack.c.l.b16 %v2898
  %v2995 = vunpack.c.l.b16 %v2899
  %v2996 = vunpack.c.l.b16 %v2900
  %v2997 = vunpack.c.l.b16 %v2901
  %v2998 = vunpack.c.l.b16 %v2902
  %v2999 = vunpack.c.l.b16 %v2903
  %v3000 = vunpack.c.l.b16 %v2904
  %v3001 = vunpack.c.l.b16 %v2905
  %v3002 = vunpack.c.l.b16 %v2906
  %v3003 = vunpack.c.l.b16 %v2907
  %v3004 = vunpack.c.l.b16 %v2908
  %v3005 = vunpack.c.l.b16 %v2909
  %v3006 = vunpack.c.l.b16 %v2910
  %v3007 = vunpack.c.l.b16 %v2911
  %v3008 = vunpack.c.l.b16 %v2912
  %v3009 = vunpack.c.l.b16 %v2913
  %v3010 = vunpack.c.l.b16 %v2914
  %v3011 = vunpack.c.l.b16 %v2915
  %v3012 = vunpack.c.l.b16 %v2916
  %v3013 = vunpack.c.l.b16 %v2917
  %v3014 = vunpack.c.l.b16 %v2918
  %v3015 = vunpack.c.l.b16 %v2919
  %v3016 = vunpack.c.l.b16 %v2920
  %v3017 = vpack.c.b16 %v2986, %v2985
  %v3018 = vpack.c.b16 %v2988, %v2987
  %v3019 = vpack.c.b16 %v2990, %v2989
  %v3020 = vpack.c.b16 %v2992, %v2991
  %v3021 = vpack.c.b16 %v2994, %v2993
  %v3022 = vpack.c.b16 %v2996, %v2995
  %v3023 = vpack.c.b16 %v2998, %v2997
  %v3024 = vpack.c.b16 %v3000, %v2999
  %v3025 = vpack.c.b16 %v3002, %v3001
  %v3026 = vpack.c.b16 %v3004, %v3003
  %v3027 = vpack.c.b16 %v3006, %v3005
  %v3028 = vpack.c.b16 %v3008, %v3007
  %v3029 = vpack.c.b16 %v3010, %v3009
  %v3030 = vpack.c.b16 %v3012, %v3011
  %v3031 = vpack.c.b16 %v3014, %v3013
  %v3032 = vpack.c.b16 %v3016, %v3015
  %3049 = vmatprep.subr.bf16.mxu0 0
  %3050 = vmatpush1.bf16.msra.mxu0 %v3017
  %3051 = vmatprep.subr.bf16.mxu0 0
  %3052 = vmatpush1.bf16.msra.mxu0 %v3018
  %3053 = vmatprep.subr.bf16.mxu0 0
  %3054 = vmatpush1.bf16.msra.mxu0 %v3019
  %3055 = vmatprep.subr.bf16.mxu0 0
  %3056 = vmatpush1.bf16.msra.mxu0 %v3020
  %3057 = vmatprep.subr.bf16.mxu0 0
  %3058 = vmatpush1.bf16.msra.mxu0 %v3021
  %3059 = vmatprep.subr.bf16.mxu0 0
  %3060 = vmatpush1.bf16.msra.mxu0 %v3022
  %3061 = vmatprep.subr.bf16.mxu0 0
  %3062 = vmatpush1.bf16.msra.mxu0 %v3023
  %3063 = vmatprep.subr.bf16.mxu0 0
  %3064 = vmatpush1.bf16.msra.mxu0 %v3024
  %3065 = vmatprep.subr.bf16.mxu0 0
  %3066 = vmatpush1.bf16.msra.mxu0 %v3025
  %3067 = vmatprep.subr.bf16.mxu0 0
  %3068 = vmatpush1.bf16.msra.mxu0 %v3026
  %3069 = vmatprep.subr.bf16.mxu0 0
  %3070 = vmatpush1.bf16.msra.mxu0 %v3027
  %3071 = vmatprep.subr.bf16.mxu0 0
  %3072 = vmatpush1.bf16.msra.mxu0 %v3028
  %3073 = vmatprep.subr.bf16.mxu0 0
  %3074 = vmatpush1.bf16.msra.mxu0 %v3029
  %3075 = vmatprep.subr.bf16.mxu0 0
  %3076 = vmatpush1.bf16.msra.mxu0 %v3030
  %3077 = vmatprep.subr.bf16.mxu0 0
  %3078 = vmatpush1.bf16.msra.mxu0 %v3031
  %3079 = vmatprep.subr.bf16.mxu0 0
  %3080 = vmatpush1.bf16.msra.mxu0 %v3032
  %3081 = vmatprep.mubr.bf16.mxu0 %v2950
  %3082 = vmatmul.mubr.bf16.gmra.mrb[0].mxu0 %v2949
  %v3083 = vpop.f32.mrb[0].mxu0
  %v3084 = vadd.f32 0.0, %v3083
  %v3085 = vpop.f32.mrb[0].mxu0
  %v3086 = vpop.f32.mrb[0].mxu0
  %v3087 = vpop.f32.mrb[0].mxu0
  %3088 = vdwg.mxu0
  %v3089 = vadd.f32 %v2883, %v3084
  %s3090 = scalar_lea.vmem %s5, 384
  %v3091 = vld [vmem:[%s3090] sm:$0xf]
  %v3092 = vld [vmem:[%s3090 + $0x4] sm:$0xf]
  %v3093 = vld [vmem:[%s3090 + $0x8] sm:$0xf]
  %v3094 = vld [vmem:[%s3090 + $0xc] sm:$0xf]
  %v3095 = vld [vmem:[%s3090 + $0x10] sm:$0xf]
  %v3096 = vld [vmem:[%s3090 + $0x14] sm:$0xf]
  %v3097 = vld [vmem:[%s3090 + $0x18] sm:$0xf]
  %v3098 = vld [vmem:[%s3090 + $0x1c] sm:$0xf]
  %v3099 = vld [vmem:[%s3090 + $0x20] sm:$0xf]
  %v3100 = vld [vmem:[%s3090 + $0x24] sm:$0xf]
  %v3101 = vld [vmem:[%s3090 + $0x28] sm:$0xf]
  %v3102 = vld [vmem:[%s3090 + $0x2c] sm:$0xf]
  %v3103 = vld [vmem:[%s3090 + $0x30] sm:$0xf]
  %v3104 = vld [vmem:[%s3090 + $0x34] sm:$0xf]
  %v3105 = vld [vmem:[%s3090 + $0x38] sm:$0xf]
  %v3106 = vld [vmem:[%s3090 + $0x3c] sm:$0xf]
  %v3107 = vld [vmem:[%s3090 + $0x40] sm:$0xf]
  %v3108 = vld [vmem:[%s3090 + $0x44] sm:$0xf]
  %v3109 = vld [vmem:[%s3090 + $0x48] sm:$0xf]
  %v3110 = vld [vmem:[%s3090 + $0x4c] sm:$0xf]
  %v3111 = vld [vmem:[%s3090 + $0x50] sm:$0xf]
  %v3112 = vld [vmem:[%s3090 + $0x54] sm:$0xf]
  %v3113 = vld [vmem:[%s3090 + $0x58] sm:$0xf]
  %v3114 = vld [vmem:[%s3090 + $0x5c] sm:$0xf]
  %v3115 = vld [vmem:[%s3090 + $0x60] sm:$0xf]
  %v3116 = vld [vmem:[%s3090 + $0x64] sm:$0xf]
  %v3117 = vld [vmem:[%s3090 + $0x68] sm:$0xf]
  %v3118 = vld [vmem:[%s3090 + $0x6c] sm:$0xf]
  %v3119 = vld [vmem:[%s3090 + $0x70] sm:$0xf]
  %v3120 = vld [vmem:[%s3090 + $0x74] sm:$0xf]
  %v3121 = vld [vmem:[%s3090 + $0x78] sm:$0xf]
  %v3122 = vld [vmem:[%s3090 + $0x7c] sm:$0xf]
  %v3123 = vrot.slane %v2529, 3
  %v3124 = vrot.slane %v2531, 2
  %v3125 = vsel %vm2546, %v3124, %v3123
  %v3126 = vrot.slane %v2533, 1
  %v3127 = vsel %vm2549, %v3126, %v3125
  %v3128 = vsel %vm2552, %v2535, %v3127
  %v3129 = vrot.slane %v2537, 7
  %v3130 = vsel %vm2555, %v3129, %v3128
  %v3131 = vrot.slane %v2539, 6
  %v3132 = vsel %vm2558, %v3131, %v3130
  %v3133 = vrot.slane %v2541, 5
  %v3134 = vsel %vm2561, %v3133, %v3132
  %v3135 = vrot.slane %v2543, 4
  %v3136 = vsel %vm2564, %v3135, %v3134
  %v3137 = vrot.slane %v2530, 3
  %v3138 = vrot.slane %v2532, 2
  %v3139 = vsel %vm2546, %v3138, %v3137
  %v3140 = vrot.slane %v2534, 1
  %v3141 = vsel %vm2549, %v3140, %v3139
  %v3142 = vsel %vm2552, %v2536, %v3141
  %v3143 = vrot.slane %v2538, 7
  %v3144 = vsel %vm2555, %v3143, %v3142
  %v3145 = vrot.slane %v2540, 6
  %v3146 = vsel %vm2558, %v3145, %v3144
  %v3147 = vrot.slane %v2542, 5
  %v3148 = vsel %vm2561, %v3147, %v3146
  %v3149 = vrot.slane %v2544, 4
  %v3150 = vsel %vm2564, %v3149, %v3148
  %v3151 = vpack.c.b16 %v3136, %v3136
  %v3152 = vpack.c.b16 %v3150, %v3150
  %v3187 = vunpack.c.l.b16 %v3091
  %v3188 = vunpack.c.l.b16 %v3092
  %v3189 = vunpack.c.l.b16 %v3093
  %v3190 = vunpack.c.l.b16 %v3094
  %v3191 = vunpack.c.l.b16 %v3095
  %v3192 = vunpack.c.l.b16 %v3096
  %v3193 = vunpack.c.l.b16 %v3097
  %v3194 = vunpack.c.l.b16 %v3098
  %v3195 = vunpack.c.l.b16 %v3099
  %v3196 = vunpack.c.l.b16 %v3100
  %v3197 = vunpack.c.l.b16 %v3101
  %v3198 = vunpack.c.l.b16 %v3102
  %v3199 = vunpack.c.l.b16 %v3103
  %v3200 = vunpack.c.l.b16 %v3104
  %v3201 = vunpack.c.l.b16 %v3105
  %v3202 = vunpack.c.l.b16 %v3106
  %v3203 = vunpack.c.l.b16 %v3107
  %v3204 = vunpack.c.l.b16 %v3108
  %v3205 = vunpack.c.l.b16 %v3109
  %v3206 = vunpack.c.l.b16 %v3110
  %v3207 = vunpack.c.l.b16 %v3111
  %v3208 = vunpack.c.l.b16 %v3112
  %v3209 = vunpack.c.l.b16 %v3113
  %v3210 = vunpack.c.l.b16 %v3114
  %v3211 = vunpack.c.l.b16 %v3115
  %v3212 = vunpack.c.l.b16 %v3116
  %v3213 = vunpack.c.l.b16 %v3117
  %v3214 = vunpack.c.l.b16 %v3118
  %v3215 = vunpack.c.l.b16 %v3119
  %v3216 = vunpack.c.l.b16 %v3120
  %v3217 = vunpack.c.l.b16 %v3121
  %v3218 = vunpack.c.l.b16 %v3122
  %v3219 = vpack.c.b16 %v3188, %v3187
  %v3220 = vpack.c.b16 %v3190, %v3189
  %v3221 = vpack.c.b16 %v3192, %v3191
  %v3222 = vpack.c.b16 %v3194, %v3193
  %v3223 = vpack.c.b16 %v3196, %v3195
  %v3224 = vpack.c.b16 %v3198, %v3197
  %v3225 = vpack.c.b16 %v3200, %v3199
  %v3226 = vpack.c.b16 %v3202, %v3201
  %v3227 = vpack.c.b16 %v3204, %v3203
  %v3228 = vpack.c.b16 %v3206, %v3205
  %v3229 = vpack.c.b16 %v3208, %v3207
  %v3230 = vpack.c.b16 %v3210, %v3209
  %v3231 = vpack.c.b16 %v3212, %v3211
  %v3232 = vpack.c.b16 %v3214, %v3213
  %v3233 = vpack.c.b16 %v3216, %v3215
  %v3234 = vpack.c.b16 %v3218, %v3217
  %3251 = vmatprep.subr.bf16.mxu0 0
  %3252 = vmatpush1.bf16.msra.mxu0 %v3219
  %3253 = vmatprep.subr.bf16.mxu0 0
  %3254 = vmatpush1.bf16.msra.mxu0 %v3220
  %3255 = vmatprep.subr.bf16.mxu0 0
  %3256 = vmatpush1.bf16.msra.mxu0 %v3221
  %3257 = vmatprep.subr.bf16.mxu0 0
  %3258 = vmatpush1.bf16.msra.mxu0 %v3222
  %3259 = vmatprep.subr.bf16.mxu0 0
  %3260 = vmatpush1.bf16.msra.mxu0 %v3223
  %3261 = vmatprep.subr.bf16.mxu0 0
  %3262 = vmatpush1.bf16.msra.mxu0 %v3224
  %3263 = vmatprep.subr.bf16.mxu0 0
  %3264 = vmatpush1.bf16.msra.mxu0 %v3225
  %3265 = vmatprep.subr.bf16.mxu0 0
  %3266 = vmatpush1.bf16.msra.mxu0 %v3226
  %3267 = vmatprep.subr.bf16.mxu0 0
  %3268 = vmatpush1.bf16.msra.mxu0 %v3227
  %3269 = vmatprep.subr.bf16.mxu0 0
  %3270 = vmatpush1.bf16.msra.mxu0 %v3228
  %3271 = vmatprep.subr.bf16.mxu0 0
  %3272 = vmatpush1.bf16.msra.mxu0 %v3229
  %3273 = vmatprep.subr.bf16.mxu0 0
  %3274 = vmatpush1.bf16.msra.mxu0 %v3230
  %3275 = vmatprep.subr.bf16.mxu0 0
  %3276 = vmatpush1.bf16.msra.mxu0 %v3231
  %3277 = vmatprep.subr.bf16.mxu0 0
  %3278 = vmatpush1.bf16.msra.mxu0 %v3232
  %3279 = vmatprep.subr.bf16.mxu0 0
  %3280 = vmatpush1.bf16.msra.mxu0 %v3233
  %3281 = vmatprep.subr.bf16.mxu0 0
  %3282 = vmatpush1.bf16.msra.mxu0 %v3234
  %3283 = vmatprep.mubr.bf16.mxu0 %v3152
  %3284 = vmatmul.mubr.bf16.gmra.mrb[0].mxu0 %v3151
  %v3285 = vpop.f32.mrb[0].mxu0
  %v3286 = vadd.f32 0.0, %v3285
  %v3287 = vpop.f32.mrb[0].mxu0
  %v3288 = vpop.f32.mrb[0].mxu0
  %v3289 = vpop.f32.mrb[0].mxu0
  %3290 = vdwg.mxu0
  %v3291 = vadd.f32 %v3089, %v3286
  %s3292 = scalar_lea.vmem %s5, 512
  %v3293 = vld [vmem:[%s3292] sm:$0xf]
  %v3294 = vld [vmem:[%s3292 + $0x4] sm:$0xf]
  %v3295 = vld [vmem:[%s3292 + $0x8] sm:$0xf]
  %v3296 = vld [vmem:[%s3292 + $0xc] sm:$0xf]
  %v3297 = vld [vmem:[%s3292 + $0x10] sm:$0xf]
  %v3298 = vld [vmem:[%s3292 + $0x14] sm:$0xf]
  %v3299 = vld [vmem:[%s3292 + $0x18] sm:$0xf]
  %v3300 = vld [vmem:[%s3292 + $0x1c] sm:$0xf]
  %v3301 = vld [vmem:[%s3292 + $0x20] sm:$0xf]
  %v3302 = vld [vmem:[%s3292 + $0x24] sm:$0xf]
  %v3303 = vld [vmem:[%s3292 + $0x28] sm:$0xf]
  %v3304 = vld [vmem:[%s3292 + $0x2c] sm:$0xf]
  %v3305 = vld [vmem:[%s3292 + $0x30] sm:$0xf]
  %v3306 = vld [vmem:[%s3292 + $0x34] sm:$0xf]
  %v3307 = vld [vmem:[%s3292 + $0x38] sm:$0xf]
  %v3308 = vld [vmem:[%s3292 + $0x3c] sm:$0xf]
  %v3309 = vld [vmem:[%s3292 + $0x40] sm:$0xf]
  %v3310 = vld [vmem:[%s3292 + $0x44] sm:$0xf]
  %v3311 = vld [vmem:[%s3292 + $0x48] sm:$0xf]
  %v3312 = vld [vmem:[%s3292 + $0x4c] sm:$0xf]
  %v3313 = vld [vmem:[%s3292 + $0x50] sm:$0xf]
  %v3314 = vld [vmem:[%s3292 + $0x54] sm:$0xf]
  %v3315 = vld [vmem:[%s3292 + $0x58] sm:$0xf]
  %v3316 = vld [vmem:[%s3292 + $0x5c] sm:$0xf]
  %v3317 = vld [vmem:[%s3292 + $0x60] sm:$0xf]
  %v3318 = vld [vmem:[%s3292 + $0x64] sm:$0xf]
  %v3319 = vld [vmem:[%s3292 + $0x68] sm:$0xf]
  %v3320 = vld [vmem:[%s3292 + $0x6c] sm:$0xf]
  %v3321 = vld [vmem:[%s3292 + $0x70] sm:$0xf]
  %v3322 = vld [vmem:[%s3292 + $0x74] sm:$0xf]
  %v3323 = vld [vmem:[%s3292 + $0x78] sm:$0xf]
  %v3324 = vld [vmem:[%s3292 + $0x7c] sm:$0xf]
  %v3325 = vrot.slane %v2529, 4
  %v3326 = vrot.slane %v2531, 3
  %v3327 = vsel %vm2546, %v3326, %v3325
  %v3328 = vrot.slane %v2533, 2
  %v3329 = vsel %vm2549, %v3328, %v3327
  %v3330 = vrot.slane %v2535, 1
  %v3331 = vsel %vm2552, %v3330, %v3329
  %v3332 = vsel %vm2555, %v2537, %v3331
  %v3333 = vrot.slane %v2539, 7
  %v3334 = vsel %vm2558, %v3333, %v3332
  %v3335 = vrot.slane %v2541, 6
  %v3336 = vsel %vm2561, %v3335, %v3334
  %v3337 = vrot.slane %v2543, 5
  %v3338 = vsel %vm2564, %v3337, %v3336
  %v3339 = vrot.slane %v2530, 4
  %v3340 = vrot.slane %v2532, 3
  %v3341 = vsel %vm2546, %v3340, %v3339
  %v3342 = vrot.slane %v2534, 2
  %v3343 = vsel %vm2549, %v3342, %v3341
  %v3344 = vrot.slane %v2536, 1
  %v3345 = vsel %vm2552, %v3344, %v3343
  %v3346 = vsel %vm2555, %v2538, %v3345
  %v3347 = vrot.slane %v2540, 7
  %v3348 = vsel %vm2558, %v3347, %v3346
  %v3349 = vrot.slane %v2542, 6
  %v3350 = vsel %vm2561, %v3349, %v3348
  %v3351 = vrot.slane %v2544, 5
  %v3352 = vsel %vm2564, %v3351, %v3350
  %v3353 = vpack.c.b16 %v3338, %v3338
  %v3354 = vpack.c.b16 %v3352, %v3352
  %v3389 = vunpack.c.l.b16 %v3293
  %v3390 = vunpack.c.l.b16 %v3294
  %v3391 = vunpack.c.l.b16 %v3295
  %v3392 = vunpack.c.l.b16 %v3296
  %v3393 = vunpack.c.l.b16 %v3297
  %v3394 = vunpack.c.l.b16 %v3298
  %v3395 = vunpack.c.l.b16 %v3299
  %v3396 = vunpack.c.l.b16 %v3300
  %v3397 = vunpack.c.l.b16 %v3301
  %v3398 = vunpack.c.l.b16 %v3302
  %v3399 = vunpack.c.l.b16 %v3303
  %v3400 = vunpack.c.l.b16 %v3304
  %v3401 = vunpack.c.l.b16 %v3305
  %v3402 = vunpack.c.l.b16 %v3306
  %v3403 = vunpack.c.l.b16 %v3307
  %v3404 = vunpack.c.l.b16 %v3308
  %v3405 = vunpack.c.l.b16 %v3309
  %v3406 = vunpack.c.l.b16 %v3310
  %v3407 = vunpack.c.l.b16 %v3311
  %v3408 = vunpack.c.l.b16 %v3312
  %v3409 = vunpack.c.l.b16 %v3313
  %v3410 = vunpack.c.l.b16 %v3314
  %v3411 = vunpack.c.l.b16 %v3315
  %v3412 = vunpack.c.l.b16 %v3316
  %v3413 = vunpack.c.l.b16 %v3317
  %v3414 = vunpack.c.l.b16 %v3318
  %v3415 = vunpack.c.l.b16 %v3319
  %v3416 = vunpack.c.l.b16 %v3320
  %v3417 = vunpack.c.l.b16 %v3321
  %v3418 = vunpack.c.l.b16 %v3322
  %v3419 = vunpack.c.l.b16 %v3323
  %v3420 = vunpack.c.l.b16 %v3324
  %v3421 = vpack.c.b16 %v3390, %v3389
  %v3422 = vpack.c.b16 %v3392, %v3391
  %v3423 = vpack.c.b16 %v3394, %v3393
  %v3424 = vpack.c.b16 %v3396, %v3395
  %v3425 = vpack.c.b16 %v3398, %v3397
  %v3426 = vpack.c.b16 %v3400, %v3399
  %v3427 = vpack.c.b16 %v3402, %v3401
  %v3428 = vpack.c.b16 %v3404, %v3403
  %v3429 = vpack.c.b16 %v3406, %v3405
  %v3430 = vpack.c.b16 %v3408, %v3407
  %v3431 = vpack.c.b16 %v3410, %v3409
  %v3432 = vpack.c.b16 %v3412, %v3411
  %v3433 = vpack.c.b16 %v3414, %v3413
  %v3434 = vpack.c.b16 %v3416, %v3415
  %v3435 = vpack.c.b16 %v3418, %v3417
  %v3436 = vpack.c.b16 %v3420, %v3419
  %3453 = vmatprep.subr.bf16.mxu0 0
  %3454 = vmatpush1.bf16.msra.mxu0 %v3421
  %3455 = vmatprep.subr.bf16.mxu0 0
  %3456 = vmatpush1.bf16.msra.mxu0 %v3422
  %3457 = vmatprep.subr.bf16.mxu0 0
  %3458 = vmatpush1.bf16.msra.mxu0 %v3423
  %3459 = vmatprep.subr.bf16.mxu0 0
  %3460 = vmatpush1.bf16.msra.mxu0 %v3424
  %3461 = vmatprep.subr.bf16.mxu0 0
  %3462 = vmatpush1.bf16.msra.mxu0 %v3425
  %3463 = vmatprep.subr.bf16.mxu0 0
  %3464 = vmatpush1.bf16.msra.mxu0 %v3426
  %3465 = vmatprep.subr.bf16.mxu0 0
  %3466 = vmatpush1.bf16.msra.mxu0 %v3427
  %3467 = vmatprep.subr.bf16.mxu0 0
  %3468 = vmatpush1.bf16.msra.mxu0 %v3428
  %3469 = vmatprep.subr.bf16.mxu0 0
  %3470 = vmatpush1.bf16.msra.mxu0 %v3429
  %3471 = vmatprep.subr.bf16.mxu0 0
  %3472 = vmatpush1.bf16.msra.mxu0 %v3430
  %3473 = vmatprep.subr.bf16.mxu0 0
  %3474 = vmatpush1.bf16.msra.mxu0 %v3431
  %3475 = vmatprep.subr.bf16.mxu0 0
  %3476 = vmatpush1.bf16.msra.mxu0 %v3432
  %3477 = vmatprep.subr.bf16.mxu0 0
  %3478 = vmatpush1.bf16.msra.mxu0 %v3433
  %3479 = vmatprep.subr.bf16.mxu0 0
  %3480 = vmatpush1.bf16.msra.mxu0 %v3434
  %3481 = vmatprep.subr.bf16.mxu0 0
  %3482 = vmatpush1.bf16.msra.mxu0 %v3435
  %3483 = vmatprep.subr.bf16.mxu0 0
  %3484 = vmatpush1.bf16.msra.mxu0 %v3436
  %3485 = vmatprep.mubr.bf16.mxu0 %v3354
  %3486 = vmatmul.mubr.bf16.gmra.mrb[0].mxu0 %v3353
  %v3487 = vpop.f32.mrb[0].mxu0
  %v3488 = vadd.f32 0.0, %v3487
  %v3489 = vpop.f32.mrb[0].mxu0
  %v3490 = vpop.f32.mrb[0].mxu0
  %v3491 = vpop.f32.mrb[0].mxu0
  %3492 = vdwg.mxu0
  %v3493 = vadd.f32 %v3291, %v3488
  %s3494 = scalar_lea.vmem %s5, 640
  %v3495 = vld [vmem:[%s3494] sm:$0xf]
  %v3496 = vld [vmem:[%s3494 + $0x4] sm:$0xf]
  %v3497 = vld [vmem:[%s3494 + $0x8] sm:$0xf]
  %v3498 = vld [vmem:[%s3494 + $0xc] sm:$0xf]
  %v3499 = vld [vmem:[%s3494 + $0x10] sm:$0xf]
  %v3500 = vld [vmem:[%s3494 + $0x14] sm:$0xf]
  %v3501 = vld [vmem:[%s3494 + $0x18] sm:$0xf]
  %v3502 = vld [vmem:[%s3494 + $0x1c] sm:$0xf]
  %v3503 = vld [vmem:[%s3494 + $0x20] sm:$0xf]
  %v3504 = vld [vmem:[%s3494 + $0x24] sm:$0xf]
  %v3505 = vld [vmem:[%s3494 + $0x28] sm:$0xf]
  %v3506 = vld [vmem:[%s3494 + $0x2c] sm:$0xf]
  %v3507 = vld [vmem:[%s3494 + $0x30] sm:$0xf]
  %v3508 = vld [vmem:[%s3494 + $0x34] sm:$0xf]
  %v3509 = vld [vmem:[%s3494 + $0x38] sm:$0xf]
  %v3510 = vld [vmem:[%s3494 + $0x3c] sm:$0xf]
  %v3511 = vld [vmem:[%s3494 + $0x40] sm:$0xf]
  %v3512 = vld [vmem:[%s3494 + $0x44] sm:$0xf]
  %v3513 = vld [vmem:[%s3494 + $0x48] sm:$0xf]
  %v3514 = vld [vmem:[%s3494 + $0x4c] sm:$0xf]
  %v3515 = vld [vmem:[%s3494 + $0x50] sm:$0xf]
  %v3516 = vld [vmem:[%s3494 + $0x54] sm:$0xf]
  %v3517 = vld [vmem:[%s3494 + $0x58] sm:$0xf]
  %v3518 = vld [vmem:[%s3494 + $0x5c] sm:$0xf]
  %v3519 = vld [vmem:[%s3494 + $0x60] sm:$0xf]
  %v3520 = vld [vmem:[%s3494 + $0x64] sm:$0xf]
  %v3521 = vld [vmem:[%s3494 + $0x68] sm:$0xf]
  %v3522 = vld [vmem:[%s3494 + $0x6c] sm:$0xf]
  %v3523 = vld [vmem:[%s3494 + $0x70] sm:$0xf]
  %v3524 = vld [vmem:[%s3494 + $0x74] sm:$0xf]
  %v3525 = vld [vmem:[%s3494 + $0x78] sm:$0xf]
  %v3526 = vld [vmem:[%s3494 + $0x7c] sm:$0xf]
  %v3527 = vrot.slane %v2529, 5
  %v3528 = vrot.slane %v2531, 4
  %v3529 = vsel %vm2546, %v3528, %v3527
  %v3530 = vrot.slane %v2533, 3
  %v3531 = vsel %vm2549, %v3530, %v3529
  %v3532 = vrot.slane %v2535, 2
  %v3533 = vsel %vm2552, %v3532, %v3531
  %v3534 = vrot.slane %v2537, 1
  %v3535 = vsel %vm2555, %v3534, %v3533
  %v3536 = vsel %vm2558, %v2539, %v3535
  %v3537 = vrot.slane %v2541, 7
  %v3538 = vsel %vm2561, %v3537, %v3536
  %v3539 = vrot.slane %v2543, 6
  %v3540 = vsel %vm2564, %v3539, %v3538
  %v3541 = vrot.slane %v2530, 5
  %v3542 = vrot.slane %v2532, 4
  %v3543 = vsel %vm2546, %v3542, %v3541
  %v3544 = vrot.slane %v2534, 3
  %v3545 = vsel %vm2549, %v3544, %v3543
  %v3546 = vrot.slane %v2536, 2
  %v3547 = vsel %vm2552, %v3546, %v3545
  %v3548 = vrot.slane %v2538, 1
  %v3549 = vsel %vm2555, %v3548, %v3547
  %v3550 = vsel %vm2558, %v2540, %v3549
  %v3551 = vrot.slane %v2542, 7
  %v3552 = vsel %vm2561, %v3551, %v3550
  %v3553 = vrot.slane %v2544, 6
  %v3554 = vsel %vm2564, %v3553, %v3552
  %v3555 = vpack.c.b16 %v3540, %v3540
  %v3556 = vpack.c.b16 %v3554, %v3554
  %v3591 = vunpack.c.l.b16 %v3495
  %v3592 = vunpack.c.l.b16 %v3496
  %v3593 = vunpack.c.l.b16 %v3497
  %v3594 = vunpack.c.l.b16 %v3498
  %v3595 = vunpack.c.l.b16 %v3499
  %v3596 = vunpack.c.l.b16 %v3500
  %v3597 = vunpack.c.l.b16 %v3501
  %v3598 = vunpack.c.l.b16 %v3502
  %v3599 = vunpack.c.l.b16 %v3503
  %v3600 = vunpack.c.l.b16 %v3504
  %v3601 = vunpack.c.l.b16 %v3505
  %v3602 = vunpack.c.l.b16 %v3506
  %v3603 = vunpack.c.l.b16 %v3507
  %v3604 = vunpack.c.l.b16 %v3508
  %v3605 = vunpack.c.l.b16 %v3509
  %v3606 = vunpack.c.l.b16 %v3510
  %v3607 = vunpack.c.l.b16 %v3511
  %v3608 = vunpack.c.l.b16 %v3512
  %v3609 = vunpack.c.l.b16 %v3513
  %v3610 = vunpack.c.l.b16 %v3514
  %v3611 = vunpack.c.l.b16 %v3515
  %v3612 = vunpack.c.l.b16 %v3516
  %v3613 = vunpack.c.l.b16 %v3517
  %v3614 = vunpack.c.l.b16 %v3518
  %v3615 = vunpack.c.l.b16 %v3519
  %v3616 = vunpack.c.l.b16 %v3520
  %v3617 = vunpack.c.l.b16 %v3521
  %v3618 = vunpack.c.l.b16 %v3522
  %v3619 = vunpack.c.l.b16 %v3523
  %v3620 = vunpack.c.l.b16 %v3524
  %v3621 = vunpack.c.l.b16 %v3525
  %v3622 = vunpack.c.l.b16 %v3526
  %v3623 = vpack.c.b16 %v3592, %v3591
  %v3624 = vpack.c.b16 %v3594, %v3593
  %v3625 = vpack.c.b16 %v3596, %v3595
  %v3626 = vpack.c.b16 %v3598, %v3597
  %v3627 = vpack.c.b16 %v3600, %v3599
  %v3628 = vpack.c.b16 %v3602, %v3601
  %v3629 = vpack.c.b16 %v3604, %v3603
  %v3630 = vpack.c.b16 %v3606, %v3605
  %v3631 = vpack.c.b16 %v3608, %v3607
  %v3632 = vpack.c.b16 %v3610, %v3609
  %v3633 = vpack.c.b16 %v3612, %v3611
  %v3634 = vpack.c.b16 %v3614, %v3613
  %v3635 = vpack.c.b16 %v3616, %v3615
  %v3636 = vpack.c.b16 %v3618, %v3617
  %v3637 = vpack.c.b16 %v3620, %v3619
  %v3638 = vpack.c.b16 %v3622, %v3621
  %3655 = vmatprep.subr.bf16.mxu0 0
  %3656 = vmatpush1.bf16.msra.mxu0 %v3623
  %3657 = vmatprep.subr.bf16.mxu0 0
  %3658 = vmatpush1.bf16.msra.mxu0 %v3624
  %3659 = vmatprep.subr.bf16.mxu0 0
  %3660 = vmatpush1.bf16.msra.mxu0 %v3625
  %3661 = vmatprep.subr.bf16.mxu0 0
  %3662 = vmatpush1.bf16.msra.mxu0 %v3626
  %3663 = vmatprep.subr.bf16.mxu0 0
  %3664 = vmatpush1.bf16.msra.mxu0 %v3627
  %3665 = vmatprep.subr.bf16.mxu0 0
  %3666 = vmatpush1.bf16.msra.mxu0 %v3628
  %3667 = vmatprep.subr.bf16.mxu0 0
  %3668 = vmatpush1.bf16.msra.mxu0 %v3629
  %3669 = vmatprep.subr.bf16.mxu0 0
  %3670 = vmatpush1.bf16.msra.mxu0 %v3630
  %3671 = vmatprep.subr.bf16.mxu0 0
  %3672 = vmatpush1.bf16.msra.mxu0 %v3631
  %3673 = vmatprep.subr.bf16.mxu0 0
  %3674 = vmatpush1.bf16.msra.mxu0 %v3632
  %3675 = vmatprep.subr.bf16.mxu0 0
  %3676 = vmatpush1.bf16.msra.mxu0 %v3633
  %3677 = vmatprep.subr.bf16.mxu0 0
  %3678 = vmatpush1.bf16.msra.mxu0 %v3634
  %3679 = vmatprep.subr.bf16.mxu0 0
  %3680 = vmatpush1.bf16.msra.mxu0 %v3635
  %3681 = vmatprep.subr.bf16.mxu0 0
  %3682 = vmatpush1.bf16.msra.mxu0 %v3636
  %3683 = vmatprep.subr.bf16.mxu0 0
  %3684 = vmatpush1.bf16.msra.mxu0 %v3637
  %3685 = vmatprep.subr.bf16.mxu0 0
  %3686 = vmatpush1.bf16.msra.mxu0 %v3638
  %3687 = vmatprep.mubr.bf16.mxu0 %v3556
  %3688 = vmatmul.mubr.bf16.gmra.mrb[0].mxu0 %v3555
  %v3689 = vpop.f32.mrb[0].mxu0
  %v3690 = vadd.f32 0.0, %v3689
  %v3691 = vpop.f32.mrb[0].mxu0
  %v3692 = vpop.f32.mrb[0].mxu0
  %v3693 = vpop.f32.mrb[0].mxu0
  %3694 = vdwg.mxu0
  %v3695 = vadd.f32 %v3493, %v3690
  %s3696 = scalar_lea.vmem %s5, 768
  %v3697 = vld [vmem:[%s3696] sm:$0xf]
  %v3698 = vld [vmem:[%s3696 + $0x4] sm:$0xf]
  %v3699 = vld [vmem:[%s3696 + $0x8] sm:$0xf]
  %v3700 = vld [vmem:[%s3696 + $0xc] sm:$0xf]
  %v3701 = vld [vmem:[%s3696 + $0x10] sm:$0xf]
  %v3702 = vld [vmem:[%s3696 + $0x14] sm:$0xf]
  %v3703 = vld [vmem:[%s3696 + $0x18] sm:$0xf]
  %v3704 = vld [vmem:[%s3696 + $0x1c] sm:$0xf]
  %v3705 = vld [vmem:[%s3696 + $0x20] sm:$0xf]
  %v3706 = vld [vmem:[%s3696 + $0x24] sm:$0xf]
  %v3707 = vld [vmem:[%s3696 + $0x28] sm:$0xf]
  %v3708 = vld [vmem:[%s3696 + $0x2c] sm:$0xf]
  %v3709 = vld [vmem:[%s3696 + $0x30] sm:$0xf]
  %v3710 = vld [vmem:[%s3696 + $0x34] sm:$0xf]
  %v3711 = vld [vmem:[%s3696 + $0x38] sm:$0xf]
  %v3712 = vld [vmem:[%s3696 + $0x3c] sm:$0xf]
  %v3713 = vld [vmem:[%s3696 + $0x40] sm:$0xf]
  %v3714 = vld [vmem:[%s3696 + $0x44] sm:$0xf]
  %v3715 = vld [vmem:[%s3696 + $0x48] sm:$0xf]
  %v3716 = vld [vmem:[%s3696 + $0x4c] sm:$0xf]
  %v3717 = vld [vmem:[%s3696 + $0x50] sm:$0xf]
  %v3718 = vld [vmem:[%s3696 + $0x54] sm:$0xf]
  %v3719 = vld [vmem:[%s3696 + $0x58] sm:$0xf]
  %v3720 = vld [vmem:[%s3696 + $0x5c] sm:$0xf]
  %v3721 = vld [vmem:[%s3696 + $0x60] sm:$0xf]
  %v3722 = vld [vmem:[%s3696 + $0x64] sm:$0xf]
  %v3723 = vld [vmem:[%s3696 + $0x68] sm:$0xf]
  %v3724 = vld [vmem:[%s3696 + $0x6c] sm:$0xf]
  %v3725 = vld [vmem:[%s3696 + $0x70] sm:$0xf]
  %v3726 = vld [vmem:[%s3696 + $0x74] sm:$0xf]
  %v3727 = vld [vmem:[%s3696 + $0x78] sm:$0xf]
  %v3728 = vld [vmem:[%s3696 + $0x7c] sm:$0xf]
  %v3729 = vrot.slane %v2529, 6
  %v3730 = vrot.slane %v2531, 5
  %v3731 = vsel %vm2546, %v3730, %v3729
  %v3732 = vrot.slane %v2533, 4
  %v3733 = vsel %vm2549, %v3732, %v3731
  %v3734 = vrot.slane %v2535, 3
  %v3735 = vsel %vm2552, %v3734, %v3733
  %v3736 = vrot.slane %v2537, 2
  %v3737 = vsel %vm2555, %v3736, %v3735
  %v3738 = vrot.slane %v2539, 1
  %v3739 = vsel %vm2558, %v3738, %v3737
  %v3740 = vsel %vm2561, %v2541, %v3739
  %v3741 = vrot.slane %v2543, 7
  %v3742 = vsel %vm2564, %v3741, %v3740
  %v3743 = vrot.slane %v2530, 6
  %v3744 = vrot.slane %v2532, 5
  %v3745 = vsel %vm2546, %v3744, %v3743
  %v3746 = vrot.slane %v2534, 4
  %v3747 = vsel %vm2549, %v3746, %v3745
  %v3748 = vrot.slane %v2536, 3
  %v3749 = vsel %vm2552, %v3748, %v3747
  %v3750 = vrot.slane %v2538, 2
  %v3751 = vsel %vm2555, %v3750, %v3749
  %v3752 = vrot.slane %v2540, 1
  %v3753 = vsel %vm2558, %v3752, %v3751
  %v3754 = vsel %vm2561, %v2542, %v3753
  %v3755 = vrot.slane %v2544, 7
  %v3756 = vsel %vm2564, %v3755, %v3754
  %v3757 = vpack.c.b16 %v3742, %v3742
  %v3758 = vpack.c.b16 %v3756, %v3756
  %v3793 = vunpack.c.l.b16 %v3697
  %v3794 = vunpack.c.l.b16 %v3698
  %v3795 = vunpack.c.l.b16 %v3699
  %v3796 = vunpack.c.l.b16 %v3700
  %v3797 = vunpack.c.l.b16 %v3701
  %v3798 = vunpack.c.l.b16 %v3702
  %v3799 = vunpack.c.l.b16 %v3703
  %v3800 = vunpack.c.l.b16 %v3704
  %v3801 = vunpack.c.l.b16 %v3705
  %v3802 = vunpack.c.l.b16 %v3706
  %v3803 = vunpack.c.l.b16 %v3707
  %v3804 = vunpack.c.l.b16 %v3708
  %v3805 = vunpack.c.l.b16 %v3709
  %v3806 = vunpack.c.l.b16 %v3710
  %v3807 = vunpack.c.l.b16 %v3711
  %v3808 = vunpack.c.l.b16 %v3712
  %v3809 = vunpack.c.l.b16 %v3713
  %v3810 = vunpack.c.l.b16 %v3714
  %v3811 = vunpack.c.l.b16 %v3715
  %v3812 = vunpack.c.l.b16 %v3716
  %v3813 = vunpack.c.l.b16 %v3717
  %v3814 = vunpack.c.l.b16 %v3718
  %v3815 = vunpack.c.l.b16 %v3719
  %v3816 = vunpack.c.l.b16 %v3720
  %v3817 = vunpack.c.l.b16 %v3721
  %v3818 = vunpack.c.l.b16 %v3722
  %v3819 = vunpack.c.l.b16 %v3723
  %v3820 = vunpack.c.l.b16 %v3724
  %v3821 = vunpack.c.l.b16 %v3725
  %v3822 = vunpack.c.l.b16 %v3726
  %v3823 = vunpack.c.l.b16 %v3727
  %v3824 = vunpack.c.l.b16 %v3728
  %v3825 = vpack.c.b16 %v3794, %v3793
  %v3826 = vpack.c.b16 %v3796, %v3795
  %v3827 = vpack.c.b16 %v3798, %v3797
  %v3828 = vpack.c.b16 %v3800, %v3799
  %v3829 = vpack.c.b16 %v3802, %v3801
  %v3830 = vpack.c.b16 %v3804, %v3803
  %v3831 = vpack.c.b16 %v3806, %v3805
  %v3832 = vpack.c.b16 %v3808, %v3807
  %v3833 = vpack.c.b16 %v3810, %v3809
  %v3834 = vpack.c.b16 %v3812, %v3811
  %v3835 = vpack.c.b16 %v3814, %v3813
  %v3836 = vpack.c.b16 %v3816, %v3815
  %v3837 = vpack.c.b16 %v3818, %v3817
  %v3838 = vpack.c.b16 %v3820, %v3819
  %v3839 = vpack.c.b16 %v3822, %v3821
  %v3840 = vpack.c.b16 %v3824, %v3823
  %3857 = vmatprep.subr.bf16.mxu0 0
  %3858 = vmatpush1.bf16.msra.mxu0 %v3825
  %3859 = vmatprep.subr.bf16.mxu0 0
  %3860 = vmatpush1.bf16.msra.mxu0 %v3826
  %3861 = vmatprep.subr.bf16.mxu0 0
  %3862 = vmatpush1.bf16.msra.mxu0 %v3827
  %3863 = vmatprep.subr.bf16.mxu0 0
  %3864 = vmatpush1.bf16.msra.mxu0 %v3828
  %3865 = vmatprep.subr.bf16.mxu0 0
  %3866 = vmatpush1.bf16.msra.mxu0 %v3829
  %3867 = vmatprep.subr.bf16.mxu0 0
  %3868 = vmatpush1.bf16.msra.mxu0 %v3830
  %3869 = vmatprep.subr.bf16.mxu0 0
  %3870 = vmatpush1.bf16.msra.mxu0 %v3831
  %3871 = vmatprep.subr.bf16.mxu0 0
  %3872 = vmatpush1.bf16.msra.mxu0 %v3832
  %3873 = vmatprep.subr.bf16.mxu0 0
  %3874 = vmatpush1.bf16.msra.mxu0 %v3833
  %3875 = vmatprep.subr.bf16.mxu0 0
  %3876 = vmatpush1.bf16.msra.mxu0 %v3834
  %3877 = vmatprep.subr.bf16.mxu0 0
  %3878 = vmatpush1.bf16.msra.mxu0 %v3835
  %3879 = vmatprep.subr.bf16.mxu0 0
  %3880 = vmatpush1.bf16.msra.mxu0 %v3836
  %3881 = vmatprep.subr.bf16.mxu0 0
  %3882 = vmatpush1.bf16.msra.mxu0 %v3837
  %3883 = vmatprep.subr.bf16.mxu0 0
  %3884 = vmatpush1.bf16.msra.mxu0 %v3838
  %3885 = vmatprep.subr.bf16.mxu0 0
  %3886 = vmatpush1.bf16.msra.mxu0 %v3839
  %3887 = vmatprep.subr.bf16.mxu0 0
  %3888 = vmatpush1.bf16.msra.mxu0 %v3840
  %3889 = vmatprep.mubr.bf16.mxu0 %v3758
  %3890 = vmatmul.mubr.bf16.gmra.mrb[0].mxu0 %v3757
  %v3891 = vpop.f32.mrb[0].mxu0
  %v3892 = vadd.f32 0.0, %v3891
  %v3893 = vpop.f32.mrb[0].mxu0
  %v3894 = vpop.f32.mrb[0].mxu0
  %v3895 = vpop.f32.mrb[0].mxu0
  %3896 = vdwg.mxu0
  %v3897 = vadd.f32 %v3695, %v3892
  %s3898 = scalar_lea.vmem %s5, 896
  %v3899 = vld [vmem:[%s3898] sm:$0xf]
  %v3900 = vld [vmem:[%s3898 + $0x4] sm:$0xf]
  %v3901 = vld [vmem:[%s3898 + $0x8] sm:$0xf]
  %v3902 = vld [vmem:[%s3898 + $0xc] sm:$0xf]
  %v3903 = vld [vmem:[%s3898 + $0x10] sm:$0xf]
  %v3904 = vld [vmem:[%s3898 + $0x14] sm:$0xf]
  %v3905 = vld [vmem:[%s3898 + $0x18] sm:$0xf]
  %v3906 = vld [vmem:[%s3898 + $0x1c] sm:$0xf]
  %v3907 = vld [vmem:[%s3898 + $0x20] sm:$0xf]
  %v3908 = vld [vmem:[%s3898 + $0x24] sm:$0xf]
  %v3909 = vld [vmem:[%s3898 + $0x28] sm:$0xf]
  %v3910 = vld [vmem:[%s3898 + $0x2c] sm:$0xf]
  %v3911 = vld [vmem:[%s3898 + $0x30] sm:$0xf]
  %v3912 = vld [vmem:[%s3898 + $0x34] sm:$0xf]
  %v3913 = vld [vmem:[%s3898 + $0x38] sm:$0xf]
  %v3914 = vld [vmem:[%s3898 + $0x3c] sm:$0xf]
  %v3915 = vld [vmem:[%s3898 + $0x40] sm:$0xf]
  %v3916 = vld [vmem:[%s3898 + $0x44] sm:$0xf]
  %v3917 = vld [vmem:[%s3898 + $0x48] sm:$0xf]
  %v3918 = vld [vmem:[%s3898 + $0x4c] sm:$0xf]
  %v3919 = vld [vmem:[%s3898 + $0x50] sm:$0xf]
  %v3920 = vld [vmem:[%s3898 + $0x54] sm:$0xf]
  %v3921 = vld [vmem:[%s3898 + $0x58] sm:$0xf]
  %v3922 = vld [vmem:[%s3898 + $0x5c] sm:$0xf]
  %v3923 = vld [vmem:[%s3898 + $0x60] sm:$0xf]
  %v3924 = vld [vmem:[%s3898 + $0x64] sm:$0xf]
  %v3925 = vld [vmem:[%s3898 + $0x68] sm:$0xf]
  %v3926 = vld [vmem:[%s3898 + $0x6c] sm:$0xf]
  %v3927 = vld [vmem:[%s3898 + $0x70] sm:$0xf]
  %v3928 = vld [vmem:[%s3898 + $0x74] sm:$0xf]
  %v3929 = vld [vmem:[%s3898 + $0x78] sm:$0xf]
  %v3930 = vld [vmem:[%s3898 + $0x7c] sm:$0xf]
  %v3931 = vrot.slane %v2529, 7
  %v3932 = vrot.slane %v2531, 6
  %v3933 = vsel %vm2546, %v3932, %v3931
  %v3934 = vrot.slane %v2533, 5
  %v3935 = vsel %vm2549, %v3934, %v3933
  %v3936 = vrot.slane %v2535, 4
  %v3937 = vsel %vm2552, %v3936, %v3935
  %v3938 = vrot.slane %v2537, 3
  %v3939 = vsel %vm2555, %v3938, %v3937
  %v3940 = vrot.slane %v2539, 2
  %v3941 = vsel %vm2558, %v3940, %v3939
  %v3942 = vrot.slane %v2541, 1
  %v3943 = vsel %vm2561, %v3942, %v3941
  %v3944 = vsel %vm2564, %v2543, %v3943
  %v3945 = vrot.slane %v2530, 7
  %v3946 = vrot.slane %v2532, 6
  %v3947 = vsel %vm2546, %v3946, %v3945
  %v3948 = vrot.slane %v2534, 5
  %v3949 = vsel %vm2549, %v3948, %v3947
  %v3950 = vrot.slane %v2536, 4
  %v3951 = vsel %vm2552, %v3950, %v3949
  %v3952 = vrot.slane %v2538, 3
  %v3953 = vsel %vm2555, %v3952, %v3951
  %v3954 = vrot.slane %v2540, 2
  %v3955 = vsel %vm2558, %v3954, %v3953
  %v3956 = vrot.slane %v2542, 1
  %v3957 = vsel %vm2561, %v3956, %v3955
  %v3958 = vsel %vm2564, %v2544, %v3957
  %v3959 = vpack.c.b16 %v3944, %v3944
  %v3960 = vpack.c.b16 %v3958, %v3958
  %v3995 = vunpack.c.l.b16 %v3899
  %v3996 = vunpack.c.l.b16 %v3900
  %v3997 = vunpack.c.l.b16 %v3901
  %v3998 = vunpack.c.l.b16 %v3902
  %v3999 = vunpack.c.l.b16 %v3903
  %v4000 = vunpack.c.l.b16 %v3904
  %v4001 = vunpack.c.l.b16 %v3905
  %v4002 = vunpack.c.l.b16 %v3906
  %v4003 = vunpack.c.l.b16 %v3907
  %v4004 = vunpack.c.l.b16 %v3908
  %v4005 = vunpack.c.l.b16 %v3909
  %v4006 = vunpack.c.l.b16 %v3910
  %v4007 = vunpack.c.l.b16 %v3911
  %v4008 = vunpack.c.l.b16 %v3912
  %v4009 = vunpack.c.l.b16 %v3913
  %v4010 = vunpack.c.l.b16 %v3914
  %v4011 = vunpack.c.l.b16 %v3915
  %v4012 = vunpack.c.l.b16 %v3916
  %v4013 = vunpack.c.l.b16 %v3917
  %v4014 = vunpack.c.l.b16 %v3918
  %v4015 = vunpack.c.l.b16 %v3919
  %v4016 = vunpack.c.l.b16 %v3920
  %v4017 = vunpack.c.l.b16 %v3921
  %v4018 = vunpack.c.l.b16 %v3922
  %v4019 = vunpack.c.l.b16 %v3923
  %v4020 = vunpack.c.l.b16 %v3924
  %v4021 = vunpack.c.l.b16 %v3925
  %v4022 = vunpack.c.l.b16 %v3926
  %v4023 = vunpack.c.l.b16 %v3927
  %v4024 = vunpack.c.l.b16 %v3928
  %v4025 = vunpack.c.l.b16 %v3929
  %v4026 = vunpack.c.l.b16 %v3930
  %v4027 = vpack.c.b16 %v3996, %v3995
  %v4028 = vpack.c.b16 %v3998, %v3997
  %v4029 = vpack.c.b16 %v4000, %v3999
  %v4030 = vpack.c.b16 %v4002, %v4001
  %v4031 = vpack.c.b16 %v4004, %v4003
  %v4032 = vpack.c.b16 %v4006, %v4005
  %v4033 = vpack.c.b16 %v4008, %v4007
  %v4034 = vpack.c.b16 %v4010, %v4009
  %v4035 = vpack.c.b16 %v4012, %v4011
  %v4036 = vpack.c.b16 %v4014, %v4013
  %v4037 = vpack.c.b16 %v4016, %v4015
  %v4038 = vpack.c.b16 %v4018, %v4017
  %v4039 = vpack.c.b16 %v4020, %v4019
  %v4040 = vpack.c.b16 %v4022, %v4021
  %v4041 = vpack.c.b16 %v4024, %v4023
  %v4042 = vpack.c.b16 %v4026, %v4025
  %4059 = vmatprep.subr.bf16.mxu0 0
  %4060 = vmatpush1.bf16.msra.mxu0 %v4027
  %4061 = vmatprep.subr.bf16.mxu0 0
  %4062 = vmatpush1.bf16.msra.mxu0 %v4028
  %4063 = vmatprep.subr.bf16.mxu0 0
  %4064 = vmatpush1.bf16.msra.mxu0 %v4029
  %4065 = vmatprep.subr.bf16.mxu0 0
  %4066 = vmatpush1.bf16.msra.mxu0 %v4030
  %4067 = vmatprep.subr.bf16.mxu0 0
  %4068 = vmatpush1.bf16.msra.mxu0 %v4031
  %4069 = vmatprep.subr.bf16.mxu0 0
  %4070 = vmatpush1.bf16.msra.mxu0 %v4032
  %4071 = vmatprep.subr.bf16.mxu0 0
  %4072 = vmatpush1.bf16.msra.mxu0 %v4033
  %4073 = vmatprep.subr.bf16.mxu0 0
  %4074 = vmatpush1.bf16.msra.mxu0 %v4034
  %4075 = vmatprep.subr.bf16.mxu0 0
  %4076 = vmatpush1.bf16.msra.mxu0 %v4035
  %4077 = vmatprep.subr.bf16.mxu0 0
  %4078 = vmatpush1.bf16.msra.mxu0 %v4036
  %4079 = vmatprep.subr.bf16.mxu0 0
  %4080 = vmatpush1.bf16.msra.mxu0 %v4037
  %4081 = vmatprep.subr.bf16.mxu0 0
  %4082 = vmatpush1.bf16.msra.mxu0 %v4038
  %4083 = vmatprep.subr.bf16.mxu0 0
  %4084 = vmatpush1.bf16.msra.mxu0 %v4039
  %4085 = vmatprep.subr.bf16.mxu0 0
  %4086 = vmatpush1.bf16.msra.mxu0 %v4040
  %4087 = vmatprep.subr.bf16.mxu0 0
  %4088 = vmatpush1.bf16.msra.mxu0 %v4041
  %4089 = vmatprep.subr.bf16.mxu0 0
  %4090 = vmatpush1.bf16.msra.mxu0 %v4042
  %4091 = vmatprep.mubr.bf16.mxu0 %v3960
  %4092 = vmatmul.mubr.bf16.gmra.mrb[0].mxu0 %v3959
  %v4093 = vpop.f32.mrb[0].mxu0
  %v4094 = vadd.f32 0.0, %v4093
  %v4095 = vpop.f32.mrb[0].mxu0
  %v4096 = vpop.f32.mrb[0].mxu0
  %v4097 = vpop.f32.mrb[0].mxu0
  %4098 = vdwg.mxu0
  %v4099 = vadd.f32 %v3897, %v4094
  %v4100 = vld [vmem:[%s7] sm:$0x1]
  %v4102 = vlaneseq
  %v4103 = vshrl.u32 %v4102, 7
  %v4104 = vsub.s32 0, %v4103
  %v4105 = vrot.slane %v4100, %v4104
  %v4107 = vadd.f32 %v4099, %v4105
  %v4108 = vmax.f32 %v4107, 0.0
  %v4109 = vpack.c.bf16 %v4108, %v4108
  %v4110 = vld [vmem:[%s6] sm:$0xf]
  %v4111 = vld [vmem:[%s6 + $0x4] sm:$0xf]
  %v4112 = vld [vmem:[%s6 + $0x8] sm:$0xf]
  %v4113 = vld [vmem:[%s6 + $0xc] sm:$0xf]
  %v4114 = vld [vmem:[%s6 + $0x10] sm:$0xf]
  %v4115 = vld [vmem:[%s6 + $0x14] sm:$0xf]
  %v4116 = vld [vmem:[%s6 + $0x18] sm:$0xf]
  %v4117 = vld [vmem:[%s6 + $0x1c] sm:$0xf]
  %v4118 = vld [vmem:[%s8] sm:$0x1]
  %v4120 = vlaneseq
  %v4121 = vshrl.u32 %v4120, 7
  %v4122 = vsub.s32 0, %v4121
  %v4123 = vrot.slane %v4118, %v4122
  %v4133 = vunpack.c.l.b16 %v4110
  %v4134 = vunpack.c.l.b16 %v4111
  %v4135 = vunpack.c.l.b16 %v4112
  %v4136 = vunpack.c.l.b16 %v4113
  %v4137 = vunpack.c.l.b16 %v4114
  %v4138 = vunpack.c.l.b16 %v4115
  %v4139 = vunpack.c.l.b16 %v4116
  %v4140 = vunpack.c.l.b16 %v4117
  %v4141 = vpack.c.b16 %v4134, %v4133
  %v4142 = vpack.c.b16 %v4136, %v4135
  %v4143 = vpack.c.b16 %v4138, %v4137
  %v4144 = vpack.c.b16 %v4140, %v4139
  %vm4149 = vcmask 523264
  %v4151 = vsel %vm4149, %v4109, 0
  %4153 = vmatprep.subr.bf16.mxu0 0
  %4154 = vmatpush1.bf16.msra.mxu0 %v4141
  %4155 = vmatprep.subr.bf16.mxu0 0
  %4156 = vmatpush1.bf16.msra.mxu0 %v4142
  %4157 = vmatprep.subr.bf16.mxu0 0
  %4158 = vmatpush1.bf16.msra.mxu0 %v4143
  %4159 = vmatprep.subr.bf16.mxu0 0
  %4160 = vmatpush1.bf16.msra.mxu0 %v4144
  %4161 = vmatprep.subr.bf16.mxu0 0
  %4162 = vmatpush1.bf16.msra.mxu0 0
  %4163 = vmatprep.subr.bf16.mxu0 0
  %4164 = vmatpush1.bf16.msra.mxu0 0
  %4165 = vmatprep.subr.bf16.mxu0 0
  %4166 = vmatpush1.bf16.msra.mxu0 0
  %4167 = vmatprep.subr.bf16.mxu0 0
  %4168 = vmatpush1.bf16.msra.mxu0 0
  %4169 = vmatprep.subr.bf16.mxu0 0
  %4170 = vmatpush1.bf16.msra.mxu0 0
  %4171 = vmatprep.subr.bf16.mxu0 0
  %4172 = vmatpush1.bf16.msra.mxu0 0
  %4173 = vmatprep.subr.bf16.mxu0 0
  %4174 = vmatpush1.bf16.msra.mxu0 0
  %4175 = vmatprep.subr.bf16.mxu0 0
  %4176 = vmatpush1.bf16.msra.mxu0 0
  %4177 = vmatprep.subr.bf16.mxu0 0
  %4178 = vmatpush1.bf16.msra.mxu0 0
  %4179 = vmatprep.subr.bf16.mxu0 0
  %4180 = vmatpush1.bf16.msra.mxu0 0
  %4181 = vmatprep.subr.bf16.mxu0 0
  %4182 = vmatpush1.bf16.msra.mxu0 0
  %4183 = vmatprep.subr.bf16.mxu0 0
  %4184 = vmatpush1.bf16.msra.mxu0 0
  %4185 = vmatprep.mubr.bf16.mxu0 0
  %4186 = vmatmul.mubr.bf16.gmra.mrb[0].mxu0 %v4151
  %v4187 = vpop.f32.mrb[0].mxu0
  %v4188 = vadd.f32 %v4123, %v4187
  %v4189 = vpop.f32.mrb[0].mxu0
  %v4190 = vpop.f32.mrb[0].mxu0
  %v4191 = vpop.f32.mrb[0].mxu0
  %4192 = vdwg.mxu0
  %v4193 = vmax.f32 %v4188, 0.0
  %v4194 = vpack.c.bf16 %v4193, %v4193
  %v4195 = vld [vmem:[%s9] sm:$0xf]
  %v4196 = vld [vmem:[%s9 + $0x4] sm:$0xf]
  %v4197 = vld [vmem:[%s9 + $0x8] sm:$0xf]
  %v4198 = vld [vmem:[%s9 + $0xc] sm:$0xf]
  %v4199 = vld [vmem:[%s9 + $0x10] sm:$0xf]
  %v4200 = vld [vmem:[%s9 + $0x14] sm:$0xf]
  %v4201 = vld [vmem:[%s9 + $0x18] sm:$0xf]
  %v4202 = vld [vmem:[%s9 + $0x1c] sm:$0xf]
  %v4203 = vld [vmem:[%s10] sm:$0x1]
  %v4205 = vlaneseq
  %v4206 = vshrl.u32 %v4205, 7
  %v4207 = vsub.s32 0, %v4206
  %v4208 = vrot.slane %v4203, %v4207
  %v4218 = vunpack.c.l.b16 %v4195
  %v4219 = vunpack.c.l.b16 %v4196
  %v4220 = vunpack.c.l.b16 %v4197
  %v4221 = vunpack.c.l.b16 %v4198
  %v4222 = vunpack.c.l.b16 %v4199
  %v4223 = vunpack.c.l.b16 %v4200
  %v4224 = vunpack.c.l.b16 %v4201
  %v4225 = vunpack.c.l.b16 %v4202
  %v4226 = vpack.c.b16 %v4219, %v4218
  %v4227 = vpack.c.b16 %v4221, %v4220
  %v4228 = vpack.c.b16 %v4223, %v4222
  %v4229 = vpack.c.b16 %v4225, %v4224
  %v4235 = vsel %vm4149, %v4194, 0
  %4237 = vmatprep.subr.bf16.mxu0 0
  %4238 = vmatpush1.bf16.msra.mxu0 %v4226
  %4239 = vmatprep.subr.bf16.mxu0 0
  %4240 = vmatpush1.bf16.msra.mxu0 %v4227
  %4241 = vmatprep.subr.bf16.mxu0 0
  %4242 = vmatpush1.bf16.msra.mxu0 %v4228
  %4243 = vmatprep.subr.bf16.mxu0 0
  %4244 = vmatpush1.bf16.msra.mxu0 %v4229
  %4245 = vmatprep.subr.bf16.mxu0 0
  %4246 = vmatpush1.bf16.msra.mxu0 0
  %4247 = vmatprep.subr.bf16.mxu0 0
  %4248 = vmatpush1.bf16.msra.mxu0 0
  %4249 = vmatprep.subr.bf16.mxu0 0
  %4250 = vmatpush1.bf16.msra.mxu0 0
  %4251 = vmatprep.subr.bf16.mxu0 0
  %4252 = vmatpush1.bf16.msra.mxu0 0
  %4253 = vmatprep.subr.bf16.mxu0 0
  %4254 = vmatpush1.bf16.msra.mxu0 0
  %4255 = vmatprep.subr.bf16.mxu0 0
  %4256 = vmatpush1.bf16.msra.mxu0 0
  %4257 = vmatprep.subr.bf16.mxu0 0
  %4258 = vmatpush1.bf16.msra.mxu0 0
  %4259 = vmatprep.subr.bf16.mxu0 0
  %4260 = vmatpush1.bf16.msra.mxu0 0
  %4261 = vmatprep.subr.bf16.mxu0 0
  %4262 = vmatpush1.bf16.msra.mxu0 0
  %4263 = vmatprep.subr.bf16.mxu0 0
  %4264 = vmatpush1.bf16.msra.mxu0 0
  %4265 = vmatprep.subr.bf16.mxu0 0
  %4266 = vmatpush1.bf16.msra.mxu0 0
  %4267 = vmatprep.subr.bf16.mxu0 0
  %4268 = vmatpush1.bf16.msra.mxu0 0
  %4269 = vmatprep.mubr.bf16.mxu0 0
  %4270 = vmatmul.mubr.bf16.gmra.mrb[0].mxu0 %v4235
  %v4271 = vpop.f32.mrb[0].mxu0
  %v4272 = vadd.f32 %v4208, %v4271
  %v4273 = vpop.f32.mrb[0].mxu0
  %v4274 = vpop.f32.mrb[0].mxu0
  %v4275 = vpop.f32.mrb[0].mxu0
  %4276 = vdwg.mxu0
  %vm4277 = vcmask 187392
  %4278 = vst.msk [vmem:[%s11] sm:$0xff] %vm4277, %v4272
  // Predicated region
  $region46: #{attribute_head_forward.1} parent=0 // pred_check
    _
  $region47: #{attribute_head_forward.1} parent=0 // pred_check_branch
    %4280 = sbr.rel (0) target = $region49
  $region48: #{attribute_head_forward.1} parent=0 // pred_region
    _
  $region49: #{attribute_head_forward.1} parent=0 // pred_fallthru
    _
  // Predicated region
  $region50: #{attribute_head_forward.1} parent=0 // pred_check
    _
  $region51: #{attribute_head_forward.1} parent=0 // pred_check_branch
    %4282 = sbr.rel (0) target = $region53
  $region52: #{attribute_head_forward.1} parent=0 // pred_region
    _
  $region53: #{attribute_head_forward.1} parent=0 // pred_fallthru
    _

</llo_original>
